<compile_context>
chip_gen: v6e
topology: v6e:2x2x1
jax: 0.10.0
libtpu: 0.0.40
codegen_flags: <defaults>
</compile_context>

<pallas_src>
import functools
import math

import jax
import jax.numpy as jnp
from jax import lax
from jax.experimental import pallas as pl
from jax.experimental.pallas import tpu as pltpu

LANE = 128


def _round_up(x, m):
    return ((x + m - 1) // m) * m


# ----------------------------------------------------------------------------
# Fused Conv2dBlock kernels: (patches @ W + b) -> InstanceNorm -> act (-> +res)
# ----------------------------------------------------------------------------
def _norm_act(x, norm, act, eps):
    if norm == "inst":
        # Single-pass biased variance (matches nn.InstanceNorm2d defaults).
        mean = jnp.mean(x, axis=0, keepdims=True)
        mean_sq = jnp.mean(x * x, axis=0, keepdims=True)
        var = jnp.maximum(mean_sq - mean * mean, 0.0)
        x = (x - mean) * lax.rsqrt(var + eps)
    elif norm != "none":
        raise NotImplementedError(f"norm={norm}")
    if act == "relu":
        x = jnp.maximum(x, 0.0)
    elif act != "none":
        raise NotImplementedError(f"act={act}")
    return x


def _conv_block_kernel(a_ref, w_ref, b_ref, o_ref, *, norm, act, eps):
    # a_ref: (1, HW, K) bf16 | w_ref: (K, Cp) bf16 | b_ref: (1, Cp) f32
    # o_ref: (1, HW, Cp) f32  (Cp = Cout rounded up to 128 -> lane-dense store)
    acc = jnp.dot(a_ref[0], w_ref[...], preferred_element_type=jnp.float32)
    acc = acc + b_ref[...]
    acc = _norm_act(acc, norm, act, eps)
    o_ref[0] = acc.astype(o_ref.dtype)


def _conv_block_res_kernel(a_ref, w_ref, b_ref, r_ref, o_ref, *, norm, act, eps):
    # Same, with the ResBlock residual fused.  Residual is added AFTER the
    # block's activation, matching `out = model(x); out += residual`.
    acc = jnp.dot(a_ref[0], w_ref[...], preferred_element_type=jnp.float32)
    acc = acc + b_ref[...]
    acc = _norm_act(acc, norm, act, eps)
    acc = acc + r_ref[0].astype(jnp.float32)
    o_ref[0] = acc.astype(o_ref.dtype)


def _fused_conv_call(patches, w_mat, bias, residual, norm, act, eps=1e-5):
    """patches: (N, HW, K) bf16; w_mat: (K, Cp) bf16; bias: (1, Cp) f32;
    residual: None or (N, HW, Cp) f32.  Returns (N, HW, Cp) f32."""
    N, HW, K = patches.shape
    Cp = w_mat.shape[1]

    a_spec = pl.BlockSpec((1, HW, K), lambda n: (n, 0, 0))
    w_spec = pl.BlockSpec((K, Cp), lambda n: (0, 0))       # resident weights
    b_spec = pl.BlockSpec((1, Cp), lambda n: (0, 0))
    o_spec = pl.BlockSpec((1, HW, Cp), lambda n: (n, 0, 0))

    if residual is None:
        kern = functools.partial(_conv_block_kernel, norm=norm, act=act, eps=eps)
        in_specs = [a_spec, w_spec, b_spec]
        args = (patches, w_mat, bias)
    else:
        kern = functools.partial(_conv_block_res_kernel, norm=norm, act=act, eps=eps)
        in_specs = [a_spec, w_spec, b_spec, o_spec]
        args = (patches, w_mat, bias, residual)

    return pl.pallas_call(
        kern,
        out_shape=jax.ShapeDtypeStruct((N, HW, Cp), jnp.float32),
        grid=(N,),
        in_specs=in_specs,
        out_specs=o_spec,
        compiler_params=pltpu.CompilerParams(dimension_semantics=("parallel",)),
    )(*args)


# ----------------------------------------------------------------------------
# JAX-side glue: padding + im2col + weight packing
# ----------------------------------------------------------------------------
def _extract_patches(x_pad, kh, kw, stride, oh, ow):
    """im2col: (N, Hp, Wp, C) -> (N, OH*OW, KH*KW*C), feature order (kh, kw, c)."""
    slices = []
    for i in range(kh):
        for j in range(kw):
            slices.append(
                x_pad[:, i:i + stride * oh:stride, j:j + stride * ow:stride, :])
    patches = jnp.stack(slices, axis=3)  # (N, OH, OW, KH*KW, C)
    n, c = patches.shape[0], patches.shape[-1]
    return patches.reshape(n, oh * ow, kh * kw * c)


def conv2d_block(x, w, b, *, stride, padding, pad_type, norm, act, residual=None):
    """Fused Conv2dBlock on NHWC input.

    x: (N, H, W, C_store) where the true input channels live in x[..., :cin]
       (C_store may be the lane-padded 128 from a previous block).
    w: PyTorch layout (Cout, Cin, KH, KW); b: (Cout,).
    Returns (N, OH, OW, Cp) f32 with Cp = round_up(Cout, 128); channels beyond
    Cout are exactly zero.
    """
    cout, cin, KH, KW = w.shape
    x = x[..., :cin]  # drop lane padding; fuses with the im2col slices below
    if padding > 0:
        mode = "reflect" if pad_type == "reflect" else "constant"
        x = jnp.pad(x, ((0, 0), (padding, padding), (padding, padding), (0, 0)),
                    mode=mode)
    N, Hp, Wp, _ = x.shape
    OH = (Hp - KH) // stride + 1
    OW = (Wp - KW) // stride + 1

    patches = _extract_patches(x, KH, KW, stride, OH, OW).astype(jnp.bfloat16)

    Cp = _round_up(cout, LANE)
    # (Cout, Cin, KH, KW) -> (KH*KW*Cin, Cout), matching the patch feature order,
    # zero-padded to 128 output lanes (extra MXU columns are free).
    w_mat = jnp.transpose(w, (2, 3, 1, 0)).reshape(KH * KW * cin, cout)
    w_mat = jnp.pad(w_mat, ((0, 0), (0, Cp - cout))).astype(jnp.bfloat16)
    bias = jnp.pad(b, (0, Cp - cout)).reshape(1, Cp).astype(jnp.float32)

    res2 = None if residual is None else residual.reshape(N, OH * OW, Cp)
    y = _fused_conv_call(patches, w_mat, bias, res2, norm, act)
    return y.reshape(N, OH, OW, Cp)


# ----------------------------------------------------------------------------
# ContentEncoder: parameter init + forward
# ----------------------------------------------------------------------------
def _conv_params(key, cin, cout, k):
    k1, k2 = jax.random.split(key)
    bound = 1.0 / math.sqrt(cin * k * k)
    w = jax.random.uniform(k1, (cout, cin, k, k), jnp.float32, -bound, bound)
    b = jax.random.uniform(k2, (cout,), jnp.float32, -bound, bound)
    return w, b


def init_content_encoder(key, n_downsample, n_res, input_dim, dim):
    params = []
    key, sub = jax.random.split(key)
    params.append(_conv_params(sub, input_dim, dim, 7))      # stem 7x7 s1 p3
    d = dim
    for _ in range(n_downsample):
        key, sub = jax.random.split(key)
        params.append(_conv_params(sub, d, 2 * d, 4))        # downsample 4x4 s2 p1
        d *= 2
    for _ in range(n_res):
        key, s1 = jax.random.split(key)
        key, s2 = jax.random.split(key)
        params.append(_conv_params(s1, d, d, 3))             # resblock conv1
        params.append(_conv_params(s2, d, d, 3))             # resblock conv2
    return params, d  # d == output_dim


def content_encoder_forward(x_nchw, params, *, n_downsample, n_res,
                            norm="inst", activ="relu", pad_type="zero"):
    # NCHW (PyTorch) -> NHWC for the kernels.
    x = jnp.transpose(x_nchw, (0, 2, 3, 1)).astype(jnp.float32)
    idx = 0

    # Per the PyTorch spec, the stem and downsample Conv2dBlocks always use
    # reflect padding; only the ResBlocks honour the caller's pad_type.
    w, b = params[idx]; idx += 1
    x = conv2d_block(x, w, b, stride=1, padding=3, pad_type="reflect",
                     norm=norm, act=activ)
    c = w.shape[0]

    for _ in range(n_downsample):
        w, b = params[idx]; idx += 1
        x = conv2d_block(x, w, b, stride=2, padding=1, pad_type="reflect",
                         norm=norm, act=activ)
        c = w.shape[0]

    for _ in range(n_res):
        w1, b1 = params[idx]; idx += 1
        w2, b2 = params[idx]; idx += 1
        residual = x  # already channel-padded (N, H, W, 128)
        h = conv2d_block(x, w1, b1, stride=1, padding=1, pad_type=pad_type,
                         norm=norm, act=activ)
        x = conv2d_block(h, w2, b2, stride=1, padding=1, pad_type=pad_type,
                         norm=norm, act="none", residual=residual)
        c = w2.shape[0]

    # Slice off the lane padding exactly once, then back to NCHW.
    x = x[..., :c]
    return jnp.transpose(x, (0, 3, 1, 2))


# ----------------------------------------------------------------------------
if __name__ == "__main__":
    n_downsample, n_res = 2, 2
    input_dim, dim = 3, 16
    norm, activ = "inst", "relu"

    key = jax.random.PRNGKey(0)
    kx, kp = jax.random.split(key)
    x = jax.random.normal(kx, (2, input_dim, 16, 16), jnp.float32)  # NCHW

    params, output_dim = init_content_encoder(kp, n_downsample, n_res,
                                              input_dim, dim)

    fwd = jax.jit(functools.partial(content_encoder_forward,
                                    n_downsample=n_downsample, n_res=n_res,
                                    norm=norm, activ=activ, pad_type="zero"))
    out = jax.block_until_ready(fwd(x, params))

    expected = (2, output_dim, 16 // (2 ** n_downsample), 16 // (2 ** n_downsample))
    assert out.shape == expected, (out.shape, expected)
    assert jnp.all(jnp.isfinite(out))
    print("KERNEL_OK")
</pallas_src>

<mosaic_0001>
module attributes {stable_mosaic.version = 11 : i64} {
  func.func @_conv_block_kernel(%arg0: i32, %arg1: memref<1x256x147xbf16, #tpu.memory_space<vmem>>, %arg2: memref<147x128xbf16, #tpu.memory_space<vmem>>, %arg3: memref<1x128xf32, #tpu.memory_space<vmem>>, %arg4: memref<1x256x128xf32, #tpu.memory_space<vmem>>) attributes {dimension_semantics = [#tpu.dimension_semantics<parallel>], iteration_bounds = array<i64: 2>, scalar_prefetch = 0 : i64, scratch_operands = 0 : i64, tpu.core_type = #tpu.core_type<tc>, window_params = [{transform_indices = @transform_0, window_bounds = array<i64: 1, 256, 147>}, {pipeline_mode = #tpu.pipeline_mode<synchronous>, transform_indices = @transform_1, window_bounds = array<i64: 147, 128>}, {pipeline_mode = #tpu.pipeline_mode<synchronous>, transform_indices = @transform_2, window_bounds = array<i64: 1, 128>}, {transform_indices = @transform_3, window_bounds = array<i64: 1, 256, 128>}]} {
    %c0 = arith.constant 0 : index
    %c0_0 = arith.constant 0 : index
    %c0_1 = arith.constant 0 : index
    %0 = vector.load %arg1[%c0, %c0_0, %c0_1] : memref<1x256x147xbf16, #tpu.memory_space<vmem>>, vector<1x256x147xbf16>
    %1 = vector.shape_cast %0 : vector<1x256x147xbf16> to vector<256x147xbf16>
    %c0_2 = arith.constant 0 : index
    %c0_3 = arith.constant 0 : index
    %2 = vector.load %arg2[%c0_2, %c0_3] : memref<147x128xbf16, #tpu.memory_space<vmem>>, vector<147x128xbf16>
    %cst = arith.constant dense<0.000000e+00> : vector<256x128xf32>
    %3 = tpu.matmul %1, %2, %cst {dimension_numbers = #tpu.dot_dimension_numbers<[1], [0], [0], [1], [0, 0, 1, 1], [], []>} : vector<256x147xbf16>, vector<147x128xbf16>, vector<256x128xf32> -> vector<256x128xf32>
    %c0_4 = arith.constant 0 : index
    %c0_5 = arith.constant 0 : index
    %4 = vector.load %arg3[%c0_4, %c0_5] : memref<1x128xf32, #tpu.memory_space<vmem>>, vector<1x128xf32>
    %5 = vector.broadcast %4 : vector<1x128xf32> to vector<256x128xf32>
    %6 = arith.addf %3, %5 : vector<256x128xf32>
    %cst_6 = arith.constant dense<0.000000e+00> : vector<128xf32>
    %7 = vector.multi_reduction <add>, %6, %cst_6 [0] : vector<256x128xf32> to vector<128xf32>
    %8 = vector.shape_cast %7 : vector<128xf32> to vector<1x128xf32>
    %cst_7 = arith.constant 2.560000e+02 : f32
    %9 = vector.broadcast %cst_7 : f32 to vector<1x128xf32>
    %10 = arith.divf %8, %9 : vector<1x128xf32>
    %11 = arith.mulf %6, %6 : vector<256x128xf32>
    %cst_8 = arith.constant dense<0.000000e+00> : vector<128xf32>
    %12 = vector.multi_reduction <add>, %11, %cst_8 [0] : vector<256x128xf32> to vector<128xf32>
    %13 = vector.shape_cast %12 : vector<128xf32> to vector<1x128xf32>
    %cst_9 = arith.constant 2.560000e+02 : f32
    %14 = vector.broadcast %cst_9 : f32 to vector<1x128xf32>
    %15 = arith.divf %13, %14 : vector<1x128xf32>
    %16 = arith.mulf %10, %10 : vector<1x128xf32>
    %17 = arith.subf %15, %16 : vector<1x128xf32>
    %cst_10 = arith.constant 0.000000e+00 : f32
    %18 = vector.broadcast %cst_10 : f32 to vector<1x128xf32>
    %19 = arith.maximumf %17, %18 : vector<1x128xf32>
    %20 = vector.broadcast %10 : vector<1x128xf32> to vector<256x128xf32>
    %21 = arith.subf %6, %20 : vector<256x128xf32>
    %cst_11 = arith.constant 9.99999974E-6 : f32
    %22 = vector.broadcast %cst_11 : f32 to vector<1x128xf32>
    %23 = arith.addf %19, %22 : vector<1x128xf32>
    %24 = math.rsqrt %23 : vector<1x128xf32>
    %25 = vector.broadcast %24 : vector<1x128xf32> to vector<256x128xf32>
    %26 = arith.mulf %21, %25 : vector<256x128xf32>
    %cst_12 = arith.constant 0.000000e+00 : f32
    %27 = vector.broadcast %cst_12 : f32 to vector<256x128xf32>
    %28 = arith.maximumf %26, %27 : vector<256x128xf32>
    %c0_13 = arith.constant 0 : index
    %c0_14 = arith.constant 0 : index
    %c0_15 = arith.constant 0 : index
    %29 = vector.load %arg4[%c0_13, %c0_14, %c0_15] : memref<1x256x128xf32, #tpu.memory_space<vmem>>, vector<1x256x128xf32>
    %30 = vector.shape_cast %29 : vector<1x256x128xf32> to vector<256x128xf32>
    %31 = vector.shape_cast %28 : vector<256x128xf32> to vector<1x256x128xf32>
    tpu.vector_store %arg4[%c0_13, %c0_14, %c0_15], %31 {strides = array<i32>} : memref<1x256x128xf32, #tpu.memory_space<vmem>>, vector<1x256x128xf32>,
    return
  }
  func.func @transform_0(%arg0: i32) -> (i32, i32, i32) {
    %c0_i32 = arith.constant 0 : i32
    %c0_i32_0 = arith.constant 0 : i32
    %c0_i32_1 = arith.constant 0 : i32
    return %arg0, %c0_i32, %c0_i32_0 : i32, i32, i32
  }
  func.func @transform_1(%arg0: i32) -> (i32, i32) {
    %c0_i32 = arith.constant 0 : i32
    %c0_i32_0 = arith.constant 0 : i32
    %c0_i32_1 = arith.constant 0 : i32
    return %c0_i32, %c0_i32_0 : i32, i32
  }
  func.func @transform_2(%arg0: i32) -> (i32, i32) {
    %c0_i32 = arith.constant 0 : i32
    %c0_i32_0 = arith.constant 0 : i32
    %c0_i32_1 = arith.constant 0 : i32
    return %c0_i32, %c0_i32_0 : i32, i32
  }
  func.func @transform_3(%arg0: i32) -> (i32, i32, i32) {
    %c0_i32 = arith.constant 0 : i32
    %c0_i32_0 = arith.constant 0 : i32
    %c0_i32_1 = arith.constant 0 : i32
    return %arg0, %c0_i32, %c0_i32_0 : i32, i32, i32
  }
}

module attributes {stable_mosaic.version = 11 : i64} {
  func.func @_conv_block_kernel(%arg0: i32, %arg1: memref<1x64x256xbf16, #tpu.memory_space<vmem>>, %arg2: memref<256x128xbf16, #tpu.memory_space<vmem>>, %arg3: memref<1x128xf32, #tpu.memory_space<vmem>>, %arg4: memref<1x64x128xf32, #tpu.memory_space<vmem>>) attributes {dimension_semantics = [#tpu.dimension_semantics<parallel>], iteration_bounds = array<i64: 2>, scalar_prefetch = 0 : i64, scratch_operands = 0 : i64, tpu.core_type = #tpu.core_type<tc>, window_params = [{transform_indices = @transform_0, window_bounds = array<i64: 1, 64, 256>}, {pipeline_mode = #tpu.pipeline_mode<synchronous>, transform_indices = @transform_1, window_bounds = array<i64: 256, 128>}, {pipeline_mode = #tpu.pipeline_mode<synchronous>, transform_indices = @transform_2, window_bounds = array<i64: 1, 128>}, {transform_indices = @transform_3, window_bounds = array<i64: 1, 64, 128>}]} {
    %c0 = arith.constant 0 : index
    %c0_0 = arith.constant 0 : index
    %c0_1 = arith.constant 0 : index
    %0 = vector.load %arg1[%c0, %c0_0, %c0_1] : memref<1x64x256xbf16, #tpu.memory_space<vmem>>, vector<1x64x256xbf16>
    %1 = vector.shape_cast %0 : vector<1x64x256xbf16> to vector<64x256xbf16>
    %c0_2 = arith.constant 0 : index
    %c0_3 = arith.constant 0 : index
    %2 = vector.load %arg2[%c0_2, %c0_3] : memref<256x128xbf16, #tpu.memory_space<vmem>>, vector<256x128xbf16>
    %cst = arith.constant dense<0.000000e+00> : vector<64x128xf32>
    %3 = tpu.matmul %1, %2, %cst {dimension_numbers = #tpu.dot_dimension_numbers<[1], [0], [0], [1], [0, 0, 1, 1], [], []>} : vector<64x256xbf16>, vector<256x128xbf16>, vector<64x128xf32> -> vector<64x128xf32>
    %c0_4 = arith.constant 0 : index
    %c0_5 = arith.constant 0 : index
    %4 = vector.load %arg3[%c0_4, %c0_5] : memref<1x128xf32, #tpu.memory_space<vmem>>, vector<1x128xf32>
    %5 = vector.broadcast %4 : vector<1x128xf32> to vector<64x128xf32>
    %6 = arith.addf %3, %5 : vector<64x128xf32>
    %cst_6 = arith.constant dense<0.000000e+00> : vector<128xf32>
    %7 = vector.multi_reduction <add>, %6, %cst_6 [0] : vector<64x128xf32> to vector<128xf32>
    %8 = vector.shape_cast %7 : vector<128xf32> to vector<1x128xf32>
    %cst_7 = arith.constant 6.400000e+01 : f32
    %9 = vector.broadcast %cst_7 : f32 to vector<1x128xf32>
    %10 = arith.divf %8, %9 : vector<1x128xf32>
    %11 = arith.mulf %6, %6 : vector<64x128xf32>
    %cst_8 = arith.constant dense<0.000000e+00> : vector<128xf32>
    %12 = vector.multi_reduction <add>, %11, %cst_8 [0] : vector<64x128xf32> to vector<128xf32>
    %13 = vector.shape_cast %12 : vector<128xf32> to vector<1x128xf32>
    %cst_9 = arith.constant 6.400000e+01 : f32
    %14 = vector.broadcast %cst_9 : f32 to vector<1x128xf32>
    %15 = arith.divf %13, %14 : vector<1x128xf32>
    %16 = arith.mulf %10, %10 : vector<1x128xf32>
    %17 = arith.subf %15, %16 : vector<1x128xf32>
    %cst_10 = arith.constant 0.000000e+00 : f32
    %18 = vector.broadcast %cst_10 : f32 to vector<1x128xf32>
    %19 = arith.maximumf %17, %18 : vector<1x128xf32>
    %20 = vector.broadcast %10 : vector<1x128xf32> to vector<64x128xf32>
    %21 = arith.subf %6, %20 : vector<64x128xf32>
    %cst_11 = arith.constant 9.99999974E-6 : f32
    %22 = vector.broadcast %cst_11 : f32 to vector<1x128xf32>
    %23 = arith.addf %19, %22 : vector<1x128xf32>
    %24 = math.rsqrt %23 : vector<1x128xf32>
    %25 = vector.broadcast %24 : vector<1x128xf32> to vector<64x128xf32>
    %26 = arith.mulf %21, %25 : vector<64x128xf32>
    %cst_12 = arith.constant 0.000000e+00 : f32
    %27 = vector.broadcast %cst_12 : f32 to vector<64x128xf32>
    %28 = arith.maximumf %26, %27 : vector<64x128xf32>
    %c0_13 = arith.constant 0 : index
    %c0_14 = arith.constant 0 : index
    %c0_15 = arith.constant 0 : index
    %29 = vector.load %arg4[%c0_13, %c0_14, %c0_15] : memref<1x64x128xf32, #tpu.memory_space<vmem>>, vector<1x64x128xf32>
    %30 = vector.shape_cast %29 : vector<1x64x128xf32> to vector<64x128xf32>
    %31 = vector.shape_cast %28 : vector<64x128xf32> to vector<1x64x128xf32>
    tpu.vector_store %arg4[%c0_13, %c0_14, %c0_15], %31 {strides = array<i32>} : memref<1x64x128xf32, #tpu.memory_space<vmem>>, vector<1x64x128xf32>,
    return
  }
  func.func @transform_0(%arg0: i32) -> (i32, i32, i32) {
    %c0_i32 = arith.constant 0 : i32
    %c0_i32_0 = arith.constant 0 : i32
    %c0_i32_1 = arith.constant 0 : i32
    return %arg0, %c0_i32, %c0_i32_0 : i32, i32, i32
  }
  func.func @transform_1(%arg0: i32) -> (i32, i32) {
    %c0_i32 = arith.constant 0 : i32
    %c0_i32_0 = arith.constant 0 : i32
    %c0_i32_1 = arith.constant 0 : i32
    return %c0_i32, %c0_i32_0 : i32, i32
  }
  func.func @transform_2(%arg0: i32) -> (i32, i32) {
    %c0_i32 = arith.constant 0 : i32
    %c0_i32_0 = arith.constant 0 : i32
    %c0_i32_1 = arith.constant 0 : i32
    return %c0_i32, %c0_i32_0 : i32, i32
  }
  func.func @transform_3(%arg0: i32) -> (i32, i32, i32) {
    %c0_i32 = arith.constant 0 : i32
    %c0_i32_0 = arith.constant 0 : i32
    %c0_i32_1 = arith.constant 0 : i32
    return %arg0, %c0_i32, %c0_i32_0 : i32, i32, i32
  }
}

module attributes {stable_mosaic.version = 11 : i64} {
  func.func @_conv_block_kernel(%arg0: i32, %arg1: memref<1x16x512xbf16, #tpu.memory_space<vmem>>, %arg2: memref<512x128xbf16, #tpu.memory_space<vmem>>, %arg3: memref<1x128xf32, #tpu.memory_space<vmem>>, %arg4: memref<1x16x128xf32, #tpu.memory_space<vmem>>) attributes {dimension_semantics = [#tpu.dimension_semantics<parallel>], iteration_bounds = array<i64: 2>, scalar_prefetch = 0 : i64, scratch_operands = 0 : i64, tpu.core_type = #tpu.core_type<tc>, window_params = [{transform_indices = @transform_0, window_bounds = array<i64: 1, 16, 512>}, {pipeline_mode = #tpu.pipeline_mode<synchronous>, transform_indices = @transform_1, window_bounds = array<i64: 512, 128>}, {pipeline_mode = #tpu.pipeline_mode<synchronous>, transform_indices = @transform_2, window_bounds = array<i64: 1, 128>}, {transform_indices = @transform_3, window_bounds = array<i64: 1, 16, 128>}]} {
    %c0 = arith.constant 0 : index
    %c0_0 = arith.constant 0 : index
    %c0_1 = arith.constant 0 : index
    %0 = vector.load %arg1[%c0, %c0_0, %c0_1] : memref<1x16x512xbf16, #tpu.memory_space<vmem>>, vector<1x16x512xbf16>
    %1 = vector.shape_cast %0 : vector<1x16x512xbf16> to vector<16x512xbf16>
    %c0_2 = arith.constant 0 : index
    %c0_3 = arith.constant 0 : index
    %2 = vector.load %arg2[%c0_2, %c0_3] : memref<512x128xbf16, #tpu.memory_space<vmem>>, vector<512x128xbf16>
    %cst = arith.constant dense<0.000000e+00> : vector<16x128xf32>
    %3 = tpu.matmul %1, %2, %cst {dimension_numbers = #tpu.dot_dimension_numbers<[1], [0], [0], [1], [0, 0, 1, 1], [], []>} : vector<16x512xbf16>, vector<512x128xbf16>, vector<16x128xf32> -> vector<16x128xf32>
    %c0_4 = arith.constant 0 : index
    %c0_5 = arith.constant 0 : index
    %4 = vector.load %arg3[%c0_4, %c0_5] : memref<1x128xf32, #tpu.memory_space<vmem>>, vector<1x128xf32>
    %5 = vector.broadcast %4 : vector<1x128xf32> to vector<16x128xf32>
    %6 = arith.addf %3, %5 : vector<16x128xf32>
    %cst_6 = arith.constant dense<0.000000e+00> : vector<128xf32>
    %7 = vector.multi_reduction <add>, %6, %cst_6 [0] : vector<16x128xf32> to vector<128xf32>
    %8 = vector.shape_cast %7 : vector<128xf32> to vector<1x128xf32>
    %cst_7 = arith.constant 1.600000e+01 : f32
    %9 = vector.broadcast %cst_7 : f32 to vector<1x128xf32>
    %10 = arith.divf %8, %9 : vector<1x128xf32>
    %11 = arith.mulf %6, %6 : vector<16x128xf32>
    %cst_8 = arith.constant dense<0.000000e+00> : vector<128xf32>
    %12 = vector.multi_reduction <add>, %11, %cst_8 [0] : vector<16x128xf32> to vector<128xf32>
    %13 = vector.shape_cast %12 : vector<128xf32> to vector<1x128xf32>
    %cst_9 = arith.constant 1.600000e+01 : f32
    %14 = vector.broadcast %cst_9 : f32 to vector<1x128xf32>
    %15 = arith.divf %13, %14 : vector<1x128xf32>
    %16 = arith.mulf %10, %10 : vector<1x128xf32>
    %17 = arith.subf %15, %16 : vector<1x128xf32>
    %cst_10 = arith.constant 0.000000e+00 : f32
    %18 = vector.broadcast %cst_10 : f32 to vector<1x128xf32>
    %19 = arith.maximumf %17, %18 : vector<1x128xf32>
    %20 = vector.broadcast %10 : vector<1x128xf32> to vector<16x128xf32>
    %21 = arith.subf %6, %20 : vector<16x128xf32>
    %cst_11 = arith.constant 9.99999974E-6 : f32
    %22 = vector.broadcast %cst_11 : f32 to vector<1x128xf32>
    %23 = arith.addf %19, %22 : vector<1x128xf32>
    %24 = math.rsqrt %23 : vector<1x128xf32>
    %25 = vector.broadcast %24 : vector<1x128xf32> to vector<16x128xf32>
    %26 = arith.mulf %21, %25 : vector<16x128xf32>
    %cst_12 = arith.constant 0.000000e+00 : f32
    %27 = vector.broadcast %cst_12 : f32 to vector<16x128xf32>
    %28 = arith.maximumf %26, %27 : vector<16x128xf32>
    %c0_13 = arith.constant 0 : index
    %c0_14 = arith.constant 0 : index
    %c0_15 = arith.constant 0 : index
    %29 = vector.load %arg4[%c0_13, %c0_14, %c0_15] : memref<1x16x128xf32, #tpu.memory_space<vmem>>, vector<1x16x128xf32>
    %30 = vector.shape_cast %29 : vector<1x16x128xf32> to vector<16x128xf32>
    %31 = vector.shape_cast %28 : vector<16x128xf32> to vector<1x16x128xf32>
    tpu.vector_store %arg4[%c0_13, %c0_14, %c0_15], %31 {strides = array<i32>} : memref<1x16x128xf32, #tpu.memory_space<vmem>>, vector<1x16x128xf32>,
    return
  }
  func.func @transform_0(%arg0: i32) -> (i32, i32, i32) {
    %c0_i32 = arith.constant 0 : i32
    %c0_i32_0 = arith.constant 0 : i32
    %c0_i32_1 = arith.constant 0 : i32
    return %arg0, %c0_i32, %c0_i32_0 : i32, i32, i32
  }
  func.func @transform_1(%arg0: i32) -> (i32, i32) {
    %c0_i32 = arith.constant 0 : i32
    %c0_i32_0 = arith.constant 0 : i32
    %c0_i32_1 = arith.constant 0 : i32
    return %c0_i32, %c0_i32_0 : i32, i32
  }
  func.func @transform_2(%arg0: i32) -> (i32, i32) {
    %c0_i32 = arith.constant 0 : i32
    %c0_i32_0 = arith.constant 0 : i32
    %c0_i32_1 = arith.constant 0 : i32
    return %c0_i32, %c0_i32_0 : i32, i32
  }
  func.func @transform_3(%arg0: i32) -> (i32, i32, i32) {
    %c0_i32 = arith.constant 0 : i32
    %c0_i32_0 = arith.constant 0 : i32
    %c0_i32_1 = arith.constant 0 : i32
    return %arg0, %c0_i32, %c0_i32_0 : i32, i32, i32
  }
}

module attributes {stable_mosaic.version = 11 : i64} {
  func.func @_conv_block_kernel(%arg0: i32, %arg1: memref<1x16x576xbf16, #tpu.memory_space<vmem>>, %arg2: memref<576x128xbf16, #tpu.memory_space<vmem>>, %arg3: memref<1x128xf32, #tpu.memory_space<vmem>>, %arg4: memref<1x16x128xf32, #tpu.memory_space<vmem>>) attributes {dimension_semantics = [#tpu.dimension_semantics<parallel>], iteration_bounds = array<i64: 2>, scalar_prefetch = 0 : i64, scratch_operands = 0 : i64, tpu.core_type = #tpu.core_type<tc>, window_params = [{transform_indices = @transform_0, window_bounds = array<i64: 1, 16, 576>}, {pipeline_mode = #tpu.pipeline_mode<synchronous>, transform_indices = @transform_1, window_bounds = array<i64: 576, 128>}, {pipeline_mode = #tpu.pipeline_mode<synchronous>, transform_indices = @transform_2, window_bounds = array<i64: 1, 128>}, {transform_indices = @transform_3, window_bounds = array<i64: 1, 16, 128>}]} {
    %c0 = arith.constant 0 : index
    %c0_0 = arith.constant 0 : index
    %c0_1 = arith.constant 0 : index
    %0 = vector.load %arg1[%c0, %c0_0, %c0_1] : memref<1x16x576xbf16, #tpu.memory_space<vmem>>, vector<1x16x576xbf16>
    %1 = vector.shape_cast %0 : vector<1x16x576xbf16> to vector<16x576xbf16>
    %c0_2 = arith.constant 0 : index
    %c0_3 = arith.constant 0 : index
    %2 = vector.load %arg2[%c0_2, %c0_3] : memref<576x128xbf16, #tpu.memory_space<vmem>>, vector<576x128xbf16>
    %cst = arith.constant dense<0.000000e+00> : vector<16x128xf32>
    %3 = tpu.matmul %1, %2, %cst {dimension_numbers = #tpu.dot_dimension_numbers<[1], [0], [0], [1], [0, 0, 1, 1], [], []>} : vector<16x576xbf16>, vector<576x128xbf16>, vector<16x128xf32> -> vector<16x128xf32>
    %c0_4 = arith.constant 0 : index
    %c0_5 = arith.constant 0 : index
    %4 = vector.load %arg3[%c0_4, %c0_5] : memref<1x128xf32, #tpu.memory_space<vmem>>, vector<1x128xf32>
    %5 = vector.broadcast %4 : vector<1x128xf32> to vector<16x128xf32>
    %6 = arith.addf %3, %5 : vector<16x128xf32>
    %cst_6 = arith.constant dense<0.000000e+00> : vector<128xf32>
    %7 = vector.multi_reduction <add>, %6, %cst_6 [0] : vector<16x128xf32> to vector<128xf32>
    %8 = vector.shape_cast %7 : vector<128xf32> to vector<1x128xf32>
    %cst_7 = arith.constant 1.600000e+01 : f32
    %9 = vector.broadcast %cst_7 : f32 to vector<1x128xf32>
    %10 = arith.divf %8, %9 : vector<1x128xf32>
    %11 = arith.mulf %6, %6 : vector<16x128xf32>
    %cst_8 = arith.constant dense<0.000000e+00> : vector<128xf32>
    %12 = vector.multi_reduction <add>, %11, %cst_8 [0] : vector<16x128xf32> to vector<128xf32>
    %13 = vector.shape_cast %12 : vector<128xf32> to vector<1x128xf32>
    %cst_9 = arith.constant 1.600000e+01 : f32
    %14 = vector.broadcast %cst_9 : f32 to vector<1x128xf32>
    %15 = arith.divf %13, %14 : vector<1x128xf32>
    %16 = arith.mulf %10, %10 : vector<1x128xf32>
    %17 = arith.subf %15, %16 : vector<1x128xf32>
    %cst_10 = arith.constant 0.000000e+00 : f32
    %18 = vector.broadcast %cst_10 : f32 to vector<1x128xf32>
    %19 = arith.maximumf %17, %18 : vector<1x128xf32>
    %20 = vector.broadcast %10 : vector<1x128xf32> to vector<16x128xf32>
    %21 = arith.subf %6, %20 : vector<16x128xf32>
    %cst_11 = arith.constant 9.99999974E-6 : f32
    %22 = vector.broadcast %cst_11 : f32 to vector<1x128xf32>
    %23 = arith.addf %19, %22 : vector<1x128xf32>
    %24 = math.rsqrt %23 : vector<1x128xf32>
    %25 = vector.broadcast %24 : vector<1x128xf32> to vector<16x128xf32>
    %26 = arith.mulf %21, %25 : vector<16x128xf32>
    %cst_12 = arith.constant 0.000000e+00 : f32
    %27 = vector.broadcast %cst_12 : f32 to vector<16x128xf32>
    %28 = arith.maximumf %26, %27 : vector<16x128xf32>
    %c0_13 = arith.constant 0 : index
    %c0_14 = arith.constant 0 : index
    %c0_15 = arith.constant 0 : index
    %29 = vector.load %arg4[%c0_13, %c0_14, %c0_15] : memref<1x16x128xf32, #tpu.memory_space<vmem>>, vector<1x16x128xf32>
    %30 = vector.shape_cast %29 : vector<1x16x128xf32> to vector<16x128xf32>
    %31 = vector.shape_cast %28 : vector<16x128xf32> to vector<1x16x128xf32>
    tpu.vector_store %arg4[%c0_13, %c0_14, %c0_15], %31 {strides = array<i32>} : memref<1x16x128xf32, #tpu.memory_space<vmem>>, vector<1x16x128xf32>,
    return
  }
  func.func @transform_0(%arg0: i32) -> (i32, i32, i32) {
    %c0_i32 = arith.constant 0 : i32
    %c0_i32_0 = arith.constant 0 : i32
    %c0_i32_1 = arith.constant 0 : i32
    return %arg0, %c0_i32, %c0_i32_0 : i32, i32, i32
  }
  func.func @transform_1(%arg0: i32) -> (i32, i32) {
    %c0_i32 = arith.constant 0 : i32
    %c0_i32_0 = arith.constant 0 : i32
    %c0_i32_1 = arith.constant 0 : i32
    return %c0_i32, %c0_i32_0 : i32, i32
  }
  func.func @transform_2(%arg0: i32) -> (i32, i32) {
    %c0_i32 = arith.constant 0 : i32
    %c0_i32_0 = arith.constant 0 : i32
    %c0_i32_1 = arith.constant 0 : i32
    return %c0_i32, %c0_i32_0 : i32, i32
  }
  func.func @transform_3(%arg0: i32) -> (i32, i32, i32) {
    %c0_i32 = arith.constant 0 : i32
    %c0_i32_0 = arith.constant 0 : i32
    %c0_i32_1 = arith.constant 0 : i32
    return %arg0, %c0_i32, %c0_i32_0 : i32, i32, i32
  }
}

module attributes {stable_mosaic.version = 11 : i64} {
  func.func @_conv_block_res_kernel(%arg0: i32, %arg1: memref<1x16x576xbf16, #tpu.memory_space<vmem>>, %arg2: memref<576x128xbf16, #tpu.memory_space<vmem>>, %arg3: memref<1x128xf32, #tpu.memory_space<vmem>>, %arg4: memref<1x16x128xf32, #tpu.memory_space<vmem>>, %arg5: memref<1x16x128xf32, #tpu.memory_space<vmem>>) attributes {dimension_semantics = [#tpu.dimension_semantics<parallel>], iteration_bounds = array<i64: 2>, scalar_prefetch = 0 : i64, scratch_operands = 0 : i64, tpu.core_type = #tpu.core_type<tc>, window_params = [{transform_indices = @transform_0, window_bounds = array<i64: 1, 16, 576>}, {pipeline_mode = #tpu.pipeline_mode<synchronous>, transform_indices = @transform_1, window_bounds = array<i64: 576, 128>}, {pipeline_mode = #tpu.pipeline_mode<synchronous>, transform_indices = @transform_2, window_bounds = array<i64: 1, 128>}, {transform_indices = @transform_3, window_bounds = array<i64: 1, 16, 128>}, {transform_indices = @transform_4, window_bounds = array<i64: 1, 16, 128>}]} {
    %c0 = arith.constant 0 : index
    %c0_0 = arith.constant 0 : index
    %c0_1 = arith.constant 0 : index
    %0 = vector.load %arg1[%c0, %c0_0, %c0_1] : memref<1x16x576xbf16, #tpu.memory_space<vmem>>, vector<1x16x576xbf16>
    %1 = vector.shape_cast %0 : vector<1x16x576xbf16> to vector<16x576xbf16>
    %c0_2 = arith.constant 0 : index
    %c0_3 = arith.constant 0 : index
    %2 = vector.load %arg2[%c0_2, %c0_3] : memref<576x128xbf16, #tpu.memory_space<vmem>>, vector<576x128xbf16>
    %cst = arith.constant dense<0.000000e+00> : vector<16x128xf32>
    %3 = tpu.matmul %1, %2, %cst {dimension_numbers = #tpu.dot_dimension_numbers<[1], [0], [0], [1], [0, 0, 1, 1], [], []>} : vector<16x576xbf16>, vector<576x128xbf16>, vector<16x128xf32> -> vector<16x128xf32>
    %c0_4 = arith.constant 0 : index
    %c0_5 = arith.constant 0 : index
    %4 = vector.load %arg3[%c0_4, %c0_5] : memref<1x128xf32, #tpu.memory_space<vmem>>, vector<1x128xf32>
    %5 = vector.broadcast %4 : vector<1x128xf32> to vector<16x128xf32>
    %6 = arith.addf %3, %5 : vector<16x128xf32>
    %cst_6 = arith.constant dense<0.000000e+00> : vector<128xf32>
    %7 = vector.multi_reduction <add>, %6, %cst_6 [0] : vector<16x128xf32> to vector<128xf32>
    %8 = vector.shape_cast %7 : vector<128xf32> to vector<1x128xf32>
    %cst_7 = arith.constant 1.600000e+01 : f32
    %9 = vector.broadcast %cst_7 : f32 to vector<1x128xf32>
    %10 = arith.divf %8, %9 : vector<1x128xf32>
    %11 = arith.mulf %6, %6 : vector<16x128xf32>
    %cst_8 = arith.constant dense<0.000000e+00> : vector<128xf32>
    %12 = vector.multi_reduction <add>, %11, %cst_8 [0] : vector<16x128xf32> to vector<128xf32>
    %13 = vector.shape_cast %12 : vector<128xf32> to vector<1x128xf32>
    %cst_9 = arith.constant 1.600000e+01 : f32
    %14 = vector.broadcast %cst_9 : f32 to vector<1x128xf32>
    %15 = arith.divf %13, %14 : vector<1x128xf32>
    %16 = arith.mulf %10, %10 : vector<1x128xf32>
    %17 = arith.subf %15, %16 : vector<1x128xf32>
    %cst_10 = arith.constant 0.000000e+00 : f32
    %18 = vector.broadcast %cst_10 : f32 to vector<1x128xf32>
    %19 = arith.maximumf %17, %18 : vector<1x128xf32>
    %20 = vector.broadcast %10 : vector<1x128xf32> to vector<16x128xf32>
    %21 = arith.subf %6, %20 : vector<16x128xf32>
    %cst_11 = arith.constant 9.99999974E-6 : f32
    %22 = vector.broadcast %cst_11 : f32 to vector<1x128xf32>
    %23 = arith.addf %19, %22 : vector<1x128xf32>
    %24 = math.rsqrt %23 : vector<1x128xf32>
    %25 = vector.broadcast %24 : vector<1x128xf32> to vector<16x128xf32>
    %26 = arith.mulf %21, %25 : vector<16x128xf32>
    %c0_12 = arith.constant 0 : index
    %c0_13 = arith.constant 0 : index
    %c0_14 = arith.constant 0 : index
    %27 = vector.load %arg4[%c0_12, %c0_13, %c0_14] : memref<1x16x128xf32, #tpu.memory_space<vmem>>, vector<1x16x128xf32>
    %28 = vector.shape_cast %27 : vector<1x16x128xf32> to vector<16x128xf32>
    %29 = arith.addf %26, %28 : vector<16x128xf32>
    %c0_15 = arith.constant 0 : index
    %c0_16 = arith.constant 0 : index
    %c0_17 = arith.constant 0 : index
    %30 = vector.load %arg5[%c0_15, %c0_16, %c0_17] : memref<1x16x128xf32, #tpu.memory_space<vmem>>, vector<1x16x128xf32>
    %31 = vector.shape_cast %30 : vector<1x16x128xf32> to vector<16x128xf32>
    %32 = vector.shape_cast %29 : vector<16x128xf32> to vector<1x16x128xf32>
    tpu.vector_store %arg5[%c0_15, %c0_16, %c0_17], %32 {strides = array<i32>} : memref<1x16x128xf32, #tpu.memory_space<vmem>>, vector<1x16x128xf32>,
    return
  }
  func.func @transform_0(%arg0: i32) -> (i32, i32, i32) {
    %c0_i32 = arith.constant 0 : i32
    %c0_i32_0 = arith.constant 0 : i32
    %c0_i32_1 = arith.constant 0 : i32
    return %arg0, %c0_i32, %c0_i32_0 : i32, i32, i32
  }
  func.func @transform_1(%arg0: i32) -> (i32, i32) {
    %c0_i32 = arith.constant 0 : i32
    %c0_i32_0 = arith.constant 0 : i32
    %c0_i32_1 = arith.constant 0 : i32
    return %c0_i32, %c0_i32_0 : i32, i32
  }
  func.func @transform_2(%arg0: i32) -> (i32, i32) {
    %c0_i32 = arith.constant 0 : i32
    %c0_i32_0 = arith.constant 0 : i32
    %c0_i32_1 = arith.constant 0 : i32
    return %c0_i32, %c0_i32_0 : i32, i32
  }
  func.func @transform_3(%arg0: i32) -> (i32, i32, i32) {
    %c0_i32 = arith.constant 0 : i32
    %c0_i32_0 = arith.constant 0 : i32
    %c0_i32_1 = arith.constant 0 : i32
    return %arg0, %c0_i32, %c0_i32_0 : i32, i32, i32
  }
  func.func @transform_4(%arg0: i32) -> (i32, i32, i32) {
    %c0_i32 = arith.constant 0 : i32
    %c0_i32_0 = arith.constant 0 : i32
    %c0_i32_1 = arith.constant 0 : i32
    return %arg0, %c0_i32, %c0_i32_0 : i32, i32, i32
  }
}

</mosaic_0001>

<llo_original>
// kernel: content_encoder_forward.7
$region0: #{content_encoder_forward.7}
  #allocation0 [shape = 'u32[]', space=smem, size = 0x4, offset = 0x4, fixed_abs, tag = 'smem constant byte address 0x4 - core index']
  #allocation1 [shape = 'u32[144,128]{1,0:T(1,128)}', space=vmem, size = 0x12000, scoped, tag = 'internal scratch']
  %s0 = inlined_call_operand.vmem [shape: bf16[2,256,147], index: 0, kind: input, shape index: {}]
  %s1 = inlined_call_operand.vmem [shape: bf16[147,128], index: 1, kind: input, shape index: {}]
  %s2 = inlined_call_operand.vmem [shape: f32[1,128], index: 2, kind: input, shape index: {}]
  %s3 = inlined_call_operand.vmem [shape: f32[2,256,128], index: 3, kind: output, shape index: {}]
  %s4 = sld [smem:[#allocation0]]
  $region45: #{content_encoder_forward.7} parent=0
    _
  %s6 = ssub.s32 1, %s4
  %s7 = scalar_select 0, %s6, %s4
  loop: start=0, step=1, limit=4
  $region2: #{content_encoder_forward.7} parent=0 // loop_pre_header
    _
  $region3: #{content_encoder_forward.7} parent=0 // loop_header
    %s9 = sphi 0, %s13
    %p10 = scmp.ge.s32.totalorder %s9, 4
    %s19 = sphi 0, %s21
    %s22 = sphi 0, %s19
    %s23 = sphi 0, %s22
    %s39 = sphi 0, %s23
    %s43 = sphi 0, %s43
    %s45 = sphi 0, %s43
    %s46 = sphi 0, %s45
    %s60 = sphi 0, %s46
    %s64 = sphi 0, %s64
    %s66 = sphi 0, %s64
    %s67 = sphi 0, %s66
    %s81 = sphi 0, %s67
    %s87 = sphi 0, %s89
    %s90 = sphi 0, %s87
    %s91 = sphi 0, %s90
    %s107 = sphi 0, %s91
  $region4: #{content_encoder_forward.7} parent=0 // loop_header_branch
    %12 = sbr.rel (%p10) target = $region8
  $region5: #{content_encoder_forward.7} parent=0 // loop_body
    %s14 = ssub.s32 %s9, 1
    %s15 = ssub.s32 %s9, 2
    %s16 = sadd.s32 %s9, 1
    %s17 = ssub.s32 %s9, %s16
    %p18 = scmp.eq.s32.totalorder %s17, 0
    %s20 = sadd.s32 %s19, 1
    %s21 = scalar_select %p18, %s19, %s20
    %p24 = pneg %p18
    %p25 = scmp.eq.s32.totalorder %s9, 1
    %p26 = por %p24, %p25
    %p27 = scmp.ne.s32.totalorder %s19, %s22
    %p28 = scmp.eq.s32.totalorder %s9, 0
    %p29 = por %p27, %p28
    %p30 = scmp.ne.s32.totalorder %s19, %s22
    %p31 = scmp.eq.s32.totalorder %s14, 1
    %p32 = por %p30, %p31
    %p33 = scmp.ne.s32.totalorder %s22, %s23
    %p34 = scmp.eq.s32.totalorder %s14, 0
    %p35 = por %p33, %p34
    %p36 = scmp.ne.s32.totalorder %s22, %s23
    %p37 = scmp.eq.s32.totalorder %s15, 1
    %p38 = por %p36, %p37
    %p40 = scmp.ne.s32.totalorder %s23, %s39
    %p41 = scmp.eq.s32.totalorder %s15, 0
    %p42 = por %p40, %p41
    %s44 = sadd.s32 %s43, 1
    %p47 = scmp.eq.s32.totalorder %s9, 1
    %p48 = scmp.ne.s32.totalorder %s43, %s45
    %p49 = scmp.eq.s32.totalorder %s9, 0
    %p50 = por %p48, %p49
    %p51 = scmp.ne.s32.totalorder %s43, %s45
    %p52 = scmp.eq.s32.totalorder %s14, 1
    %p53 = por %p51, %p52
    %p54 = scmp.ne.s32.totalorder %s45, %s46
    %p55 = scmp.eq.s32.totalorder %s14, 0
    %p56 = por %p54, %p55
    %p57 = scmp.ne.s32.totalorder %s45, %s46
    %p58 = scmp.eq.s32.totalorder %s15, 1
    %p59 = por %p57, %p58
    %p61 = scmp.ne.s32.totalorder %s46, %s60
    %p62 = scmp.eq.s32.totalorder %s15, 0
    %p63 = por %p61, %p62
    %s65 = sadd.s32 %s64, 1
    %p68 = scmp.eq.s32.totalorder %s9, 1
    %p69 = scmp.ne.s32.totalorder %s64, %s66
    %p70 = scmp.eq.s32.totalorder %s9, 0
    %p71 = por %p69, %p70
    %p72 = scmp.ne.s32.totalorder %s64, %s66
    %p73 = scmp.eq.s32.totalorder %s14, 1
    %p74 = por %p72, %p73
    %p75 = scmp.ne.s32.totalorder %s66, %s67
    %p76 = scmp.eq.s32.totalorder %s14, 0
    %p77 = por %p75, %p76
    %p78 = scmp.ne.s32.totalorder %s66, %s67
    %p79 = scmp.eq.s32.totalorder %s15, 1
    %p80 = por %p78, %p79
    %p82 = scmp.ne.s32.totalorder %s67, %s81
    %p83 = scmp.eq.s32.totalorder %s15, 0
    %p84 = por %p82, %p83
    %s85 = ssub.s32 %s9, %s16
    %p86 = scmp.eq.s32.totalorder %s85, 0
    %s88 = sadd.s32 %s87, 1
    %s89 = scalar_select %p86, %s87, %s88
    %p92 = pneg %p86
    %p93 = scmp.eq.s32.totalorder %s9, 1
    %p94 = por %p92, %p93
    %p95 = scmp.ne.s32.totalorder %s87, %s90
    %p96 = scmp.eq.s32.totalorder %s9, 0
    %p97 = por %p95, %p96
    %p98 = scmp.ne.s32.totalorder %s87, %s90
    %p99 = scmp.eq.s32.totalorder %s14, 1
    %p100 = por %p98, %p99
    %p101 = scmp.ne.s32.totalorder %s90, %s91
    %p102 = scmp.eq.s32.totalorder %s14, 0
    %p103 = por %p101, %p102
    %p104 = scmp.ne.s32.totalorder %s90, %s91
    %p105 = scmp.eq.s32.totalorder %s15, 1
    %p106 = por %p104, %p105
    %p108 = scmp.ne.s32.totalorder %s91, %s107
    %p109 = scmp.eq.s32.totalorder %s15, 0
    %p110 = por %p108, %p109
    %p111 = scmp.le.s32.totalorder 1, %s9
    %p112 = scmp.lt.s32.totalorder %s9, 3
    %p113 = pnand %p111, %p112
    %p114 = pneg %p113
    // Predicated region
    $region9: #{content_encoder_forward.7} parent=5 // pred_check
      _
    $region10: #{content_encoder_forward.7} parent=5 // pred_check_branch
      %116 = sbr.rel (%p113) target = $region12
    $region11: #{content_encoder_forward.7} parent=5 // pred_region
      %s117 = ssub.s32 %s9, 1
      // Predicated region
      $region13: #{content_encoder_forward.7} parent=11 // pred_check
        %p118 = pneg %p56
      $region14: #{content_encoder_forward.7} parent=11 // pred_check_branch
        %120 = sbr.rel (%p118) target = $region16
      $region15: #{content_encoder_forward.7} parent=11 // pred_region
        _
      $region16: #{content_encoder_forward.7} parent=11 // pred_fallthru
        _
      // Predicated region
      $region17: #{content_encoder_forward.7} parent=11 // pred_check
        %p121 = pneg %p77
      $region18: #{content_encoder_forward.7} parent=11 // pred_check_branch
        %123 = sbr.rel (%p121) target = $region20
      $region19: #{content_encoder_forward.7} parent=11 // pred_region
        _
      $region20: #{content_encoder_forward.7} parent=11 // pred_fallthru
        _
    $region12: #{content_encoder_forward.7} parent=5 // pred_fallthru
      _
    %p124 = scmp.lt.s32.totalorder %s9, 2
    // Predicated region
    $region21: #{content_encoder_forward.7} parent=5 // pred_check
      %p125 = pneg %p124
    $region22: #{content_encoder_forward.7} parent=5 // pred_check_branch
      %127 = sbr.rel (%p125) target = $region24
    $region23: #{content_encoder_forward.7} parent=5 // pred_region
      // Predicated region
      $region25: #{content_encoder_forward.7} parent=23 // pred_check
        %p128 = pneg %p29
      $region26: #{content_encoder_forward.7} parent=23 // pred_check_branch
        %130 = sbr.rel (%p128) target = $region28
      $region27: #{content_encoder_forward.7} parent=23 // pred_region
        %p131 = scmp.lt.s32.totalorder %s9, 1
        %s132 = scalar_select %p131, %s9, 1
        %s133 = smul.addr %s132, 64
        %s134 = smul.addr %s133, 4
        %s135 = scalar_lea.vmem %s0, %s134
      $region28: #{content_encoder_forward.7} parent=23 // pred_fallthru
        _
    $region24: #{content_encoder_forward.7} parent=5 // pred_fallthru
      _
    %p136 = scmp.le.s32.totalorder 1, %s9
    %p137 = scmp.lt.s32.totalorder %s9, 3
    %p138 = pnand %p136, %p137
    %p139 = pneg %p138
    // Predicated region
    $region29: #{content_encoder_forward.7} parent=5 // pred_check
      _
    $region30: #{content_encoder_forward.7} parent=5 // pred_check_branch
      %141 = sbr.rel (%p138) target = $region32
    $region31: #{content_encoder_forward.7} parent=5 // pred_region
      %s142 = ssub.s32 %s9, 1
      %p143 = scmp.lt.s32.totalorder %s14, 1
      %s144 = scalar_select %p143, %s14, 1
      %s145 = smul.addr %s144, 64
      %s146 = smul.addr %s145, 4
      %s147 = scalar_lea.vmem %s0, %s146
      %p148 = pneg %p35
      %p149 = pneg %p32
      %p150 = pneg %p56
      %p151 = pneg %p53
      %p152 = pneg %p77
      %p153 = pneg %p74
      %p154 = pneg %p103
      %p155 = pneg %p100
      %p156 = scmp.lt.s32.totalorder %s14, 1
      %s157 = scalar_select %p156, %s14, 1
      %s158 = smul.addr %s157, 32
      %s159 = smul.addr %s158, 8
      %s160 = scalar_lea.vmem %s3, %s159
      %p161 = scmp.lt.s32.totalorder %s14, 1
      %s162 = scalar_select %p161, %s14, 1
      %s163 = smul.addr %s162, 64
      %s164 = smul.addr %s163, 4
      %s165 = scalar_lea.vmem %s0, %s164
      %p166 = scmp.lt.s32.totalorder %s14, 1
      %s167 = scalar_select %p166, %s14, 1
      %s168 = smul.addr %s167, 32
      %s169 = smul.addr %s168, 8
      %s170 = scalar_lea.vmem %s3, %s169
      %v172 = vld [vmem:[%s165] sm:$0xff]
      %v173 = vld [vmem:[%s165 + $0x8] sm:$0xff]
      %v174 = vld [vmem:[%s165 + $0x10] sm:$0xff]
      %v175 = vld [vmem:[%s165 + $0x18] sm:$0xff]
      %v176 = vld [vmem:[%s165 + $0x20] sm:$0xff]
      %v177 = vld [vmem:[%s165 + $0x28] sm:$0xff]
      %v178 = vld [vmem:[%s165 + $0x30] sm:$0xff]
      %v179 = vld [vmem:[%s165 + $0x38] sm:$0xff]
      %v180 = vld [vmem:[%s165 + $0x40] sm:$0xff]
      %v181 = vld [vmem:[%s165 + $0x48] sm:$0xff]
      %v182 = vld [vmem:[%s165 + $0x50] sm:$0xff]
      %v183 = vld [vmem:[%s165 + $0x58] sm:$0xff]
      %v184 = vld [vmem:[%s165 + $0x60] sm:$0xff]
      %v185 = vld [vmem:[%s165 + $0x68] sm:$0xff]
      %v186 = vld [vmem:[%s165 + $0x70] sm:$0xff]
      %v187 = vld [vmem:[%s165 + $0x78] sm:$0xff]
      %v188 = vld [vmem:[%s165 + $0x80] sm:$0xff]
      %v189 = vld [vmem:[%s165 + $0x88] sm:$0xff]
      %v190 = vld [vmem:[%s165 + $0x90] sm:$0xff]
      %v191 = vld [vmem:[%s165 + $0x98] sm:$0xff]
      %v192 = vld [vmem:[%s165 + $0xa0] sm:$0xff]
      %v193 = vld [vmem:[%s165 + $0xa8] sm:$0xff]
      %v194 = vld [vmem:[%s165 + $0xb0] sm:$0xff]
      %v195 = vld [vmem:[%s165 + $0xb8] sm:$0xff]
      %v196 = vld [vmem:[%s165 + $0xc0] sm:$0xff]
      %v197 = vld [vmem:[%s165 + $0xc8] sm:$0xff]
      %v198 = vld [vmem:[%s165 + $0xd0] sm:$0xff]
      %v199 = vld [vmem:[%s165 + $0xd8] sm:$0xff]
      %v200 = vld [vmem:[%s165 + $0xe0] sm:$0xff]
      %v201 = vld [vmem:[%s165 + $0xe8] sm:$0xff]
      %v202 = vld [vmem:[%s165 + $0xf0] sm:$0xff]
      %v203 = vld [vmem:[%s165 + $0xf8] sm:$0xff]
      %v204 = vld [vmem:[%s1] sm:$0xf]
      %v205 = vld [vmem:[%s1 + $0x4] sm:$0xf]
      %v206 = vld [vmem:[%s1 + $0x8] sm:$0xf]
      %v207 = vld [vmem:[%s1 + $0xc] sm:$0xf]
      %v208 = vld [vmem:[%s1 + $0x10] sm:$0xf]
      %v209 = vld [vmem:[%s1 + $0x14] sm:$0xf]
      %v210 = vld [vmem:[%s1 + $0x18] sm:$0xf]
      %v211 = vld [vmem:[%s1 + $0x1c] sm:$0xf]
      %v212 = vld [vmem:[%s1 + $0x20] sm:$0xf]
      %v213 = vld [vmem:[%s1 + $0x24] sm:$0xf]
      %v214 = vld [vmem:[%s1 + $0x28] sm:$0xf]
      %v215 = vld [vmem:[%s1 + $0x2c] sm:$0xf]
      %v216 = vld [vmem:[%s1 + $0x30] sm:$0xf]
      %v217 = vld [vmem:[%s1 + $0x34] sm:$0xf]
      %v218 = vld [vmem:[%s1 + $0x38] sm:$0xf]
      %v219 = vld [vmem:[%s1 + $0x3c] sm:$0xf]
      %v220 = vld [vmem:[%s1 + $0x40] sm:$0xf]
      %v221 = vld [vmem:[%s1 + $0x44] sm:$0xf]
      %v222 = vld [vmem:[%s1 + $0x48] sm:$0x3]
      %v223 = vld [vmem:[%s2] sm:$0x1]
      %v225 = vlaneseq
      %v226 = vshrl.u32 %v225, 7
      %v227 = vsub.s32 0, %v226
      %v228 = vrot.slane %v223, %v227
      %v262 = vunpack.c.l.b16 %v172
      %v263 = vunpack.c.h.b16 %v172
      %v264 = vunpack.c.l.b16 %v173
      %v265 = vunpack.c.h.b16 %v173
      %v266 = vunpack.c.l.b16 %v174
      %v267 = vunpack.c.h.b16 %v174
      %v268 = vunpack.c.l.b16 %v175
      %v269 = vunpack.c.h.b16 %v175
      %v270 = vunpack.c.l.b16 %v176
      %v271 = vunpack.c.h.b16 %v176
      %v272 = vunpack.c.l.b16 %v177
      %v273 = vunpack.c.h.b16 %v177
      %v274 = vunpack.c.l.b16 %v178
      %v275 = vunpack.c.h.b16 %v178
      %v276 = vunpack.c.l.b16 %v179
      %v277 = vunpack.c.h.b16 %v179
      %v278 = vunpack.c.l.b16 %v180
      %v279 = vunpack.c.h.b16 %v180
      %v280 = vunpack.c.l.b16 %v181
      %v281 = vunpack.c.h.b16 %v181
      %v282 = vunpack.c.l.b16 %v182
      %v283 = vunpack.c.h.b16 %v182
      %v284 = vunpack.c.l.b16 %v183
      %v285 = vunpack.c.h.b16 %v183
      %v286 = vunpack.c.l.b16 %v184
      %v287 = vunpack.c.h.b16 %v184
      %v288 = vunpack.c.l.b16 %v185
      %v289 = vunpack.c.h.b16 %v185
      %v290 = vunpack.c.l.b16 %v186
      %v291 = vunpack.c.h.b16 %v186
      %v292 = vunpack.c.l.b16 %v187
      %v293 = vunpack.c.h.b16 %v187
      %v294 = vunpack.c.l.b16 %v188
      %v295 = vunpack.c.h.b16 %v188
      %v296 = vunpack.c.l.b16 %v189
      %v297 = vunpack.c.h.b16 %v189
      %v298 = vunpack.c.l.b16 %v190
      %v299 = vunpack.c.h.b16 %v190
      %v300 = vunpack.c.l.b16 %v191
      %v301 = vunpack.c.h.b16 %v191
      %v302 = vunpack.c.l.b16 %v192
      %v303 = vunpack.c.h.b16 %v192
      %v304 = vunpack.c.l.b16 %v193
      %v305 = vunpack.c.h.b16 %v193
      %v306 = vunpack.c.l.b16 %v194
      %v307 = vunpack.c.h.b16 %v194
      %v308 = vunpack.c.l.b16 %v195
      %v309 = vunpack.c.h.b16 %v195
      %v310 = vunpack.c.l.b16 %v196
      %v311 = vunpack.c.h.b16 %v196
      %v312 = vunpack.c.l.b16 %v197
      %v313 = vunpack.c.h.b16 %v197
      %v314 = vunpack.c.l.b16 %v198
      %v315 = vunpack.c.h.b16 %v198
      %v316 = vunpack.c.l.b16 %v199
      %v317 = vunpack.c.h.b16 %v199
      %v318 = vunpack.c.l.b16 %v200
      %v319 = vunpack.c.h.b16 %v200
      %v320 = vunpack.c.l.b16 %v201
      %v321 = vunpack.c.h.b16 %v201
      %v322 = vunpack.c.l.b16 %v202
      %v323 = vunpack.c.h.b16 %v202
      %v324 = vunpack.c.l.b16 %v203
      %v325 = vunpack.c.h.b16 %v203
      %v326 = vpack.c.b16 %v264, %v262
      %v327 = vpack.c.b16 %v265, %v263
      %v328 = vpack.c.b16 %v268, %v266
      %v329 = vpack.c.b16 %v269, %v267
      %v330 = vpack.c.b16 %v272, %v270
      %v331 = vpack.c.b16 %v273, %v271
      %v332 = vpack.c.b16 %v276, %v274
      %v333 = vpack.c.b16 %v277, %v275
      %v334 = vpack.c.b16 %v280, %v278
      %v335 = vpack.c.b16 %v281, %v279
      %v336 = vpack.c.b16 %v284, %v282
      %v337 = vpack.c.b16 %v285, %v283
      %v338 = vpack.c.b16 %v288, %v286
      %v339 = vpack.c.b16 %v289, %v287
      %v340 = vpack.c.b16 %v292, %v290
      %v341 = vpack.c.b16 %v293, %v291
      %v342 = vpack.c.b16 %v296, %v294
      %v343 = vpack.c.b16 %v297, %v295
      %v344 = vpack.c.b16 %v300, %v298
      %v345 = vpack.c.b16 %v301, %v299
      %v346 = vpack.c.b16 %v304, %v302
      %v347 = vpack.c.b16 %v305, %v303
      %v348 = vpack.c.b16 %v308, %v306
      %v349 = vpack.c.b16 %v309, %v307
      %v350 = vpack.c.b16 %v312, %v310
      %v351 = vpack.c.b16 %v313, %v311
      %v352 = vpack.c.b16 %v316, %v314
      %v353 = vpack.c.b16 %v317, %v315
      %v354 = vpack.c.b16 %v320, %v318
      %v355 = vpack.c.b16 %v321, %v319
      %v356 = vpack.c.b16 %v324, %v322
      %v357 = vpack.c.b16 %v325, %v323
      %v393 = vunpack.c.l.b16 %v204
      %v394 = vunpack.c.l.b16 %v205
      %v395 = vunpack.c.l.b16 %v206
      %v396 = vunpack.c.l.b16 %v207
      %v397 = vunpack.c.l.b16 %v208
      %v398 = vunpack.c.l.b16 %v209
      %v399 = vunpack.c.l.b16 %v210
      %v400 = vunpack.c.l.b16 %v211
      %v401 = vunpack.c.l.b16 %v212
      %v402 = vunpack.c.l.b16 %v213
      %v403 = vunpack.c.l.b16 %v214
      %v404 = vunpack.c.l.b16 %v215
      %v405 = vunpack.c.l.b16 %v216
      %v406 = vunpack.c.l.b16 %v217
      %v407 = vunpack.c.l.b16 %v218
      %v408 = vunpack.c.l.b16 %v219
      %v409 = vunpack.c.l.b16 %v220
      %v410 = vunpack.c.l.b16 %v221
      %v411 = vunpack.c.l.b16 %v222
      %v412 = vpack.c.b16 %v394, %v393
      %v413 = vpack.c.b16 %v396, %v395
      %v414 = vpack.c.b16 %v398, %v397
      %v415 = vpack.c.b16 %v400, %v399
      %v416 = vpack.c.b16 %v402, %v401
      %v417 = vpack.c.b16 %v404, %v403
      %v418 = vpack.c.b16 %v406, %v405
      %v419 = vpack.c.b16 %v408, %v407
      %v420 = vpack.c.b16 %v410, %v409
      %v421 = vpack.c.b16 %v411, %v411
      %vm431 = vcmask 154624
      %v433 = vsel %vm431, %v327, 0
      %v436 = vsel %vm431, %v329, 0
      %v439 = vsel %vm431, %v331, 0
      %v442 = vsel %vm431, %v333, 0
      %v445 = vsel %vm431, %v335, 0
      %v448 = vsel %vm431, %v337, 0
      %v451 = vsel %vm431, %v339, 0
      %v454 = vsel %vm431, %v341, 0
      %v457 = vsel %vm431, %v343, 0
      %v460 = vsel %vm431, %v345, 0
      %v463 = vsel %vm431, %v347, 0
      %v466 = vsel %vm431, %v349, 0
      %v469 = vsel %vm431, %v351, 0
      %v472 = vsel %vm431, %v353, 0
      %v475 = vsel %vm431, %v355, 0
      %v478 = vsel %vm431, %v357, 0
      %vm480 = vcmask 1040384
      %vm481 = vcmask 1041408
      %v482 = vsel %vm480, 4294967295, 65535
      %v483 = vsel %vm481, %v482, 0
      %v485 = vand.u32 %v421, %v483
      %487 = vmatprep.subr.bf16.mxu0 0
      %488 = vmatpush1.bf16.msra.mxu0 %v419
      %489 = vmatprep.subr.bf16.mxu0 0
      %490 = vmatpush1.bf16.msra.mxu0 %v418
      %491 = vmatprep.subr.bf16.mxu0 0
      %492 = vmatpush1.bf16.msra.mxu0 %v417
      %493 = vmatprep.subr.bf16.mxu0 0
      %494 = vmatpush1.bf16.msra.mxu0 %v416
      %495 = vmatprep.subr.bf16.mxu0 0
      %496 = vmatpush1.bf16.msra.mxu0 %v415
      %497 = vmatprep.subr.bf16.mxu0 0
      %498 = vmatpush1.bf16.msra.mxu0 %v414
      %499 = vmatprep.subr.bf16.mxu0 0
      %500 = vmatpush1.bf16.msra.mxu0 %v413
      %501 = vmatprep.subr.bf16.mxu0 0
      %502 = vmatpush1.bf16.msra.mxu0 %v412
      %503 = vmatprep.subr.bf16.mxu0 0
      %504 = vmatpush2.bf16.msra.mxu0 0
      %505 = vmatprep.subr.bf16.mxu0 0
      %506 = vmatpush2.bf16.msra.mxu0 0
      %507 = vmatprep.subr.bf16.mxu0 0
      %508 = vmatpush2.bf16.msra.mxu0 0
      %509 = vmatprep.subr.bf16.mxu0 0
      %510 = vmatpush2.bf16.msra.mxu0 0
      %511 = vmatprep.subr.bf16.mxu0 0
      %512 = vmatpush2.bf16.msra.mxu0 0
      %513 = vmatprep.subr.bf16.mxu0 0
      %514 = vmatpush2.bf16.msra.mxu0 0
      %515 = vmatprep.subr.bf16.mxu0 0
      %516 = vmatpush2.bf16.msra.mxu0 %v485
      %517 = vmatprep.subr.bf16.mxu0 0
      %518 = vmatpush2.bf16.msra.mxu0 %v420
      %519 = vmatprep.mubr.bf16.mxu0 %v433
      %520 = vmatmul.mubr.bf16.gmra.mxu0 %v326
      %v521 = vpop.f32.mrf.mxu0
      %v522 = vadd.f32 %v228, %v521
      %v523 = vpop.f32.mrf.mxu0
      %v524 = vpop.f32.mrf.mxu0
      %v525 = vadd.f32 %v228, %v524
      %v526 = vpop.f32.mrf.mxu0
      %527 = vmatprep.mubr.bf16.mxu0 %v436
      %528 = vmatmul.mubr.bf16.gmra.mxu0 %v328
      %v529 = vpop.f32.mrf.mxu0
      %v530 = vadd.f32 %v228, %v529
      %v531 = vpop.f32.mrf.mxu0
      %v532 = vpop.f32.mrf.mxu0
      %v533 = vadd.f32 %v228, %v532
      %v534 = vpop.f32.mrf.mxu0
      %535 = vmatprep.mubr.bf16.mxu0 %v439
      %536 = vmatmul.mubr.bf16.gmra.mxu0 %v330
      %v537 = vpop.f32.mrf.mxu0
      %v538 = vadd.f32 %v228, %v537
      %v539 = vpop.f32.mrf.mxu0
      %v540 = vpop.f32.mrf.mxu0
      %v541 = vadd.f32 %v228, %v540
      %v542 = vpop.f32.mrf.mxu0
      %543 = vmatprep.mubr.bf16.mxu0 %v442
      %544 = vmatmul.mubr.bf16.gmra.mxu0 %v332
      %v545 = vpop.f32.mrf.mxu0
      %v546 = vadd.f32 %v228, %v545
      %v547 = vpop.f32.mrf.mxu0
      %v548 = vpop.f32.mrf.mxu0
      %v549 = vadd.f32 %v228, %v548
      %v550 = vpop.f32.mrf.mxu0
      %551 = vmatprep.mubr.bf16.mxu0 %v445
      %552 = vmatmul.mubr.bf16.gmra.mxu0 %v334
      %v553 = vpop.f32.mrf.mxu0
      %v554 = vadd.f32 %v228, %v553
      %v555 = vpop.f32.mrf.mxu0
      %v556 = vpop.f32.mrf.mxu0
      %v557 = vadd.f32 %v228, %v556
      %v558 = vpop.f32.mrf.mxu0
      %559 = vmatprep.mubr.bf16.mxu0 %v448
      %560 = vmatmul.mubr.bf16.gmra.mxu0 %v336
      %v561 = vpop.f32.mrf.mxu0
      %v562 = vadd.f32 %v228, %v561
      %v563 = vpop.f32.mrf.mxu0
      %v564 = vpop.f32.mrf.mxu0
      %v565 = vadd.f32 %v228, %v564
      %v566 = vpop.f32.mrf.mxu0
      %567 = vmatprep.mubr.bf16.mxu0 %v451
      %568 = vmatmul.mubr.bf16.gmra.mxu0 %v338
      %v569 = vpop.f32.mrf.mxu0
      %v570 = vadd.f32 %v228, %v569
      %v571 = vpop.f32.mrf.mxu0
      %v572 = vpop.f32.mrf.mxu0
      %v573 = vadd.f32 %v228, %v572
      %v574 = vpop.f32.mrf.mxu0
      %575 = vmatprep.mubr.bf16.mxu0 %v454
      %576 = vmatmul.mubr.bf16.gmra.mxu0 %v340
      %v577 = vpop.f32.mrf.mxu0
      %v578 = vadd.f32 %v228, %v577
      %v579 = vpop.f32.mrf.mxu0
      %v580 = vpop.f32.mrf.mxu0
      %v581 = vadd.f32 %v228, %v580
      %v582 = vpop.f32.mrf.mxu0
      %583 = vmatprep.mubr.bf16.mxu0 %v457
      %584 = vmatmul.mubr.bf16.gmra.mxu0 %v342
      %v585 = vpop.f32.mrf.mxu0
      %v586 = vadd.f32 %v228, %v585
      %v587 = vpop.f32.mrf.mxu0
      %v588 = vpop.f32.mrf.mxu0
      %v589 = vadd.f32 %v228, %v588
      %v590 = vpop.f32.mrf.mxu0
      %591 = vmatprep.mubr.bf16.mxu0 %v460
      %592 = vmatmul.mubr.bf16.gmra.mxu0 %v344
      %v593 = vpop.f32.mrf.mxu0
      %v594 = vadd.f32 %v228, %v593
      %v595 = vpop.f32.mrf.mxu0
      %v596 = vpop.f32.mrf.mxu0
      %v597 = vadd.f32 %v228, %v596
      %v598 = vpop.f32.mrf.mxu0
      %599 = vmatprep.mubr.bf16.mxu0 %v463
      %600 = vmatmul.mubr.bf16.gmra.mxu0 %v346
      %v601 = vpop.f32.mrf.mxu0
      %v602 = vadd.f32 %v228, %v601
      %v603 = vpop.f32.mrf.mxu0
      %v604 = vpop.f32.mrf.mxu0
      %v605 = vadd.f32 %v228, %v604
      %v606 = vpop.f32.mrf.mxu0
      %607 = vmatprep.mubr.bf16.mxu0 %v466
      %608 = vmatmul.mubr.bf16.gmra.mxu0 %v348
      %v609 = vpop.f32.mrf.mxu0
      %v610 = vadd.f32 %v228, %v609
      %v611 = vpop.f32.mrf.mxu0
      %v612 = vpop.f32.mrf.mxu0
      %v613 = vadd.f32 %v228, %v612
      %v614 = vpop.f32.mrf.mxu0
      %615 = vmatprep.mubr.bf16.mxu0 %v469
      %616 = vmatmul.mubr.bf16.gmra.mxu0 %v350
      %v617 = vpop.f32.mrf.mxu0
      %v618 = vadd.f32 %v228, %v617
      %v619 = vpop.f32.mrf.mxu0
      %v620 = vpop.f32.mrf.mxu0
      %v621 = vadd.f32 %v228, %v620
      %v622 = vpop.f32.mrf.mxu0
      %623 = vmatprep.mubr.bf16.mxu0 %v472
      %624 = vmatmul.mubr.bf16.gmra.mxu0 %v352
      %v625 = vpop.f32.mrf.mxu0
      %v626 = vadd.f32 %v228, %v625
      %v627 = vpop.f32.mrf.mxu0
      %v628 = vpop.f32.mrf.mxu0
      %v629 = vadd.f32 %v228, %v628
      %v630 = vpop.f32.mrf.mxu0
      %631 = vmatprep.mubr.bf16.mxu0 %v475
      %632 = vmatmul.mubr.bf16.gmra.mxu0 %v354
      %v633 = vpop.f32.mrf.mxu0
      %v634 = vadd.f32 %v228, %v633
      %v635 = vpop.f32.mrf.mxu0
      %v636 = vpop.f32.mrf.mxu0
      %v637 = vadd.f32 %v228, %v636
      %v638 = vpop.f32.mrf.mxu0
      %639 = vmatprep.mubr.bf16.mxu0 %v478
      %640 = vmatmul.mubr.bf16.gmra.mxu0 %v356
      %v641 = vpop.f32.mrf.mxu0
      %v642 = vadd.f32 %v228, %v641
      %v643 = vpop.f32.mrf.mxu0
      %v644 = vpop.f32.mrf.mxu0
      %v645 = vadd.f32 %v228, %v644
      %v646 = vpop.f32.mrf.mxu0
      %647 = vdwg.mxu0
      %v648 = vadd.f32 %v522, %v525
      %v649 = vadd.f32 %v648, %v530
      %v650 = vadd.f32 %v649, %v533
      %v651 = vadd.f32 %v650, %v538
      %v652 = vadd.f32 %v651, %v541
      %v653 = vadd.f32 %v652, %v546
      %v654 = vadd.f32 %v653, %v549
      %v655 = vadd.f32 %v654, %v554
      %v656 = vadd.f32 %v655, %v557
      %v657 = vadd.f32 %v656, %v562
      %v658 = vadd.f32 %v657, %v565
      %v659 = vadd.f32 %v658, %v570
      %v660 = vadd.f32 %v659, %v573
      %v661 = vadd.f32 %v660, %v578
      %v662 = vadd.f32 %v661, %v581
      %v663 = vadd.f32 %v662, %v586
      %v664 = vadd.f32 %v663, %v589
      %v665 = vadd.f32 %v664, %v594
      %v666 = vadd.f32 %v665, %v597
      %v667 = vadd.f32 %v666, %v602
      %v668 = vadd.f32 %v667, %v605
      %v669 = vadd.f32 %v668, %v610
      %v670 = vadd.f32 %v669, %v613
      %v671 = vadd.f32 %v670, %v618
      %v672 = vadd.f32 %v671, %v621
      %v673 = vadd.f32 %v672, %v626
      %v674 = vadd.f32 %v673, %v629
      %v675 = vadd.f32 %v674, %v634
      %v676 = vadd.f32 %v675, %v637
      %v677 = vadd.f32 %v676, %v642
      %v678 = vadd.f32 %v677, %v645
      %v679 = vrot.slane %v678, 4
      %v680 = vadd.f32 %v678, %v679
      %v681 = vrot.slane %v680, 2
      %v682 = vadd.f32 %v680, %v681
      %v683 = vrot.slane %v682, 1
      %v684 = vadd.f32 %v682, %v683
      %v685 = vrcp.pop 256.0
      %v686 = vmul.f32 %v684, %v685
      %v687 = vmul.f32 %v522, %v522
      %v688 = vmul.f32 %v525, %v525
      %v689 = vmul.f32 %v530, %v530
      %v690 = vmul.f32 %v533, %v533
      %v691 = vmul.f32 %v538, %v538
      %v692 = vmul.f32 %v541, %v541
      %v693 = vmul.f32 %v546, %v546
      %v694 = vmul.f32 %v549, %v549
      %v695 = vmul.f32 %v554, %v554
      %v696 = vmul.f32 %v557, %v557
      %v697 = vmul.f32 %v562, %v562
      %v698 = vmul.f32 %v565, %v565
      %v699 = vmul.f32 %v570, %v570
      %v700 = vmul.f32 %v573, %v573
      %v701 = vmul.f32 %v578, %v578
      %v702 = vmul.f32 %v581, %v581
      %v703 = vmul.f32 %v586, %v586
      %v704 = vmul.f32 %v589, %v589
      %v705 = vmul.f32 %v594, %v594
      %v706 = vmul.f32 %v597, %v597
      %v707 = vmul.f32 %v602, %v602
      %v708 = vmul.f32 %v605, %v605
      %v709 = vmul.f32 %v610, %v610
      %v710 = vmul.f32 %v613, %v613
      %v711 = vmul.f32 %v618, %v618
      %v712 = vmul.f32 %v621, %v621
      %v713 = vmul.f32 %v626, %v626
      %v714 = vmul.f32 %v629, %v629
      %v715 = vmul.f32 %v634, %v634
      %v716 = vmul.f32 %v637, %v637
      %v717 = vmul.f32 %v642, %v642
      %v718 = vmul.f32 %v645, %v645
      %v719 = vadd.f32 %v687, %v688
      %v720 = vadd.f32 %v719, %v689
      %v721 = vadd.f32 %v720, %v690
      %v722 = vadd.f32 %v721, %v691
      %v723 = vadd.f32 %v722, %v692
      %v724 = vadd.f32 %v723, %v693
      %v725 = vadd.f32 %v724, %v694
      %v726 = vadd.f32 %v725, %v695
      %v727 = vadd.f32 %v726, %v696
      %v728 = vadd.f32 %v727, %v697
      %v729 = vadd.f32 %v728, %v698
      %v730 = vadd.f32 %v729, %v699
      %v731 = vadd.f32 %v730, %v700
      %v732 = vadd.f32 %v731, %v701
      %v733 = vadd.f32 %v732, %v702
      %v734 = vadd.f32 %v733, %v703
      %v735 = vadd.f32 %v734, %v704
      %v736 = vadd.f32 %v735, %v705
      %v737 = vadd.f32 %v736, %v706
      %v738 = vadd.f32 %v737, %v707
      %v739 = vadd.f32 %v738, %v708
      %v740 = vadd.f32 %v739, %v709
      %v741 = vadd.f32 %v740, %v710
      %v742 = vadd.f32 %v741, %v711
      %v743 = vadd.f32 %v742, %v712
      %v744 = vadd.f32 %v743, %v713
      %v745 = vadd.f32 %v744, %v714
      %v746 = vadd.f32 %v745, %v715
      %v747 = vadd.f32 %v746, %v716
      %v748 = vadd.f32 %v747, %v717
      %v749 = vadd.f32 %v748, %v718
      %v750 = vrot.slane %v749, 4
      %v751 = vadd.f32 %v749, %v750
      %v752 = vrot.slane %v751, 2
      %v753 = vadd.f32 %v751, %v752
      %v754 = vrot.slane %v753, 1
      %v755 = vadd.f32 %v753, %v754
      %v756 = vmul.f32 %v755, %v685
      %v757 = vmul.f32 %v686, %v686
      %v758 = vsub.f32 %v756, %v757
      %v759 = vmax.f32 %v758, 0.0
      %v760 = vsub.f32 %v522, %v686
      %v761 = vsub.f32 %v525, %v686
      %v762 = vsub.f32 %v530, %v686
      %v763 = vsub.f32 %v533, %v686
      %v764 = vsub.f32 %v538, %v686
      %v765 = vsub.f32 %v541, %v686
      %v766 = vsub.f32 %v546, %v686
      %v767 = vsub.f32 %v549, %v686
      %v768 = vsub.f32 %v554, %v686
      %v769 = vsub.f32 %v557, %v686
      %v770 = vsub.f32 %v562, %v686
      %v771 = vsub.f32 %v565, %v686
      %v772 = vsub.f32 %v570, %v686
      %v773 = vsub.f32 %v573, %v686
      %v774 = vsub.f32 %v578, %v686
      %v775 = vsub.f32 %v581, %v686
      %v776 = vsub.f32 %v586, %v686
      %v777 = vsub.f32 %v589, %v686
      %v778 = vsub.f32 %v594, %v686
      %v779 = vsub.f32 %v597, %v686
      %v780 = vsub.f32 %v602, %v686
      %v781 = vsub.f32 %v605, %v686
      %v782 = vsub.f32 %v610, %v686
      %v783 = vsub.f32 %v613, %v686
      %v784 = vsub.f32 %v618, %v686
      %v785 = vsub.f32 %v621, %v686
      %v786 = vsub.f32 %v626, %v686
      %v787 = vsub.f32 %v629, %v686
      %v788 = vsub.f32 %v634, %v686
      %v789 = vsub.f32 %v637, %v686
      %v790 = vsub.f32 %v642, %v686
      %v791 = vsub.f32 %v645, %v686
      %v792 = vadd.f32 %v759, 1e-05
      %v793 = vrsqrt.pop %v792
      %v794 = vmul.f32 %v760, %v793
      %v795 = vmul.f32 %v761, %v793
      %v796 = vmul.f32 %v762, %v793
      %v797 = vmul.f32 %v763, %v793
      %v798 = vmul.f32 %v764, %v793
      %v799 = vmul.f32 %v765, %v793
      %v800 = vmul.f32 %v766, %v793
      %v801 = vmul.f32 %v767, %v793
      %v802 = vmul.f32 %v768, %v793
      %v803 = vmul.f32 %v769, %v793
      %v804 = vmul.f32 %v770, %v793
      %v805 = vmul.f32 %v771, %v793
      %v806 = vmul.f32 %v772, %v793
      %v807 = vmul.f32 %v773, %v793
      %v808 = vmul.f32 %v774, %v793
      %v809 = vmul.f32 %v775, %v793
      %v810 = vmul.f32 %v776, %v793
      %v811 = vmul.f32 %v777, %v793
      %v812 = vmul.f32 %v778, %v793
      %v813 = vmul.f32 %v779, %v793
      %v814 = vmul.f32 %v780, %v793
      %v815 = vmul.f32 %v781, %v793
      %v816 = vmul.f32 %v782, %v793
      %v817 = vmul.f32 %v783, %v793
      %v818 = vmul.f32 %v784, %v793
      %v819 = vmul.f32 %v785, %v793
      %v820 = vmul.f32 %v786, %v793
      %v821 = vmul.f32 %v787, %v793
      %v822 = vmul.f32 %v788, %v793
      %v823 = vmul.f32 %v789, %v793
      %v824 = vmul.f32 %v790, %v793
      %v825 = vmul.f32 %v791, %v793
      %v826 = vmax.f32 %v794, 0.0
      %v827 = vmax.f32 %v795, 0.0
      %v828 = vmax.f32 %v796, 0.0
      %v829 = vmax.f32 %v797, 0.0
      %v830 = vmax.f32 %v798, 0.0
      %v831 = vmax.f32 %v799, 0.0
      %v832 = vmax.f32 %v800, 0.0
      %v833 = vmax.f32 %v801, 0.0
      %v834 = vmax.f32 %v802, 0.0
      %v835 = vmax.f32 %v803, 0.0
      %v836 = vmax.f32 %v804, 0.0
      %v837 = vmax.f32 %v805, 0.0
      %v838 = vmax.f32 %v806, 0.0
      %v839 = vmax.f32 %v807, 0.0
      %v840 = vmax.f32 %v808, 0.0
      %v841 = vmax.f32 %v809, 0.0
      %v842 = vmax.f32 %v810, 0.0
      %v843 = vmax.f32 %v811, 0.0
      %v844 = vmax.f32 %v812, 0.0
      %v845 = vmax.f32 %v813, 0.0
      %v846 = vmax.f32 %v814, 0.0
      %v847 = vmax.f32 %v815, 0.0
      %v848 = vmax.f32 %v816, 0.0
      %v849 = vmax.f32 %v817, 0.0
      %v850 = vmax.f32 %v818, 0.0
      %v851 = vmax.f32 %v819, 0.0
      %v852 = vmax.f32 %v820, 0.0
      %v853 = vmax.f32 %v821, 0.0
      %v854 = vmax.f32 %v822, 0.0
      %v855 = vmax.f32 %v823, 0.0
      %v856 = vmax.f32 %v824, 0.0
      %v857 = vmax.f32 %v825, 0.0
      %858 = vst [vmem:[%s170] sm:$0xff] %v826
      %859 = vst [vmem:[%s170 + $0x8] sm:$0xff] %v827
      %860 = vst [vmem:[%s170 + $0x10] sm:$0xff] %v828
      %861 = vst [vmem:[%s170 + $0x18] sm:$0xff] %v829
      %862 = vst [vmem:[%s170 + $0x20] sm:$0xff] %v830
      %863 = vst [vmem:[%s170 + $0x28] sm:$0xff] %v831
      %864 = vst [vmem:[%s170 + $0x30] sm:$0xff] %v832
      %865 = vst [vmem:[%s170 + $0x38] sm:$0xff] %v833
      %866 = vst [vmem:[%s170 + $0x40] sm:$0xff] %v834
      %867 = vst [vmem:[%s170 + $0x48] sm:$0xff] %v835
      %868 = vst [vmem:[%s170 + $0x50] sm:$0xff] %v836
      %869 = vst [vmem:[%s170 + $0x58] sm:$0xff] %v837
      %870 = vst [vmem:[%s170 + $0x60] sm:$0xff] %v838
      %871 = vst [vmem:[%s170 + $0x68] sm:$0xff] %v839
      %872 = vst [vmem:[%s170 + $0x70] sm:$0xff] %v840
      %873 = vst [vmem:[%s170 + $0x78] sm:$0xff] %v841
      %874 = vst [vmem:[%s170 + $0x80] sm:$0xff] %v842
      %875 = vst [vmem:[%s170 + $0x88] sm:$0xff] %v843
      %876 = vst [vmem:[%s170 + $0x90] sm:$0xff] %v844
      %877 = vst [vmem:[%s170 + $0x98] sm:$0xff] %v845
      %878 = vst [vmem:[%s170 + $0xa0] sm:$0xff] %v846
      %879 = vst [vmem:[%s170 + $0xa8] sm:$0xff] %v847
      %880 = vst [vmem:[%s170 + $0xb0] sm:$0xff] %v848
      %881 = vst [vmem:[%s170 + $0xb8] sm:$0xff] %v849
      %882 = vst [vmem:[%s170 + $0xc0] sm:$0xff] %v850
      %883 = vst [vmem:[%s170 + $0xc8] sm:$0xff] %v851
      %884 = vst [vmem:[%s170 + $0xd0] sm:$0xff] %v852
      %885 = vst [vmem:[%s170 + $0xd8] sm:$0xff] %v853
      %886 = vst [vmem:[%s170 + $0xe0] sm:$0xff] %v854
      %887 = vst [vmem:[%s170 + $0xe8] sm:$0xff] %v855
      %888 = vst [vmem:[%s170 + $0xf0] sm:$0xff] %v856
      %889 = vst [vmem:[%s170 + $0xf8] sm:$0xff] %v857
      %p890 = scmp.lt.s32.totalorder %s14, 1
      %s891 = scalar_select %p890, %s14, 1
      %s892 = smul.addr %s891, 32
      %s893 = smul.addr %s892, 8
      %s894 = scalar_lea.vmem %s3, %s893
      // Predicated region
      $region33: #{content_encoder_forward.7} parent=31 // pred_check
        %p895 = pneg %p100
      $region34: #{content_encoder_forward.7} parent=31 // pred_check_branch
        %897 = sbr.rel (%p895) target = $region36
      $region35: #{content_encoder_forward.7} parent=31 // pred_region
        _
      $region36: #{content_encoder_forward.7} parent=31 // pred_fallthru
        _
    $region32: #{content_encoder_forward.7} parent=5 // pred_fallthru
      _
    %p898 = scmp.le.s32.totalorder 2, %s9
    // Predicated region
    $region37: #{content_encoder_forward.7} parent=5 // pred_check
      %p899 = pneg %p898
    $region38: #{content_encoder_forward.7} parent=5 // pred_check_branch
      %901 = sbr.rel (%p899) target = $region40
    $region39: #{content_encoder_forward.7} parent=5 // pred_region
      %s902 = ssub.s32 %s9, 2
      // Predicated region
      $region41: #{content_encoder_forward.7} parent=39 // pred_check
        %p903 = pneg %p106
      $region42: #{content_encoder_forward.7} parent=39 // pred_check_branch
        %905 = sbr.rel (%p903) target = $region44
      $region43: #{content_encoder_forward.7} parent=39 // pred_region
        %p906 = scmp.lt.s32.totalorder %s15, 1
        %s907 = scalar_select %p906, %s15, 1
        %s908 = smul.addr %s907, 32
        %s909 = smul.addr %s908, 8
        %s910 = scalar_lea.vmem %s3, %s909
      $region44: #{content_encoder_forward.7} parent=39 // pred_fallthru
        _
    $region40: #{content_encoder_forward.7} parent=5 // pred_fallthru
      _
  $region6: #{content_encoder_forward.7} parent=0 // loop_footer
    %s13 = sadd.s32 1, %s9
  $region7: #{content_encoder_forward.7} parent=0 // loop_footer_branch
    %8 = sbr.rel target = $region3
  $region8: #{content_encoder_forward.7} parent=0 // loop_exit
    _

// kernel: content_encoder_forward.8
$region0: #{content_encoder_forward.8}
  #allocation0 [shape = 'u32[]', space=smem, size = 0x4, offset = 0x4, fixed_abs, tag = 'smem constant byte address 0x4 - core index']
  #allocation1 [shape = 'u32[144,128]{1,0:T(1,128)}', space=vmem, size = 0x12000, scoped, tag = 'internal scratch']
  %s0 = inlined_call_operand.vmem [shape: bf16[2,64,256], index: 0, kind: input, shape index: {}]
  %s1 = inlined_call_operand.vmem [shape: bf16[256,128], index: 1, kind: input, shape index: {}]
  %s2 = inlined_call_operand.vmem [shape: f32[1,128], index: 2, kind: input, shape index: {}]
  %s3 = inlined_call_operand.vmem [shape: f32[2,64,128], index: 3, kind: output, shape index: {}]
  %s4 = sld [smem:[#allocation0]]
  $region45: #{content_encoder_forward.8} parent=0
    _
  %s6 = ssub.s32 1, %s4
  %s7 = scalar_select 0, %s6, %s4
  loop: start=0, step=1, limit=4
  $region2: #{content_encoder_forward.8} parent=0 // loop_pre_header
    _
  $region3: #{content_encoder_forward.8} parent=0 // loop_header
    %s9 = sphi 0, %s13
    %p10 = scmp.ge.s32.totalorder %s9, 4
    %s19 = sphi 0, %s21
    %s22 = sphi 0, %s19
    %s23 = sphi 0, %s22
    %s39 = sphi 0, %s23
    %s43 = sphi 0, %s43
    %s45 = sphi 0, %s43
    %s46 = sphi 0, %s45
    %s60 = sphi 0, %s46
    %s64 = sphi 0, %s64
    %s66 = sphi 0, %s64
    %s67 = sphi 0, %s66
    %s81 = sphi 0, %s67
    %s87 = sphi 0, %s89
    %s90 = sphi 0, %s87
    %s91 = sphi 0, %s90
    %s107 = sphi 0, %s91
  $region4: #{content_encoder_forward.8} parent=0 // loop_header_branch
    %12 = sbr.rel (%p10) target = $region8
  $region5: #{content_encoder_forward.8} parent=0 // loop_body
    %s14 = ssub.s32 %s9, 1
    %s15 = ssub.s32 %s9, 2
    %s16 = sadd.s32 %s9, 1
    %s17 = ssub.s32 %s9, %s16
    %p18 = scmp.eq.s32.totalorder %s17, 0
    %s20 = sadd.s32 %s19, 1
    %s21 = scalar_select %p18, %s19, %s20
    %p24 = pneg %p18
    %p25 = scmp.eq.s32.totalorder %s9, 1
    %p26 = por %p24, %p25
    %p27 = scmp.ne.s32.totalorder %s19, %s22
    %p28 = scmp.eq.s32.totalorder %s9, 0
    %p29 = por %p27, %p28
    %p30 = scmp.ne.s32.totalorder %s19, %s22
    %p31 = scmp.eq.s32.totalorder %s14, 1
    %p32 = por %p30, %p31
    %p33 = scmp.ne.s32.totalorder %s22, %s23
    %p34 = scmp.eq.s32.totalorder %s14, 0
    %p35 = por %p33, %p34
    %p36 = scmp.ne.s32.totalorder %s22, %s23
    %p37 = scmp.eq.s32.totalorder %s15, 1
    %p38 = por %p36, %p37
    %p40 = scmp.ne.s32.totalorder %s23, %s39
    %p41 = scmp.eq.s32.totalorder %s15, 0
    %p42 = por %p40, %p41
    %s44 = sadd.s32 %s43, 1
    %p47 = scmp.eq.s32.totalorder %s9, 1
    %p48 = scmp.ne.s32.totalorder %s43, %s45
    %p49 = scmp.eq.s32.totalorder %s9, 0
    %p50 = por %p48, %p49
    %p51 = scmp.ne.s32.totalorder %s43, %s45
    %p52 = scmp.eq.s32.totalorder %s14, 1
    %p53 = por %p51, %p52
    %p54 = scmp.ne.s32.totalorder %s45, %s46
    %p55 = scmp.eq.s32.totalorder %s14, 0
    %p56 = por %p54, %p55
    %p57 = scmp.ne.s32.totalorder %s45, %s46
    %p58 = scmp.eq.s32.totalorder %s15, 1
    %p59 = por %p57, %p58
    %p61 = scmp.ne.s32.totalorder %s46, %s60
    %p62 = scmp.eq.s32.totalorder %s15, 0
    %p63 = por %p61, %p62
    %s65 = sadd.s32 %s64, 1
    %p68 = scmp.eq.s32.totalorder %s9, 1
    %p69 = scmp.ne.s32.totalorder %s64, %s66
    %p70 = scmp.eq.s32.totalorder %s9, 0
    %p71 = por %p69, %p70
    %p72 = scmp.ne.s32.totalorder %s64, %s66
    %p73 = scmp.eq.s32.totalorder %s14, 1
    %p74 = por %p72, %p73
    %p75 = scmp.ne.s32.totalorder %s66, %s67
    %p76 = scmp.eq.s32.totalorder %s14, 0
    %p77 = por %p75, %p76
    %p78 = scmp.ne.s32.totalorder %s66, %s67
    %p79 = scmp.eq.s32.totalorder %s15, 1
    %p80 = por %p78, %p79
    %p82 = scmp.ne.s32.totalorder %s67, %s81
    %p83 = scmp.eq.s32.totalorder %s15, 0
    %p84 = por %p82, %p83
    %s85 = ssub.s32 %s9, %s16
    %p86 = scmp.eq.s32.totalorder %s85, 0
    %s88 = sadd.s32 %s87, 1
    %s89 = scalar_select %p86, %s87, %s88
    %p92 = pneg %p86
    %p93 = scmp.eq.s32.totalorder %s9, 1
    %p94 = por %p92, %p93
    %p95 = scmp.ne.s32.totalorder %s87, %s90
    %p96 = scmp.eq.s32.totalorder %s9, 0
    %p97 = por %p95, %p96
    %p98 = scmp.ne.s32.totalorder %s87, %s90
    %p99 = scmp.eq.s32.totalorder %s14, 1
    %p100 = por %p98, %p99
    %p101 = scmp.ne.s32.totalorder %s90, %s91
    %p102 = scmp.eq.s32.totalorder %s14, 0
    %p103 = por %p101, %p102
    %p104 = scmp.ne.s32.totalorder %s90, %s91
    %p105 = scmp.eq.s32.totalorder %s15, 1
    %p106 = por %p104, %p105
    %p108 = scmp.ne.s32.totalorder %s91, %s107
    %p109 = scmp.eq.s32.totalorder %s15, 0
    %p110 = por %p108, %p109
    %p111 = scmp.le.s32.totalorder 1, %s9
    %p112 = scmp.lt.s32.totalorder %s9, 3
    %p113 = pnand %p111, %p112
    %p114 = pneg %p113
    // Predicated region
    $region9: #{content_encoder_forward.8} parent=5 // pred_check
      _
    $region10: #{content_encoder_forward.8} parent=5 // pred_check_branch
      %116 = sbr.rel (%p113) target = $region12
    $region11: #{content_encoder_forward.8} parent=5 // pred_region
      %s117 = ssub.s32 %s9, 1
      // Predicated region
      $region13: #{content_encoder_forward.8} parent=11 // pred_check
        %p118 = pneg %p56
      $region14: #{content_encoder_forward.8} parent=11 // pred_check_branch
        %120 = sbr.rel (%p118) target = $region16
      $region15: #{content_encoder_forward.8} parent=11 // pred_region
        _
      $region16: #{content_encoder_forward.8} parent=11 // pred_fallthru
        _
      // Predicated region
      $region17: #{content_encoder_forward.8} parent=11 // pred_check
        %p121 = pneg %p77
      $region18: #{content_encoder_forward.8} parent=11 // pred_check_branch
        %123 = sbr.rel (%p121) target = $region20
      $region19: #{content_encoder_forward.8} parent=11 // pred_region
        _
      $region20: #{content_encoder_forward.8} parent=11 // pred_fallthru
        _
    $region12: #{content_encoder_forward.8} parent=5 // pred_fallthru
      _
    %p124 = scmp.lt.s32.totalorder %s9, 2
    // Predicated region
    $region21: #{content_encoder_forward.8} parent=5 // pred_check
      %p125 = pneg %p124
    $region22: #{content_encoder_forward.8} parent=5 // pred_check_branch
      %127 = sbr.rel (%p125) target = $region24
    $region23: #{content_encoder_forward.8} parent=5 // pred_region
      // Predicated region
      $region25: #{content_encoder_forward.8} parent=23 // pred_check
        %p128 = pneg %p29
      $region26: #{content_encoder_forward.8} parent=23 // pred_check_branch
        %130 = sbr.rel (%p128) target = $region28
      $region27: #{content_encoder_forward.8} parent=23 // pred_region
        %p131 = scmp.lt.s32.totalorder %s9, 1
        %s132 = scalar_select %p131, %s9, 1
        %s133 = smul.addr %s132, 16
        %s134 = smul.addr %s133, 4
        %s135 = scalar_lea.vmem %s0, %s134
      $region28: #{content_encoder_forward.8} parent=23 // pred_fallthru
        _
    $region24: #{content_encoder_forward.8} parent=5 // pred_fallthru
      _
    %p136 = scmp.le.s32.totalorder 1, %s9
    %p137 = scmp.lt.s32.totalorder %s9, 3
    %p138 = pnand %p136, %p137
    %p139 = pneg %p138
    // Predicated region
    $region29: #{content_encoder_forward.8} parent=5 // pred_check
      _
    $region30: #{content_encoder_forward.8} parent=5 // pred_check_branch
      %141 = sbr.rel (%p138) target = $region32
    $region31: #{content_encoder_forward.8} parent=5 // pred_region
      %s142 = ssub.s32 %s9, 1
      %p143 = scmp.lt.s32.totalorder %s14, 1
      %s144 = scalar_select %p143, %s14, 1
      %s145 = smul.addr %s144, 16
      %s146 = smul.addr %s145, 4
      %s147 = scalar_lea.vmem %s0, %s146
      %p148 = pneg %p35
      %p149 = pneg %p32
      %p150 = pneg %p56
      %p151 = pneg %p53
      %p152 = pneg %p77
      %p153 = pneg %p74
      %p154 = pneg %p103
      %p155 = pneg %p100
      %p156 = scmp.lt.s32.totalorder %s14, 1
      %s157 = scalar_select %p156, %s14, 1
      %s158 = smul.addr %s157, 8
      %s159 = smul.addr %s158, 8
      %s160 = scalar_lea.vmem %s3, %s159
      %p161 = scmp.lt.s32.totalorder %s14, 1
      %s162 = scalar_select %p161, %s14, 1
      %s163 = smul.addr %s162, 16
      %s164 = smul.addr %s163, 4
      %s165 = scalar_lea.vmem %s0, %s164
      %p166 = scmp.lt.s32.totalorder %s14, 1
      %s167 = scalar_select %p166, %s14, 1
      %s168 = smul.addr %s167, 8
      %s169 = smul.addr %s168, 8
      %s170 = scalar_lea.vmem %s3, %s169
      %v172 = vld [vmem:[%s165] sm:$0xff]
      %v173 = vld [vmem:[%s165 + $0x8] sm:$0xff]
      %v174 = vld [vmem:[%s165 + $0x10] sm:$0xff]
      %v175 = vld [vmem:[%s165 + $0x18] sm:$0xff]
      %v176 = vld [vmem:[%s165 + $0x20] sm:$0xff]
      %v177 = vld [vmem:[%s165 + $0x28] sm:$0xff]
      %v178 = vld [vmem:[%s165 + $0x30] sm:$0xff]
      %v179 = vld [vmem:[%s165 + $0x38] sm:$0xff]
      %v180 = vld [vmem:[%s1] sm:$0xf]
      %v181 = vld [vmem:[%s1 + $0x4] sm:$0xf]
      %v182 = vld [vmem:[%s1 + $0x8] sm:$0xf]
      %v183 = vld [vmem:[%s1 + $0xc] sm:$0xf]
      %v184 = vld [vmem:[%s1 + $0x10] sm:$0xf]
      %v185 = vld [vmem:[%s1 + $0x14] sm:$0xf]
      %v186 = vld [vmem:[%s1 + $0x18] sm:$0xf]
      %v187 = vld [vmem:[%s1 + $0x1c] sm:$0xf]
      %v188 = vld [vmem:[%s1 + $0x20] sm:$0xf]
      %v189 = vld [vmem:[%s1 + $0x24] sm:$0xf]
      %v190 = vld [vmem:[%s1 + $0x28] sm:$0xf]
      %v191 = vld [vmem:[%s1 + $0x2c] sm:$0xf]
      %v192 = vld [vmem:[%s1 + $0x30] sm:$0xf]
      %v193 = vld [vmem:[%s1 + $0x34] sm:$0xf]
      %v194 = vld [vmem:[%s1 + $0x38] sm:$0xf]
      %v195 = vld [vmem:[%s1 + $0x3c] sm:$0xf]
      %v196 = vld [vmem:[%s1 + $0x40] sm:$0xf]
      %v197 = vld [vmem:[%s1 + $0x44] sm:$0xf]
      %v198 = vld [vmem:[%s1 + $0x48] sm:$0xf]
      %v199 = vld [vmem:[%s1 + $0x4c] sm:$0xf]
      %v200 = vld [vmem:[%s1 + $0x50] sm:$0xf]
      %v201 = vld [vmem:[%s1 + $0x54] sm:$0xf]
      %v202 = vld [vmem:[%s1 + $0x58] sm:$0xf]
      %v203 = vld [vmem:[%s1 + $0x5c] sm:$0xf]
      %v204 = vld [vmem:[%s1 + $0x60] sm:$0xf]
      %v205 = vld [vmem:[%s1 + $0x64] sm:$0xf]
      %v206 = vld [vmem:[%s1 + $0x68] sm:$0xf]
      %v207 = vld [vmem:[%s1 + $0x6c] sm:$0xf]
      %v208 = vld [vmem:[%s1 + $0x70] sm:$0xf]
      %v209 = vld [vmem:[%s1 + $0x74] sm:$0xf]
      %v210 = vld [vmem:[%s1 + $0x78] sm:$0xf]
      %v211 = vld [vmem:[%s1 + $0x7c] sm:$0xf]
      %v212 = vld [vmem:[%s2] sm:$0x1]
      %v214 = vlaneseq
      %v215 = vshrl.u32 %v214, 7
      %v216 = vsub.s32 0, %v215
      %v217 = vrot.slane %v212, %v216
      %v227 = vunpack.c.l.b16 %v172
      %v228 = vunpack.c.h.b16 %v172
      %v229 = vunpack.c.l.b16 %v173
      %v230 = vunpack.c.h.b16 %v173
      %v231 = vunpack.c.l.b16 %v174
      %v232 = vunpack.c.h.b16 %v174
      %v233 = vunpack.c.l.b16 %v175
      %v234 = vunpack.c.h.b16 %v175
      %v235 = vunpack.c.l.b16 %v176
      %v236 = vunpack.c.h.b16 %v176
      %v237 = vunpack.c.l.b16 %v177
      %v238 = vunpack.c.h.b16 %v177
      %v239 = vunpack.c.l.b16 %v178
      %v240 = vunpack.c.h.b16 %v178
      %v241 = vunpack.c.l.b16 %v179
      %v242 = vunpack.c.h.b16 %v179
      %v243 = vpack.c.b16 %v229, %v227
      %v244 = vpack.c.b16 %v230, %v228
      %v245 = vpack.c.b16 %v233, %v231
      %v246 = vpack.c.b16 %v234, %v232
      %v247 = vpack.c.b16 %v237, %v235
      %v248 = vpack.c.b16 %v238, %v236
      %v249 = vpack.c.b16 %v241, %v239
      %v250 = vpack.c.b16 %v242, %v240
      %v291 = vunpack.c.l.b16 %v180
      %v292 = vunpack.c.l.b16 %v181
      %v293 = vunpack.c.l.b16 %v182
      %v294 = vunpack.c.l.b16 %v183
      %v295 = vunpack.c.l.b16 %v184
      %v296 = vunpack.c.l.b16 %v185
      %v297 = vunpack.c.l.b16 %v186
      %v298 = vunpack.c.l.b16 %v187
      %v299 = vunpack.c.l.b16 %v188
      %v300 = vunpack.c.l.b16 %v189
      %v301 = vunpack.c.l.b16 %v190
      %v302 = vunpack.c.l.b16 %v191
      %v303 = vunpack.c.l.b16 %v192
      %v304 = vunpack.c.l.b16 %v193
      %v305 = vunpack.c.l.b16 %v194
      %v306 = vunpack.c.l.b16 %v195
      %v307 = vunpack.c.l.b16 %v196
      %v308 = vunpack.c.l.b16 %v197
      %v309 = vunpack.c.l.b16 %v198
      %v310 = vunpack.c.l.b16 %v199
      %v311 = vunpack.c.l.b16 %v200
      %v312 = vunpack.c.l.b16 %v201
      %v313 = vunpack.c.l.b16 %v202
      %v314 = vunpack.c.l.b16 %v203
      %v315 = vunpack.c.l.b16 %v204
      %v316 = vunpack.c.l.b16 %v205
      %v317 = vunpack.c.l.b16 %v206
      %v318 = vunpack.c.l.b16 %v207
      %v319 = vunpack.c.l.b16 %v208
      %v320 = vunpack.c.l.b16 %v209
      %v321 = vunpack.c.l.b16 %v210
      %v322 = vunpack.c.l.b16 %v211
      %v323 = vpack.c.b16 %v292, %v291
      %v324 = vpack.c.b16 %v294, %v293
      %v325 = vpack.c.b16 %v296, %v295
      %v326 = vpack.c.b16 %v298, %v297
      %v327 = vpack.c.b16 %v300, %v299
      %v328 = vpack.c.b16 %v302, %v301
      %v329 = vpack.c.b16 %v304, %v303
      %v330 = vpack.c.b16 %v306, %v305
      %v331 = vpack.c.b16 %v308, %v307
      %v332 = vpack.c.b16 %v310, %v309
      %v333 = vpack.c.b16 %v312, %v311
      %v334 = vpack.c.b16 %v314, %v313
      %v335 = vpack.c.b16 %v316, %v315
      %v336 = vpack.c.b16 %v318, %v317
      %v337 = vpack.c.b16 %v320, %v319
      %v338 = vpack.c.b16 %v322, %v321
      %355 = vmatprep.subr.bf16.mxu0 0
      %356 = vmatpush1.bf16.msra.mxu0 %v330
      %357 = vmatprep.subr.bf16.mxu0 0
      %358 = vmatpush1.bf16.msra.mxu0 %v329
      %359 = vmatprep.subr.bf16.mxu0 0
      %360 = vmatpush1.bf16.msra.mxu0 %v328
      %361 = vmatprep.subr.bf16.mxu0 0
      %362 = vmatpush1.bf16.msra.mxu0 %v327
      %363 = vmatprep.subr.bf16.mxu0 0
      %364 = vmatpush1.bf16.msra.mxu0 %v326
      %365 = vmatprep.subr.bf16.mxu0 0
      %366 = vmatpush1.bf16.msra.mxu0 %v325
      %367 = vmatprep.subr.bf16.mxu0 0
      %368 = vmatpush1.bf16.msra.mxu0 %v324
      %369 = vmatprep.subr.bf16.mxu0 0
      %370 = vmatpush1.bf16.msra.mxu0 %v323
      %371 = vmatprep.subr.bf16.mxu0 0
      %372 = vmatpush2.bf16.msra.mxu0 %v338
      %373 = vmatprep.subr.bf16.mxu0 0
      %374 = vmatpush2.bf16.msra.mxu0 %v337
      %375 = vmatprep.subr.bf16.mxu0 0
      %376 = vmatpush2.bf16.msra.mxu0 %v336
      %377 = vmatprep.subr.bf16.mxu0 0
      %378 = vmatpush2.bf16.msra.mxu0 %v335
      %379 = vmatprep.subr.bf16.mxu0 0
      %380 = vmatpush2.bf16.msra.mxu0 %v334
      %381 = vmatprep.subr.bf16.mxu0 0
      %382 = vmatpush2.bf16.msra.mxu0 %v333
      %383 = vmatprep.subr.bf16.mxu0 0
      %384 = vmatpush2.bf16.msra.mxu0 %v332
      %385 = vmatprep.subr.bf16.mxu0 0
      %386 = vmatpush2.bf16.msra.mxu0 %v331
      %387 = vmatprep.mubr.bf16.mxu0 %v244
      %388 = vmatmul.mubr.bf16.gmra.mxu0 %v243
      %v389 = vpop.f32.mrf.mxu0
      %v390 = vadd.f32 %v217, %v389
      %v391 = vpop.f32.mrf.mxu0
      %v392 = vpop.f32.mrf.mxu0
      %v393 = vadd.f32 %v217, %v392
      %v394 = vpop.f32.mrf.mxu0
      %395 = vmatprep.mubr.bf16.mxu0 %v246
      %396 = vmatmul.mubr.bf16.gmra.mxu0 %v245
      %v397 = vpop.f32.mrf.mxu0
      %v398 = vadd.f32 %v217, %v397
      %v399 = vpop.f32.mrf.mxu0
      %v400 = vpop.f32.mrf.mxu0
      %v401 = vadd.f32 %v217, %v400
      %v402 = vpop.f32.mrf.mxu0
      %403 = vmatprep.mubr.bf16.mxu0 %v248
      %404 = vmatmul.mubr.bf16.gmra.mxu0 %v247
      %v405 = vpop.f32.mrf.mxu0
      %v406 = vadd.f32 %v217, %v405
      %v407 = vpop.f32.mrf.mxu0
      %v408 = vpop.f32.mrf.mxu0
      %v409 = vadd.f32 %v217, %v408
      %v410 = vpop.f32.mrf.mxu0
      %411 = vmatprep.mubr.bf16.mxu0 %v250
      %412 = vmatmul.mubr.bf16.gmra.mxu0 %v249
      %v413 = vpop.f32.mrf.mxu0
      %v414 = vadd.f32 %v217, %v413
      %v415 = vpop.f32.mrf.mxu0
      %v416 = vpop.f32.mrf.mxu0
      %v417 = vadd.f32 %v217, %v416
      %v418 = vpop.f32.mrf.mxu0
      %419 = vdwg.mxu0
      %v420 = vadd.f32 %v390, %v393
      %v421 = vadd.f32 %v420, %v398
      %v422 = vadd.f32 %v421, %v401
      %v423 = vadd.f32 %v422, %v406
      %v424 = vadd.f32 %v423, %v409
      %v425 = vadd.f32 %v424, %v414
      %v426 = vadd.f32 %v425, %v417
      %v427 = vrot.slane %v426, 4
      %v428 = vadd.f32 %v426, %v427
      %v429 = vrot.slane %v428, 2
      %v430 = vadd.f32 %v428, %v429
      %v431 = vrot.slane %v430, 1
      %v432 = vadd.f32 %v430, %v431
      %v433 = vrcp.pop 64.0
      %v434 = vmul.f32 %v432, %v433
      %v435 = vmul.f32 %v390, %v390
      %v436 = vmul.f32 %v393, %v393
      %v437 = vmul.f32 %v398, %v398
      %v438 = vmul.f32 %v401, %v401
      %v439 = vmul.f32 %v406, %v406
      %v440 = vmul.f32 %v409, %v409
      %v441 = vmul.f32 %v414, %v414
      %v442 = vmul.f32 %v417, %v417
      %v443 = vadd.f32 %v435, %v436
      %v444 = vadd.f32 %v443, %v437
      %v445 = vadd.f32 %v444, %v438
      %v446 = vadd.f32 %v445, %v439
      %v447 = vadd.f32 %v446, %v440
      %v448 = vadd.f32 %v447, %v441
      %v449 = vadd.f32 %v448, %v442
      %v450 = vrot.slane %v449, 4
      %v451 = vadd.f32 %v449, %v450
      %v452 = vrot.slane %v451, 2
      %v453 = vadd.f32 %v451, %v452
      %v454 = vrot.slane %v453, 1
      %v455 = vadd.f32 %v453, %v454
      %v456 = vmul.f32 %v455, %v433
      %v457 = vmul.f32 %v434, %v434
      %v458 = vsub.f32 %v456, %v457
      %v459 = vmax.f32 %v458, 0.0
      %v460 = vsub.f32 %v390, %v434
      %v461 = vsub.f32 %v393, %v434
      %v462 = vsub.f32 %v398, %v434
      %v463 = vsub.f32 %v401, %v434
      %v464 = vsub.f32 %v406, %v434
      %v465 = vsub.f32 %v409, %v434
      %v466 = vsub.f32 %v414, %v434
      %v467 = vsub.f32 %v417, %v434
      %v468 = vadd.f32 %v459, 1e-05
      %v469 = vrsqrt.pop %v468
      %v470 = vmul.f32 %v460, %v469
      %v471 = vmul.f32 %v461, %v469
      %v472 = vmul.f32 %v462, %v469
      %v473 = vmul.f32 %v463, %v469
      %v474 = vmul.f32 %v464, %v469
      %v475 = vmul.f32 %v465, %v469
      %v476 = vmul.f32 %v466, %v469
      %v477 = vmul.f32 %v467, %v469
      %v478 = vmax.f32 %v470, 0.0
      %v479 = vmax.f32 %v471, 0.0
      %v480 = vmax.f32 %v472, 0.0
      %v481 = vmax.f32 %v473, 0.0
      %v482 = vmax.f32 %v474, 0.0
      %v483 = vmax.f32 %v475, 0.0
      %v484 = vmax.f32 %v476, 0.0
      %v485 = vmax.f32 %v477, 0.0
      %486 = vst [vmem:[%s170] sm:$0xff] %v478
      %487 = vst [vmem:[%s170 + $0x8] sm:$0xff] %v479
      %488 = vst [vmem:[%s170 + $0x10] sm:$0xff] %v480
      %489 = vst [vmem:[%s170 + $0x18] sm:$0xff] %v481
      %490 = vst [vmem:[%s170 + $0x20] sm:$0xff] %v482
      %491 = vst [vmem:[%s170 + $0x28] sm:$0xff] %v483
      %492 = vst [vmem:[%s170 + $0x30] sm:$0xff] %v484
      %493 = vst [vmem:[%s170 + $0x38] sm:$0xff] %v485
      %p494 = scmp.lt.s32.totalorder %s14, 1
      %s495 = scalar_select %p494, %s14, 1
      %s496 = smul.addr %s495, 8
      %s497 = smul.addr %s496, 8
      %s498 = scalar_lea.vmem %s3, %s497
      // Predicated region
      $region33: #{content_encoder_forward.8} parent=31 // pred_check
        %p499 = pneg %p100
      $region34: #{content_encoder_forward.8} parent=31 // pred_check_branch
        %501 = sbr.rel (%p499) target = $region36
      $region35: #{content_encoder_forward.8} parent=31 // pred_region
        _
      $region36: #{content_encoder_forward.8} parent=31 // pred_fallthru
        _
    $region32: #{content_encoder_forward.8} parent=5 // pred_fallthru
      _
    %p502 = scmp.le.s32.totalorder 2, %s9
    // Predicated region
    $region37: #{content_encoder_forward.8} parent=5 // pred_check
      %p503 = pneg %p502
    $region38: #{content_encoder_forward.8} parent=5 // pred_check_branch
      %505 = sbr.rel (%p503) target = $region40
    $region39: #{content_encoder_forward.8} parent=5 // pred_region
      %s506 = ssub.s32 %s9, 2
      // Predicated region
      $region41: #{content_encoder_forward.8} parent=39 // pred_check
        %p507 = pneg %p106
      $region42: #{content_encoder_forward.8} parent=39 // pred_check_branch
        %509 = sbr.rel (%p507) target = $region44
      $region43: #{content_encoder_forward.8} parent=39 // pred_region
        %p510 = scmp.lt.s32.totalorder %s15, 1
        %s511 = scalar_select %p510, %s15, 1
        %s512 = smul.addr %s511, 8
        %s513 = smul.addr %s512, 8
        %s514 = scalar_lea.vmem %s3, %s513
      $region44: #{content_encoder_forward.8} parent=39 // pred_fallthru
        _
    $region40: #{content_encoder_forward.8} parent=5 // pred_fallthru
      _
  $region6: #{content_encoder_forward.8} parent=0 // loop_footer
    %s13 = sadd.s32 1, %s9
  $region7: #{content_encoder_forward.8} parent=0 // loop_footer_branch
    %8 = sbr.rel target = $region3
  $region8: #{content_encoder_forward.8} parent=0 // loop_exit
    _

// kernel: content_encoder_forward.9
$region0: #{content_encoder_forward.9}
  #allocation0 [shape = 'u32[]', space=smem, size = 0x4, offset = 0x4, fixed_abs, tag = 'smem constant byte address 0x4 - core index']
  #allocation1 [shape = 'u32[144,128]{1,0:T(1,128)}', space=vmem, size = 0x12000, scoped, tag = 'internal scratch']
  %s0 = inlined_call_operand.vmem [shape: bf16[2,16,512], index: 0, kind: input, shape index: {}]
  %s1 = inlined_call_operand.vmem [shape: bf16[512,128], index: 1, kind: input, shape index: {}]
  %s2 = inlined_call_operand.vmem [shape: f32[1,128], index: 2, kind: input, shape index: {}]
  %s3 = inlined_call_operand.vmem [shape: f32[2,16,128], index: 3, kind: output, shape index: {}]
  %s4 = sld [smem:[#allocation0]]
  $region45: #{content_encoder_forward.9} parent=0
    _
  %s6 = ssub.s32 1, %s4
  %s7 = scalar_select 0, %s6, %s4
  loop: start=0, step=1, limit=4
  $region2: #{content_encoder_forward.9} parent=0 // loop_pre_header
    _
  $region3: #{content_encoder_forward.9} parent=0 // loop_header
    %s9 = sphi 0, %s13
    %p10 = scmp.ge.s32.totalorder %s9, 4
    %s19 = sphi 0, %s21
    %s22 = sphi 0, %s19
    %s23 = sphi 0, %s22
    %s39 = sphi 0, %s23
    %s43 = sphi 0, %s43
    %s45 = sphi 0, %s43
    %s46 = sphi 0, %s45
    %s60 = sphi 0, %s46
    %s64 = sphi 0, %s64
    %s66 = sphi 0, %s64
    %s67 = sphi 0, %s66
    %s81 = sphi 0, %s67
    %s87 = sphi 0, %s89
    %s90 = sphi 0, %s87
    %s91 = sphi 0, %s90
    %s107 = sphi 0, %s91
  $region4: #{content_encoder_forward.9} parent=0 // loop_header_branch
    %12 = sbr.rel (%p10) target = $region8
  $region5: #{content_encoder_forward.9} parent=0 // loop_body
    %s14 = ssub.s32 %s9, 1
    %s15 = ssub.s32 %s9, 2
    %s16 = sadd.s32 %s9, 1
    %s17 = ssub.s32 %s9, %s16
    %p18 = scmp.eq.s32.totalorder %s17, 0
    %s20 = sadd.s32 %s19, 1
    %s21 = scalar_select %p18, %s19, %s20
    %p24 = pneg %p18
    %p25 = scmp.eq.s32.totalorder %s9, 1
    %p26 = por %p24, %p25
    %p27 = scmp.ne.s32.totalorder %s19, %s22
    %p28 = scmp.eq.s32.totalorder %s9, 0
    %p29 = por %p27, %p28
    %p30 = scmp.ne.s32.totalorder %s19, %s22
    %p31 = scmp.eq.s32.totalorder %s14, 1
    %p32 = por %p30, %p31
    %p33 = scmp.ne.s32.totalorder %s22, %s23
    %p34 = scmp.eq.s32.totalorder %s14, 0
    %p35 = por %p33, %p34
    %p36 = scmp.ne.s32.totalorder %s22, %s23
    %p37 = scmp.eq.s32.totalorder %s15, 1
    %p38 = por %p36, %p37
    %p40 = scmp.ne.s32.totalorder %s23, %s39
    %p41 = scmp.eq.s32.totalorder %s15, 0
    %p42 = por %p40, %p41
    %s44 = sadd.s32 %s43, 1
    %p47 = scmp.eq.s32.totalorder %s9, 1
    %p48 = scmp.ne.s32.totalorder %s43, %s45
    %p49 = scmp.eq.s32.totalorder %s9, 0
    %p50 = por %p48, %p49
    %p51 = scmp.ne.s32.totalorder %s43, %s45
    %p52 = scmp.eq.s32.totalorder %s14, 1
    %p53 = por %p51, %p52
    %p54 = scmp.ne.s32.totalorder %s45, %s46
    %p55 = scmp.eq.s32.totalorder %s14, 0
    %p56 = por %p54, %p55
    %p57 = scmp.ne.s32.totalorder %s45, %s46
    %p58 = scmp.eq.s32.totalorder %s15, 1
    %p59 = por %p57, %p58
    %p61 = scmp.ne.s32.totalorder %s46, %s60
    %p62 = scmp.eq.s32.totalorder %s15, 0
    %p63 = por %p61, %p62
    %s65 = sadd.s32 %s64, 1
    %p68 = scmp.eq.s32.totalorder %s9, 1
    %p69 = scmp.ne.s32.totalorder %s64, %s66
    %p70 = scmp.eq.s32.totalorder %s9, 0
    %p71 = por %p69, %p70
    %p72 = scmp.ne.s32.totalorder %s64, %s66
    %p73 = scmp.eq.s32.totalorder %s14, 1
    %p74 = por %p72, %p73
    %p75 = scmp.ne.s32.totalorder %s66, %s67
    %p76 = scmp.eq.s32.totalorder %s14, 0
    %p77 = por %p75, %p76
    %p78 = scmp.ne.s32.totalorder %s66, %s67
    %p79 = scmp.eq.s32.totalorder %s15, 1
    %p80 = por %p78, %p79
    %p82 = scmp.ne.s32.totalorder %s67, %s81
    %p83 = scmp.eq.s32.totalorder %s15, 0
    %p84 = por %p82, %p83
    %s85 = ssub.s32 %s9, %s16
    %p86 = scmp.eq.s32.totalorder %s85, 0
    %s88 = sadd.s32 %s87, 1
    %s89 = scalar_select %p86, %s87, %s88
    %p92 = pneg %p86
    %p93 = scmp.eq.s32.totalorder %s9, 1
    %p94 = por %p92, %p93
    %p95 = scmp.ne.s32.totalorder %s87, %s90
    %p96 = scmp.eq.s32.totalorder %s9, 0
    %p97 = por %p95, %p96
    %p98 = scmp.ne.s32.totalorder %s87, %s90
    %p99 = scmp.eq.s32.totalorder %s14, 1
    %p100 = por %p98, %p99
    %p101 = scmp.ne.s32.totalorder %s90, %s91
    %p102 = scmp.eq.s32.totalorder %s14, 0
    %p103 = por %p101, %p102
    %p104 = scmp.ne.s32.totalorder %s90, %s91
    %p105 = scmp.eq.s32.totalorder %s15, 1
    %p106 = por %p104, %p105
    %p108 = scmp.ne.s32.totalorder %s91, %s107
    %p109 = scmp.eq.s32.totalorder %s15, 0
    %p110 = por %p108, %p109
    %p111 = scmp.le.s32.totalorder 1, %s9
    %p112 = scmp.lt.s32.totalorder %s9, 3
    %p113 = pnand %p111, %p112
    %p114 = pneg %p113
    // Predicated region
    $region9: #{content_encoder_forward.9} parent=5 // pred_check
      _
    $region10: #{content_encoder_forward.9} parent=5 // pred_check_branch
      %116 = sbr.rel (%p113) target = $region12
    $region11: #{content_encoder_forward.9} parent=5 // pred_region
      %s117 = ssub.s32 %s9, 1
      // Predicated region
      $region13: #{content_encoder_forward.9} parent=11 // pred_check
        %p118 = pneg %p56
      $region14: #{content_encoder_forward.9} parent=11 // pred_check_branch
        %120 = sbr.rel (%p118) target = $region16
      $region15: #{content_encoder_forward.9} parent=11 // pred_region
        _
      $region16: #{content_encoder_forward.9} parent=11 // pred_fallthru
        _
      // Predicated region
      $region17: #{content_encoder_forward.9} parent=11 // pred_check
        %p121 = pneg %p77
      $region18: #{content_encoder_forward.9} parent=11 // pred_check_branch
        %123 = sbr.rel (%p121) target = $region20
      $region19: #{content_encoder_forward.9} parent=11 // pred_region
        _
      $region20: #{content_encoder_forward.9} parent=11 // pred_fallthru
        _
    $region12: #{content_encoder_forward.9} parent=5 // pred_fallthru
      _
    %p124 = scmp.lt.s32.totalorder %s9, 2
    // Predicated region
    $region21: #{content_encoder_forward.9} parent=5 // pred_check
      %p125 = pneg %p124
    $region22: #{content_encoder_forward.9} parent=5 // pred_check_branch
      %127 = sbr.rel (%p125) target = $region24
    $region23: #{content_encoder_forward.9} parent=5 // pred_region
      // Predicated region
      $region25: #{content_encoder_forward.9} parent=23 // pred_check
        %p128 = pneg %p29
      $region26: #{content_encoder_forward.9} parent=23 // pred_check_branch
        %130 = sbr.rel (%p128) target = $region28
      $region27: #{content_encoder_forward.9} parent=23 // pred_region
        %p131 = scmp.lt.s32.totalorder %s9, 1
        %s132 = scalar_select %p131, %s9, 1
        %s133 = smul.addr %s132, 8
        %s134 = smul.addr %s133, 4
        %s135 = scalar_lea.vmem %s0, %s134
      $region28: #{content_encoder_forward.9} parent=23 // pred_fallthru
        _
    $region24: #{content_encoder_forward.9} parent=5 // pred_fallthru
      _
    %p136 = scmp.le.s32.totalorder 1, %s9
    %p137 = scmp.lt.s32.totalorder %s9, 3
    %p138 = pnand %p136, %p137
    %p139 = pneg %p138
    // Predicated region
    $region29: #{content_encoder_forward.9} parent=5 // pred_check
      _
    $region30: #{content_encoder_forward.9} parent=5 // pred_check_branch
      %141 = sbr.rel (%p138) target = $region32
    $region31: #{content_encoder_forward.9} parent=5 // pred_region
      %s142 = ssub.s32 %s9, 1
      %p143 = scmp.lt.s32.totalorder %s14, 1
      %s144 = scalar_select %p143, %s14, 1
      %s145 = smul.addr %s144, 8
      %s146 = smul.addr %s145, 4
      %s147 = scalar_lea.vmem %s0, %s146
      %p148 = pneg %p35
      %p149 = pneg %p32
      %p150 = pneg %p56
      %p151 = pneg %p53
      %p152 = pneg %p77
      %p153 = pneg %p74
      %p154 = pneg %p103
      %p155 = pneg %p100
      %p156 = scmp.lt.s32.totalorder %s14, 1
      %s157 = scalar_select %p156, %s14, 1
      %s158 = smul.addr %s157, 2
      %s159 = smul.addr %s158, 8
      %s160 = scalar_lea.vmem %s3, %s159
      %p161 = scmp.lt.s32.totalorder %s14, 1
      %s162 = scalar_select %p161, %s14, 1
      %s163 = smul.addr %s162, 8
      %s164 = smul.addr %s163, 4
      %s165 = scalar_lea.vmem %s0, %s164
      %p166 = scmp.lt.s32.totalorder %s14, 1
      %s167 = scalar_select %p166, %s14, 1
      %s168 = smul.addr %s167, 2
      %s169 = smul.addr %s168, 8
      %s170 = scalar_lea.vmem %s3, %s169
      %v172 = vld [vmem:[%s165] sm:$0xff]
      %v173 = vld [vmem:[%s165 + $0x8] sm:$0xff]
      %v174 = vld [vmem:[%s165 + $0x10] sm:$0xff]
      %v175 = vld [vmem:[%s165 + $0x18] sm:$0xff]
      %v176 = vld [vmem:[%s1] sm:$0xf]
      %v177 = vld [vmem:[%s1 + $0x4] sm:$0xf]
      %v178 = vld [vmem:[%s1 + $0x8] sm:$0xf]
      %v179 = vld [vmem:[%s1 + $0xc] sm:$0xf]
      %v180 = vld [vmem:[%s1 + $0x10] sm:$0xf]
      %v181 = vld [vmem:[%s1 + $0x14] sm:$0xf]
      %v182 = vld [vmem:[%s1 + $0x18] sm:$0xf]
      %v183 = vld [vmem:[%s1 + $0x1c] sm:$0xf]
      %v184 = vld [vmem:[%s1 + $0x20] sm:$0xf]
      %v185 = vld [vmem:[%s1 + $0x24] sm:$0xf]
      %v186 = vld [vmem:[%s1 + $0x28] sm:$0xf]
      %v187 = vld [vmem:[%s1 + $0x2c] sm:$0xf]
      %v188 = vld [vmem:[%s1 + $0x30] sm:$0xf]
      %v189 = vld [vmem:[%s1 + $0x34] sm:$0xf]
      %v190 = vld [vmem:[%s1 + $0x38] sm:$0xf]
      %v191 = vld [vmem:[%s1 + $0x3c] sm:$0xf]
      %v192 = vld [vmem:[%s1 + $0x40] sm:$0xf]
      %v193 = vld [vmem:[%s1 + $0x44] sm:$0xf]
      %v194 = vld [vmem:[%s1 + $0x48] sm:$0xf]
      %v195 = vld [vmem:[%s1 + $0x4c] sm:$0xf]
      %v196 = vld [vmem:[%s1 + $0x50] sm:$0xf]
      %v197 = vld [vmem:[%s1 + $0x54] sm:$0xf]
      %v198 = vld [vmem:[%s1 + $0x58] sm:$0xf]
      %v199 = vld [vmem:[%s1 + $0x5c] sm:$0xf]
      %v200 = vld [vmem:[%s1 + $0x60] sm:$0xf]
      %v201 = vld [vmem:[%s1 + $0x64] sm:$0xf]
      %v202 = vld [vmem:[%s1 + $0x68] sm:$0xf]
      %v203 = vld [vmem:[%s1 + $0x6c] sm:$0xf]
      %v204 = vld [vmem:[%s1 + $0x70] sm:$0xf]
      %v205 = vld [vmem:[%s1 + $0x74] sm:$0xf]
      %v206 = vld [vmem:[%s1 + $0x78] sm:$0xf]
      %v207 = vld [vmem:[%s1 + $0x7c] sm:$0xf]
      %v208 = vld [vmem:[%s1 + $0x80] sm:$0xf]
      %v209 = vld [vmem:[%s1 + $0x84] sm:$0xf]
      %v210 = vld [vmem:[%s1 + $0x88] sm:$0xf]
      %v211 = vld [vmem:[%s1 + $0x8c] sm:$0xf]
      %v212 = vld [vmem:[%s1 + $0x90] sm:$0xf]
      %v213 = vld [vmem:[%s1 + $0x94] sm:$0xf]
      %v214 = vld [vmem:[%s1 + $0x98] sm:$0xf]
      %v215 = vld [vmem:[%s1 + $0x9c] sm:$0xf]
      %v216 = vld [vmem:[%s1 + $0xa0] sm:$0xf]
      %v217 = vld [vmem:[%s1 + $0xa4] sm:$0xf]
      %v218 = vld [vmem:[%s1 + $0xa8] sm:$0xf]
      %v219 = vld [vmem:[%s1 + $0xac] sm:$0xf]
      %v220 = vld [vmem:[%s1 + $0xb0] sm:$0xf]
      %v221 = vld [vmem:[%s1 + $0xb4] sm:$0xf]
      %v222 = vld [vmem:[%s1 + $0xb8] sm:$0xf]
      %v223 = vld [vmem:[%s1 + $0xbc] sm:$0xf]
      %v224 = vld [vmem:[%s1 + $0xc0] sm:$0xf]
      %v225 = vld [vmem:[%s1 + $0xc4] sm:$0xf]
      %v226 = vld [vmem:[%s1 + $0xc8] sm:$0xf]
      %v227 = vld [vmem:[%s1 + $0xcc] sm:$0xf]
      %v228 = vld [vmem:[%s1 + $0xd0] sm:$0xf]
      %v229 = vld [vmem:[%s1 + $0xd4] sm:$0xf]
      %v230 = vld [vmem:[%s1 + $0xd8] sm:$0xf]
      %v231 = vld [vmem:[%s1 + $0xdc] sm:$0xf]
      %v232 = vld [vmem:[%s1 + $0xe0] sm:$0xf]
      %v233 = vld [vmem:[%s1 + $0xe4] sm:$0xf]
      %v234 = vld [vmem:[%s1 + $0xe8] sm:$0xf]
      %v235 = vld [vmem:[%s1 + $0xec] sm:$0xf]
      %v236 = vld [vmem:[%s1 + $0xf0] sm:$0xf]
      %v237 = vld [vmem:[%s1 + $0xf4] sm:$0xf]
      %v238 = vld [vmem:[%s1 + $0xf8] sm:$0xf]
      %v239 = vld [vmem:[%s1 + $0xfc] sm:$0xf]
      %v240 = vld [vmem:[%s2] sm:$0x1]
      %v242 = vlaneseq
      %v243 = vshrl.u32 %v242, 7
      %v244 = vsub.s32 0, %v243
      %v245 = vrot.slane %v240, %v244
      %v251 = vunpack.c.l.b16 %v172
      %v252 = vunpack.c.h.b16 %v172
      %v253 = vunpack.c.l.b16 %v173
      %v254 = vunpack.c.h.b16 %v173
      %v255 = vunpack.c.l.b16 %v174
      %v256 = vunpack.c.h.b16 %v174
      %v257 = vunpack.c.l.b16 %v175
      %v258 = vunpack.c.h.b16 %v175
      %v259 = vpack.c.b16 %v255, %v251
      %v260 = vpack.c.b16 %v256, %v252
      %v261 = vpack.c.b16 %v257, %v253
      %v262 = vpack.c.b16 %v258, %v254
      %v331 = vunpack.c.l.b16 %v176
      %v332 = vunpack.c.l.b16 %v177
      %v333 = vunpack.c.l.b16 %v178
      %v334 = vunpack.c.l.b16 %v179
      %v335 = vunpack.c.l.b16 %v180
      %v336 = vunpack.c.l.b16 %v181
      %v337 = vunpack.c.l.b16 %v182
      %v338 = vunpack.c.l.b16 %v183
      %v339 = vunpack.c.l.b16 %v184
      %v340 = vunpack.c.l.b16 %v185
      %v341 = vunpack.c.l.b16 %v186
      %v342 = vunpack.c.l.b16 %v187
      %v343 = vunpack.c.l.b16 %v188
      %v344 = vunpack.c.l.b16 %v189
      %v345 = vunpack.c.l.b16 %v190
      %v346 = vunpack.c.l.b16 %v191
      %v347 = vunpack.c.l.b16 %v192
      %v348 = vunpack.c.l.b16 %v193
      %v349 = vunpack.c.l.b16 %v194
      %v350 = vunpack.c.l.b16 %v195
      %v351 = vunpack.c.l.b16 %v196
      %v352 = vunpack.c.l.b16 %v197
      %v353 = vunpack.c.l.b16 %v198
      %v354 = vunpack.c.l.b16 %v199
      %v355 = vunpack.c.l.b16 %v200
      %v356 = vunpack.c.l.b16 %v201
      %v357 = vunpack.c.l.b16 %v202
      %v358 = vunpack.c.l.b16 %v203
      %v359 = vunpack.c.l.b16 %v204
      %v360 = vunpack.c.l.b16 %v205
      %v361 = vunpack.c.l.b16 %v206
      %v362 = vunpack.c.l.b16 %v207
      %v363 = vunpack.c.l.b16 %v208
      %v364 = vunpack.c.l.b16 %v209
      %v365 = vunpack.c.l.b16 %v210
      %v366 = vunpack.c.l.b16 %v211
      %v367 = vunpack.c.l.b16 %v212
      %v368 = vunpack.c.l.b16 %v213
      %v369 = vunpack.c.l.b16 %v214
      %v370 = vunpack.c.l.b16 %v215
      %v371 = vunpack.c.l.b16 %v216
      %v372 = vunpack.c.l.b16 %v217
      %v373 = vunpack.c.l.b16 %v218
      %v374 = vunpack.c.l.b16 %v219
      %v375 = vunpack.c.l.b16 %v220
      %v376 = vunpack.c.l.b16 %v221
      %v377 = vunpack.c.l.b16 %v222
      %v378 = vunpack.c.l.b16 %v223
      %v379 = vunpack.c.l.b16 %v224
      %v380 = vunpack.c.l.b16 %v225
      %v381 = vunpack.c.l.b16 %v226
      %v382 = vunpack.c.l.b16 %v227
      %v383 = vunpack.c.l.b16 %v228
      %v384 = vunpack.c.l.b16 %v229
      %v385 = vunpack.c.l.b16 %v230
      %v386 = vunpack.c.l.b16 %v231
      %v387 = vunpack.c.l.b16 %v232
      %v388 = vunpack.c.l.b16 %v233
      %v389 = vunpack.c.l.b16 %v234
      %v390 = vunpack.c.l.b16 %v235
      %v391 = vunpack.c.l.b16 %v236
      %v392 = vunpack.c.l.b16 %v237
      %v393 = vunpack.c.l.b16 %v238
      %v394 = vunpack.c.l.b16 %v239
      %v395 = vpack.c.b16 %v332, %v331
      %v396 = vpack.c.b16 %v334, %v333
      %v397 = vpack.c.b16 %v336, %v335
      %v398 = vpack.c.b16 %v338, %v337
      %v399 = vpack.c.b16 %v340, %v339
      %v400 = vpack.c.b16 %v342, %v341
      %v401 = vpack.c.b16 %v344, %v343
      %v402 = vpack.c.b16 %v346, %v345
      %v403 = vpack.c.b16 %v348, %v347
      %v404 = vpack.c.b16 %v350, %v349
      %v405 = vpack.c.b16 %v352, %v351
      %v406 = vpack.c.b16 %v354, %v353
      %v407 = vpack.c.b16 %v356, %v355
      %v408 = vpack.c.b16 %v358, %v357
      %v409 = vpack.c.b16 %v360, %v359
      %v410 = vpack.c.b16 %v362, %v361
      %v411 = vpack.c.b16 %v364, %v363
      %v412 = vpack.c.b16 %v366, %v365
      %v413 = vpack.c.b16 %v368, %v367
      %v414 = vpack.c.b16 %v370, %v369
      %v415 = vpack.c.b16 %v372, %v371
      %v416 = vpack.c.b16 %v374, %v373
      %v417 = vpack.c.b16 %v376, %v375
      %v418 = vpack.c.b16 %v378, %v377
      %v419 = vpack.c.b16 %v380, %v379
      %v420 = vpack.c.b16 %v382, %v381
      %v421 = vpack.c.b16 %v384, %v383
      %v422 = vpack.c.b16 %v386, %v385
      %v423 = vpack.c.b16 %v388, %v387
      %v424 = vpack.c.b16 %v390, %v389
      %v425 = vpack.c.b16 %v392, %v391
      %v426 = vpack.c.b16 %v394, %v393
      %459 = vmatprep.subr.bf16.mxu0 0
      %460 = vmatpush1.bf16.msra.mxu0 %v402
      %461 = vmatprep.subr.bf16.mxu0 0
      %462 = vmatpush1.bf16.msra.mxu0 %v401
      %463 = vmatprep.subr.bf16.mxu0 0
      %464 = vmatpush1.bf16.msra.mxu0 %v400
      %465 = vmatprep.subr.bf16.mxu0 0
      %466 = vmatpush1.bf16.msra.mxu0 %v399
      %467 = vmatprep.subr.bf16.mxu0 0
      %468 = vmatpush1.bf16.msra.mxu0 %v398
      %469 = vmatprep.subr.bf16.mxu0 0
      %470 = vmatpush1.bf16.msra.mxu0 %v397
      %471 = vmatprep.subr.bf16.mxu0 0
      %472 = vmatpush1.bf16.msra.mxu0 %v396
      %473 = vmatprep.subr.bf16.mxu0 0
      %474 = vmatpush1.bf16.msra.mxu0 %v395
      %475 = vmatprep.subr.bf16.mxu0 0
      %476 = vmatpush2.bf16.msra.mxu0 %v410
      %477 = vmatprep.subr.bf16.mxu0 0
      %478 = vmatpush2.bf16.msra.mxu0 %v409
      %479 = vmatprep.subr.bf16.mxu0 0
      %480 = vmatpush2.bf16.msra.mxu0 %v408
      %481 = vmatprep.subr.bf16.mxu0 0
      %482 = vmatpush2.bf16.msra.mxu0 %v407
      %483 = vmatprep.subr.bf16.mxu0 0
      %484 = vmatpush2.bf16.msra.mxu0 %v406
      %485 = vmatprep.subr.bf16.mxu0 0
      %486 = vmatpush2.bf16.msra.mxu0 %v405
      %487 = vmatprep.subr.bf16.mxu0 0
      %488 = vmatpush2.bf16.msra.mxu0 %v404
      %489 = vmatprep.subr.bf16.mxu0 0
      %490 = vmatpush2.bf16.msra.mxu0 %v403
      %491 = vmatprep.mubr.bf16.mxu0 %v260
      %492 = vmatmul.mubr.bf16.gmra.mxu0 %v259
      %v493 = vpop.f32.mrf.mxu0
      %v494 = vadd.f32 %v245, %v493
      %v495 = vpop.f32.mrf.mxu0
      %v496 = vpop.f32.mrf.mxu0
      %v497 = vadd.f32 %v245, %v496
      %v498 = vpop.f32.mrf.mxu0
      %499 = vdwg.mxu0
      %500 = vmatprep.subr.bf16.mxu0 0
      %501 = vmatpush1.bf16.msra.mxu0 %v418
      %502 = vmatprep.subr.bf16.mxu0 0
      %503 = vmatpush1.bf16.msra.mxu0 %v417
      %504 = vmatprep.subr.bf16.mxu0 0
      %505 = vmatpush1.bf16.msra.mxu0 %v416
      %506 = vmatprep.subr.bf16.mxu0 0
      %507 = vmatpush1.bf16.msra.mxu0 %v415
      %508 = vmatprep.subr.bf16.mxu0 0
      %509 = vmatpush1.bf16.msra.mxu0 %v414
      %510 = vmatprep.subr.bf16.mxu0 0
      %511 = vmatpush1.bf16.msra.mxu0 %v413
      %512 = vmatprep.subr.bf16.mxu0 0
      %513 = vmatpush1.bf16.msra.mxu0 %v412
      %514 = vmatprep.subr.bf16.mxu0 0
      %515 = vmatpush1.bf16.msra.mxu0 %v411
      %516 = vmatprep.subr.bf16.mxu0 0
      %517 = vmatpush2.bf16.msra.mxu0 %v426
      %518 = vmatprep.subr.bf16.mxu0 0
      %519 = vmatpush2.bf16.msra.mxu0 %v425
      %520 = vmatprep.subr.bf16.mxu0 0
      %521 = vmatpush2.bf16.msra.mxu0 %v424
      %522 = vmatprep.subr.bf16.mxu0 0
      %523 = vmatpush2.bf16.msra.mxu0 %v423
      %524 = vmatprep.subr.bf16.mxu0 0
      %525 = vmatpush2.bf16.msra.mxu0 %v422
      %526 = vmatprep.subr.bf16.mxu0 0
      %527 = vmatpush2.bf16.msra.mxu0 %v421
      %528 = vmatprep.subr.bf16.mxu0 0
      %529 = vmatpush2.bf16.msra.mxu0 %v420
      %530 = vmatprep.subr.bf16.mxu0 0
      %531 = vmatpush2.bf16.msra.mxu0 %v419
      %532 = vmatprep.mubr.bf16.mxu0 %v262
      %533 = vmatmul.mubr.bf16.gmra.mxu0 %v261
      %v534 = vpop.f32.mrf.mxu0
      %v535 = vadd.f32 %v494, %v534
      %v536 = vpop.f32.mrf.mxu0
      %v537 = vpop.f32.mrf.mxu0
      %v538 = vadd.f32 %v497, %v537
      %v539 = vpop.f32.mrf.mxu0
      %540 = vdwg.mxu0
      %v541 = vadd.f32 %v535, %v538
      %v542 = vrot.slane %v541, 4
      %v543 = vadd.f32 %v541, %v542
      %v544 = vrot.slane %v543, 2
      %v545 = vadd.f32 %v543, %v544
      %v546 = vrot.slane %v545, 1
      %v547 = vadd.f32 %v545, %v546
      %v548 = vrcp.pop 16.0
      %v549 = vmul.f32 %v547, %v548
      %v550 = vmul.f32 %v535, %v535
      %v551 = vmul.f32 %v538, %v538
      %v552 = vadd.f32 %v550, %v551
      %v553 = vrot.slane %v552, 4
      %v554 = vadd.f32 %v552, %v553
      %v555 = vrot.slane %v554, 2
      %v556 = vadd.f32 %v554, %v555
      %v557 = vrot.slane %v556, 1
      %v558 = vadd.f32 %v556, %v557
      %v559 = vmul.f32 %v558, %v548
      %v560 = vmul.f32 %v549, %v549
      %v561 = vsub.f32 %v559, %v560
      %v562 = vmax.f32 %v561, 0.0
      %v563 = vsub.f32 %v535, %v549
      %v564 = vsub.f32 %v538, %v549
      %v565 = vadd.f32 %v562, 1e-05
      %v566 = vrsqrt.pop %v565
      %v567 = vmul.f32 %v563, %v566
      %v568 = vmul.f32 %v564, %v566
      %v569 = vmax.f32 %v567, 0.0
      %v570 = vmax.f32 %v568, 0.0
      %571 = vst [vmem:[%s170] sm:$0xff] %v569
      %572 = vst [vmem:[%s170 + $0x8] sm:$0xff] %v570
      %p573 = scmp.lt.s32.totalorder %s14, 1
      %s574 = scalar_select %p573, %s14, 1
      %s575 = smul.addr %s574, 2
      %s576 = smul.addr %s575, 8
      %s577 = scalar_lea.vmem %s3, %s576
      // Predicated region
      $region33: #{content_encoder_forward.9} parent=31 // pred_check
        %p578 = pneg %p100
      $region34: #{content_encoder_forward.9} parent=31 // pred_check_branch
        %580 = sbr.rel (%p578) target = $region36
      $region35: #{content_encoder_forward.9} parent=31 // pred_region
        _
      $region36: #{content_encoder_forward.9} parent=31 // pred_fallthru
        _
    $region32: #{content_encoder_forward.9} parent=5 // pred_fallthru
      _
    %p581 = scmp.le.s32.totalorder 2, %s9
    // Predicated region
    $region37: #{content_encoder_forward.9} parent=5 // pred_check
      %p582 = pneg %p581
    $region38: #{content_encoder_forward.9} parent=5 // pred_check_branch
      %584 = sbr.rel (%p582) target = $region40
    $region39: #{content_encoder_forward.9} parent=5 // pred_region
      %s585 = ssub.s32 %s9, 2
      // Predicated region
      $region41: #{content_encoder_forward.9} parent=39 // pred_check
        %p586 = pneg %p106
      $region42: #{content_encoder_forward.9} parent=39 // pred_check_branch
        %588 = sbr.rel (%p586) target = $region44
      $region43: #{content_encoder_forward.9} parent=39 // pred_region
        %p589 = scmp.lt.s32.totalorder %s15, 1
        %s590 = scalar_select %p589, %s15, 1
        %s591 = smul.addr %s590, 2
        %s592 = smul.addr %s591, 8
        %s593 = scalar_lea.vmem %s3, %s592
      $region44: #{content_encoder_forward.9} parent=39 // pred_fallthru
        _
    $region40: #{content_encoder_forward.9} parent=5 // pred_fallthru
      _
  $region6: #{content_encoder_forward.9} parent=0 // loop_footer
    %s13 = sadd.s32 1, %s9
  $region7: #{content_encoder_forward.9} parent=0 // loop_footer_branch
    %8 = sbr.rel target = $region3
  $region8: #{content_encoder_forward.9} parent=0 // loop_exit
    _

// kernel: content_encoder_forward.10
$region0: #{content_encoder_forward.10}
  #allocation0 [shape = 'u32[]', space=smem, size = 0x4, offset = 0x4, fixed_abs, tag = 'smem constant byte address 0x4 - core index']
  #allocation1 [shape = 'u32[144,128]{1,0:T(1,128)}', space=vmem, size = 0x12000, scoped, tag = 'internal scratch']
  %s0 = inlined_call_operand.vmem [shape: bf16[2,16,576], index: 0, kind: input, shape index: {}]
  %s1 = inlined_call_operand.vmem [shape: bf16[576,128], index: 1, kind: input, shape index: {}]
  %s2 = inlined_call_operand.vmem [shape: f32[1,128], index: 2, kind: input, shape index: {}]
  %s3 = inlined_call_operand.vmem [shape: f32[2,16,128], index: 3, kind: output, shape index: {}]
  %s4 = sld [smem:[#allocation0]]
  $region45: #{content_encoder_forward.10} parent=0
    _
  %s6 = ssub.s32 1, %s4
  %s7 = scalar_select 0, %s6, %s4
  loop: start=0, step=1, limit=4
  $region2: #{content_encoder_forward.10} parent=0 // loop_pre_header
    _
  $region3: #{content_encoder_forward.10} parent=0 // loop_header
    %s9 = sphi 0, %s13
    %p10 = scmp.ge.s32.totalorder %s9, 4
    %s19 = sphi 0, %s21
    %s22 = sphi 0, %s19
    %s23 = sphi 0, %s22
    %s39 = sphi 0, %s23
    %s43 = sphi 0, %s43
    %s45 = sphi 0, %s43
    %s46 = sphi 0, %s45
    %s60 = sphi 0, %s46
    %s64 = sphi 0, %s64
    %s66 = sphi 0, %s64
    %s67 = sphi 0, %s66
    %s81 = sphi 0, %s67
    %s87 = sphi 0, %s89
    %s90 = sphi 0, %s87
    %s91 = sphi 0, %s90
    %s107 = sphi 0, %s91
  $region4: #{content_encoder_forward.10} parent=0 // loop_header_branch
    %12 = sbr.rel (%p10) target = $region8
  $region5: #{content_encoder_forward.10} parent=0 // loop_body
    %s14 = ssub.s32 %s9, 1
    %s15 = ssub.s32 %s9, 2
    %s16 = sadd.s32 %s9, 1
    %s17 = ssub.s32 %s9, %s16
    %p18 = scmp.eq.s32.totalorder %s17, 0
    %s20 = sadd.s32 %s19, 1
    %s21 = scalar_select %p18, %s19, %s20
    %p24 = pneg %p18
    %p25 = scmp.eq.s32.totalorder %s9, 1
    %p26 = por %p24, %p25
    %p27 = scmp.ne.s32.totalorder %s19, %s22
    %p28 = scmp.eq.s32.totalorder %s9, 0
    %p29 = por %p27, %p28
    %p30 = scmp.ne.s32.totalorder %s19, %s22
    %p31 = scmp.eq.s32.totalorder %s14, 1
    %p32 = por %p30, %p31
    %p33 = scmp.ne.s32.totalorder %s22, %s23
    %p34 = scmp.eq.s32.totalorder %s14, 0
    %p35 = por %p33, %p34
    %p36 = scmp.ne.s32.totalorder %s22, %s23
    %p37 = scmp.eq.s32.totalorder %s15, 1
    %p38 = por %p36, %p37
    %p40 = scmp.ne.s32.totalorder %s23, %s39
    %p41 = scmp.eq.s32.totalorder %s15, 0
    %p42 = por %p40, %p41
    %s44 = sadd.s32 %s43, 1
    %p47 = scmp.eq.s32.totalorder %s9, 1
    %p48 = scmp.ne.s32.totalorder %s43, %s45
    %p49 = scmp.eq.s32.totalorder %s9, 0
    %p50 = por %p48, %p49
    %p51 = scmp.ne.s32.totalorder %s43, %s45
    %p52 = scmp.eq.s32.totalorder %s14, 1
    %p53 = por %p51, %p52
    %p54 = scmp.ne.s32.totalorder %s45, %s46
    %p55 = scmp.eq.s32.totalorder %s14, 0
    %p56 = por %p54, %p55
    %p57 = scmp.ne.s32.totalorder %s45, %s46
    %p58 = scmp.eq.s32.totalorder %s15, 1
    %p59 = por %p57, %p58
    %p61 = scmp.ne.s32.totalorder %s46, %s60
    %p62 = scmp.eq.s32.totalorder %s15, 0
    %p63 = por %p61, %p62
    %s65 = sadd.s32 %s64, 1
    %p68 = scmp.eq.s32.totalorder %s9, 1
    %p69 = scmp.ne.s32.totalorder %s64, %s66
    %p70 = scmp.eq.s32.totalorder %s9, 0
    %p71 = por %p69, %p70
    %p72 = scmp.ne.s32.totalorder %s64, %s66
    %p73 = scmp.eq.s32.totalorder %s14, 1
    %p74 = por %p72, %p73
    %p75 = scmp.ne.s32.totalorder %s66, %s67
    %p76 = scmp.eq.s32.totalorder %s14, 0
    %p77 = por %p75, %p76
    %p78 = scmp.ne.s32.totalorder %s66, %s67
    %p79 = scmp.eq.s32.totalorder %s15, 1
    %p80 = por %p78, %p79
    %p82 = scmp.ne.s32.totalorder %s67, %s81
    %p83 = scmp.eq.s32.totalorder %s15, 0
    %p84 = por %p82, %p83
    %s85 = ssub.s32 %s9, %s16
    %p86 = scmp.eq.s32.totalorder %s85, 0
    %s88 = sadd.s32 %s87, 1
    %s89 = scalar_select %p86, %s87, %s88
    %p92 = pneg %p86
    %p93 = scmp.eq.s32.totalorder %s9, 1
    %p94 = por %p92, %p93
    %p95 = scmp.ne.s32.totalorder %s87, %s90
    %p96 = scmp.eq.s32.totalorder %s9, 0
    %p97 = por %p95, %p96
    %p98 = scmp.ne.s32.totalorder %s87, %s90
    %p99 = scmp.eq.s32.totalorder %s14, 1
    %p100 = por %p98, %p99
    %p101 = scmp.ne.s32.totalorder %s90, %s91
    %p102 = scmp.eq.s32.totalorder %s14, 0
    %p103 = por %p101, %p102
    %p104 = scmp.ne.s32.totalorder %s90, %s91
    %p105 = scmp.eq.s32.totalorder %s15, 1
    %p106 = por %p104, %p105
    %p108 = scmp.ne.s32.totalorder %s91, %s107
    %p109 = scmp.eq.s32.totalorder %s15, 0
    %p110 = por %p108, %p109
    %p111 = scmp.le.s32.totalorder 1, %s9
    %p112 = scmp.lt.s32.totalorder %s9, 3
    %p113 = pnand %p111, %p112
    %p114 = pneg %p113
    // Predicated region
    $region9: #{content_encoder_forward.10} parent=5 // pred_check
      _
    $region10: #{content_encoder_forward.10} parent=5 // pred_check_branch
      %116 = sbr.rel (%p113) target = $region12
    $region11: #{content_encoder_forward.10} parent=5 // pred_region
      %s117 = ssub.s32 %s9, 1
      // Predicated region
      $region13: #{content_encoder_forward.10} parent=11 // pred_check
        %p118 = pneg %p56
      $region14: #{content_encoder_forward.10} parent=11 // pred_check_branch
        %120 = sbr.rel (%p118) target = $region16
      $region15: #{content_encoder_forward.10} parent=11 // pred_region
        _
      $region16: #{content_encoder_forward.10} parent=11 // pred_fallthru
        _
      // Predicated region
      $region17: #{content_encoder_forward.10} parent=11 // pred_check
        %p121 = pneg %p77
      $region18: #{content_encoder_forward.10} parent=11 // pred_check_branch
        %123 = sbr.rel (%p121) target = $region20
      $region19: #{content_encoder_forward.10} parent=11 // pred_region
        _
      $region20: #{content_encoder_forward.10} parent=11 // pred_fallthru
        _
    $region12: #{content_encoder_forward.10} parent=5 // pred_fallthru
      _
    %p124 = scmp.lt.s32.totalorder %s9, 2
    // Predicated region
    $region21: #{content_encoder_forward.10} parent=5 // pred_check
      %p125 = pneg %p124
    $region22: #{content_encoder_forward.10} parent=5 // pred_check_branch
      %127 = sbr.rel (%p125) target = $region24
    $region23: #{content_encoder_forward.10} parent=5 // pred_region
      // Predicated region
      $region25: #{content_encoder_forward.10} parent=23 // pred_check
        %p128 = pneg %p29
      $region26: #{content_encoder_forward.10} parent=23 // pred_check_branch
        %130 = sbr.rel (%p128) target = $region28
      $region27: #{content_encoder_forward.10} parent=23 // pred_region
        %p131 = scmp.lt.s32.totalorder %s9, 1
        %s132 = scalar_select %p131, %s9, 1
        %s133 = smul.addr %s132, 10
        %s134 = smul.addr %s133, 4
        %s135 = scalar_lea.vmem %s0, %s134
      $region28: #{content_encoder_forward.10} parent=23 // pred_fallthru
        _
    $region24: #{content_encoder_forward.10} parent=5 // pred_fallthru
      _
    %p136 = scmp.le.s32.totalorder 1, %s9
    %p137 = scmp.lt.s32.totalorder %s9, 3
    %p138 = pnand %p136, %p137
    %p139 = pneg %p138
    // Predicated region
    $region29: #{content_encoder_forward.10} parent=5 // pred_check
      _
    $region30: #{content_encoder_forward.10} parent=5 // pred_check_branch
      %141 = sbr.rel (%p138) target = $region32
    $region31: #{content_encoder_forward.10} parent=5 // pred_region
      %s142 = ssub.s32 %s9, 1
      %p143 = scmp.lt.s32.totalorder %s14, 1
      %s144 = scalar_select %p143, %s14, 1
      %s145 = smul.addr %s144, 10
      %s146 = smul.addr %s145, 4
      %s147 = scalar_lea.vmem %s0, %s146
      %p148 = pneg %p35
      %p149 = pneg %p32
      %p150 = pneg %p56
      %p151 = pneg %p53
      %p152 = pneg %p77
      %p153 = pneg %p74
      %p154 = pneg %p103
      %p155 = pneg %p100
      %p156 = scmp.lt.s32.totalorder %s14, 1
      %s157 = scalar_select %p156, %s14, 1
      %s158 = smul.addr %s157, 2
      %s159 = smul.addr %s158, 8
      %s160 = scalar_lea.vmem %s3, %s159
      %p161 = scmp.lt.s32.totalorder %s14, 1
      %s162 = scalar_select %p161, %s14, 1
      %s163 = smul.addr %s162, 10
      %s164 = smul.addr %s163, 4
      %s165 = scalar_lea.vmem %s0, %s164
      %p166 = scmp.lt.s32.totalorder %s14, 1
      %s167 = scalar_select %p166, %s14, 1
      %s168 = smul.addr %s167, 2
      %s169 = smul.addr %s168, 8
      %s170 = scalar_lea.vmem %s3, %s169
      %v172 = vld [vmem:[%s165] sm:$0xff]
      %v173 = vld [vmem:[%s165 + $0x8] sm:$0xff]
      %v174 = vld [vmem:[%s165 + $0x10] sm:$0xf]
      %v175 = vld [vmem:[%s165 + $0x14] sm:$0xff]
      %v176 = vld [vmem:[%s165 + $0x1c] sm:$0xff]
      %v177 = vld [vmem:[%s165 + $0x24] sm:$0xf]
      %v178 = vld [vmem:[%s1] sm:$0xf]
      %v179 = vld [vmem:[%s1 + $0x4] sm:$0xf]
      %v180 = vld [vmem:[%s1 + $0x8] sm:$0xf]
      %v181 = vld [vmem:[%s1 + $0xc] sm:$0xf]
      %v182 = vld [vmem:[%s1 + $0x10] sm:$0xf]
      %v183 = vld [vmem:[%s1 + $0x14] sm:$0xf]
      %v184 = vld [vmem:[%s1 + $0x18] sm:$0xf]
      %v185 = vld [vmem:[%s1 + $0x1c] sm:$0xf]
      %v186 = vld [vmem:[%s1 + $0x20] sm:$0xf]
      %v187 = vld [vmem:[%s1 + $0x24] sm:$0xf]
      %v188 = vld [vmem:[%s1 + $0x28] sm:$0xf]
      %v189 = vld [vmem:[%s1 + $0x2c] sm:$0xf]
      %v190 = vld [vmem:[%s1 + $0x30] sm:$0xf]
      %v191 = vld [vmem:[%s1 + $0x34] sm:$0xf]
      %v192 = vld [vmem:[%s1 + $0x38] sm:$0xf]
      %v193 = vld [vmem:[%s1 + $0x3c] sm:$0xf]
      %v194 = vld [vmem:[%s1 + $0x40] sm:$0xf]
      %v195 = vld [vmem:[%s1 + $0x44] sm:$0xf]
      %v196 = vld [vmem:[%s1 + $0x48] sm:$0xf]
      %v197 = vld [vmem:[%s1 + $0x4c] sm:$0xf]
      %v198 = vld [vmem:[%s1 + $0x50] sm:$0xf]
      %v199 = vld [vmem:[%s1 + $0x54] sm:$0xf]
      %v200 = vld [vmem:[%s1 + $0x58] sm:$0xf]
      %v201 = vld [vmem:[%s1 + $0x5c] sm:$0xf]
      %v202 = vld [vmem:[%s1 + $0x60] sm:$0xf]
      %v203 = vld [vmem:[%s1 + $0x64] sm:$0xf]
      %v204 = vld [vmem:[%s1 + $0x68] sm:$0xf]
      %v205 = vld [vmem:[%s1 + $0x6c] sm:$0xf]
      %v206 = vld [vmem:[%s1 + $0x70] sm:$0xf]
      %v207 = vld [vmem:[%s1 + $0x74] sm:$0xf]
      %v208 = vld [vmem:[%s1 + $0x78] sm:$0xf]
      %v209 = vld [vmem:[%s1 + $0x7c] sm:$0xf]
      %v210 = vld [vmem:[%s1 + $0x80] sm:$0xf]
      %v211 = vld [vmem:[%s1 + $0x84] sm:$0xf]
      %v212 = vld [vmem:[%s1 + $0x88] sm:$0xf]
      %v213 = vld [vmem:[%s1 + $0x8c] sm:$0xf]
      %v214 = vld [vmem:[%s1 + $0x90] sm:$0xf]
      %v215 = vld [vmem:[%s1 + $0x94] sm:$0xf]
      %v216 = vld [vmem:[%s1 + $0x98] sm:$0xf]
      %v217 = vld [vmem:[%s1 + $0x9c] sm:$0xf]
      %v218 = vld [vmem:[%s1 + $0xa0] sm:$0xf]
      %v219 = vld [vmem:[%s1 + $0xa4] sm:$0xf]
      %v220 = vld [vmem:[%s1 + $0xa8] sm:$0xf]
      %v221 = vld [vmem:[%s1 + $0xac] sm:$0xf]
      %v222 = vld [vmem:[%s1 + $0xb0] sm:$0xf]
      %v223 = vld [vmem:[%s1 + $0xb4] sm:$0xf]
      %v224 = vld [vmem:[%s1 + $0xb8] sm:$0xf]
      %v225 = vld [vmem:[%s1 + $0xbc] sm:$0xf]
      %v226 = vld [vmem:[%s1 + $0xc0] sm:$0xf]
      %v227 = vld [vmem:[%s1 + $0xc4] sm:$0xf]
      %v228 = vld [vmem:[%s1 + $0xc8] sm:$0xf]
      %v229 = vld [vmem:[%s1 + $0xcc] sm:$0xf]
      %v230 = vld [vmem:[%s1 + $0xd0] sm:$0xf]
      %v231 = vld [vmem:[%s1 + $0xd4] sm:$0xf]
      %v232 = vld [vmem:[%s1 + $0xd8] sm:$0xf]
      %v233 = vld [vmem:[%s1 + $0xdc] sm:$0xf]
      %v234 = vld [vmem:[%s1 + $0xe0] sm:$0xf]
      %v235 = vld [vmem:[%s1 + $0xe4] sm:$0xf]
      %v236 = vld [vmem:[%s1 + $0xe8] sm:$0xf]
      %v237 = vld [vmem:[%s1 + $0xec] sm:$0xf]
      %v238 = vld [vmem:[%s1 + $0xf0] sm:$0xf]
      %v239 = vld [vmem:[%s1 + $0xf4] sm:$0xf]
      %v240 = vld [vmem:[%s1 + $0xf8] sm:$0xf]
      %v241 = vld [vmem:[%s1 + $0xfc] sm:$0xf]
      %v242 = vld [vmem:[%s1 + $0x100] sm:$0xf]
      %v243 = vld [vmem:[%s1 + $0x104] sm:$0xf]
      %v244 = vld [vmem:[%s1 + $0x108] sm:$0xf]
      %v245 = vld [vmem:[%s1 + $0x10c] sm:$0xf]
      %v246 = vld [vmem:[%s1 + $0x110] sm:$0xf]
      %v247 = vld [vmem:[%s1 + $0x114] sm:$0xf]
      %v248 = vld [vmem:[%s1 + $0x118] sm:$0xf]
      %v249 = vld [vmem:[%s1 + $0x11c] sm:$0xf]
      %v250 = vld [vmem:[%s2] sm:$0x1]
      %v252 = vlaneseq
      %v253 = vshrl.u32 %v252, 7
      %v254 = vsub.s32 0, %v253
      %v255 = vrot.slane %v250, %v254
      %v263 = vunpack.c.l.b16 %v172
      %v264 = vunpack.c.h.b16 %v172
      %v265 = vunpack.c.l.b16 %v173
      %v266 = vunpack.c.h.b16 %v173
      %v267 = vunpack.c.l.b16 %v174
      %v268 = vunpack.c.l.b16 %v175
      %v269 = vunpack.c.h.b16 %v175
      %v270 = vunpack.c.l.b16 %v176
      %v271 = vunpack.c.h.b16 %v176
      %v272 = vunpack.c.l.b16 %v177
      %v273 = vpack.c.b16 %v268, %v263
      %v274 = vpack.c.b16 %v269, %v264
      %v275 = vpack.c.b16 %v270, %v265
      %v276 = vpack.c.b16 %v271, %v266
      %v277 = vpack.c.b16 %v272, %v267
      %v354 = vunpack.c.l.b16 %v178
      %v355 = vunpack.c.l.b16 %v179
      %v356 = vunpack.c.l.b16 %v180
      %v357 = vunpack.c.l.b16 %v181
      %v358 = vunpack.c.l.b16 %v182
      %v359 = vunpack.c.l.b16 %v183
      %v360 = vunpack.c.l.b16 %v184
      %v361 = vunpack.c.l.b16 %v185
      %v362 = vunpack.c.l.b16 %v186
      %v363 = vunpack.c.l.b16 %v187
      %v364 = vunpack.c.l.b16 %v188
      %v365 = vunpack.c.l.b16 %v189
      %v366 = vunpack.c.l.b16 %v190
      %v367 = vunpack.c.l.b16 %v191
      %v368 = vunpack.c.l.b16 %v192
      %v369 = vunpack.c.l.b16 %v193
      %v370 = vunpack.c.l.b16 %v194
      %v371 = vunpack.c.l.b16 %v195
      %v372 = vunpack.c.l.b16 %v196
      %v373 = vunpack.c.l.b16 %v197
      %v374 = vunpack.c.l.b16 %v198
      %v375 = vunpack.c.l.b16 %v199
      %v376 = vunpack.c.l.b16 %v200
      %v377 = vunpack.c.l.b16 %v201
      %v378 = vunpack.c.l.b16 %v202
      %v379 = vunpack.c.l.b16 %v203
      %v380 = vunpack.c.l.b16 %v204
      %v381 = vunpack.c.l.b16 %v205
      %v382 = vunpack.c.l.b16 %v206
      %v383 = vunpack.c.l.b16 %v207
      %v384 = vunpack.c.l.b16 %v208
      %v385 = vunpack.c.l.b16 %v209
      %v386 = vunpack.c.l.b16 %v210
      %v387 = vunpack.c.l.b16 %v211
      %v388 = vunpack.c.l.b16 %v212
      %v389 = vunpack.c.l.b16 %v213
      %v390 = vunpack.c.l.b16 %v214
      %v391 = vunpack.c.l.b16 %v215
      %v392 = vunpack.c.l.b16 %v216
      %v393 = vunpack.c.l.b16 %v217
      %v394 = vunpack.c.l.b16 %v218
      %v395 = vunpack.c.l.b16 %v219
      %v396 = vunpack.c.l.b16 %v220
      %v397 = vunpack.c.l.b16 %v221
      %v398 = vunpack.c.l.b16 %v222
      %v399 = vunpack.c.l.b16 %v223
      %v400 = vunpack.c.l.b16 %v224
      %v401 = vunpack.c.l.b16 %v225
      %v402 = vunpack.c.l.b16 %v226
      %v403 = vunpack.c.l.b16 %v227
      %v404 = vunpack.c.l.b16 %v228
      %v405 = vunpack.c.l.b16 %v229
      %v406 = vunpack.c.l.b16 %v230
      %v407 = vunpack.c.l.b16 %v231
      %v408 = vunpack.c.l.b16 %v232
      %v409 = vunpack.c.l.b16 %v233
      %v410 = vunpack.c.l.b16 %v234
      %v411 = vunpack.c.l.b16 %v235
      %v412 = vunpack.c.l.b16 %v236
      %v413 = vunpack.c.l.b16 %v237
      %v414 = vunpack.c.l.b16 %v238
      %v415 = vunpack.c.l.b16 %v239
      %v416 = vunpack.c.l.b16 %v240
      %v417 = vunpack.c.l.b16 %v241
      %v418 = vunpack.c.l.b16 %v242
      %v419 = vunpack.c.l.b16 %v243
      %v420 = vunpack.c.l.b16 %v244
      %v421 = vunpack.c.l.b16 %v245
      %v422 = vunpack.c.l.b16 %v246
      %v423 = vunpack.c.l.b16 %v247
      %v424 = vunpack.c.l.b16 %v248
      %v425 = vunpack.c.l.b16 %v249
      %v426 = vpack.c.b16 %v355, %v354
      %v427 = vpack.c.b16 %v357, %v356
      %v428 = vpack.c.b16 %v359, %v358
      %v429 = vpack.c.b16 %v361, %v360
      %v430 = vpack.c.b16 %v363, %v362
      %v431 = vpack.c.b16 %v365, %v364
      %v432 = vpack.c.b16 %v367, %v366
      %v433 = vpack.c.b16 %v369, %v368
      %v434 = vpack.c.b16 %v371, %v370
      %v435 = vpack.c.b16 %v373, %v372
      %v436 = vpack.c.b16 %v375, %v374
      %v437 = vpack.c.b16 %v377, %v376
      %v438 = vpack.c.b16 %v379, %v378
      %v439 = vpack.c.b16 %v381, %v380
      %v440 = vpack.c.b16 %v383, %v382
      %v441 = vpack.c.b16 %v385, %v384
      %v442 = vpack.c.b16 %v387, %v386
      %v443 = vpack.c.b16 %v389, %v388
      %v444 = vpack.c.b16 %v391, %v390
      %v445 = vpack.c.b16 %v393, %v392
      %v446 = vpack.c.b16 %v395, %v394
      %v447 = vpack.c.b16 %v397, %v396
      %v448 = vpack.c.b16 %v399, %v398
      %v449 = vpack.c.b16 %v401, %v400
      %v450 = vpack.c.b16 %v403, %v402
      %v451 = vpack.c.b16 %v405, %v404
      %v452 = vpack.c.b16 %v407, %v406
      %v453 = vpack.c.b16 %v409, %v408
      %v454 = vpack.c.b16 %v411, %v410
      %v455 = vpack.c.b16 %v413, %v412
      %v456 = vpack.c.b16 %v415, %v414
      %v457 = vpack.c.b16 %v417, %v416
      %v458 = vpack.c.b16 %v419, %v418
      %v459 = vpack.c.b16 %v421, %v420
      %v460 = vpack.c.b16 %v423, %v422
      %v461 = vpack.c.b16 %v425, %v424
      %vm498 = vcmask 523264
      %v500 = vsel %vm498, %v277, 0
      %502 = vmatprep.subr.bf16.mxu0 0
      %503 = vmatpush1.bf16.msra.mxu0 %v433
      %504 = vmatprep.subr.bf16.mxu0 0
      %505 = vmatpush1.bf16.msra.mxu0 %v432
      %506 = vmatprep.subr.bf16.mxu0 0
      %507 = vmatpush1.bf16.msra.mxu0 %v431
      %508 = vmatprep.subr.bf16.mxu0 0
      %509 = vmatpush1.bf16.msra.mxu0 %v430
      %510 = vmatprep.subr.bf16.mxu0 0
      %511 = vmatpush1.bf16.msra.mxu0 %v429
      %512 = vmatprep.subr.bf16.mxu0 0
      %513 = vmatpush1.bf16.msra.mxu0 %v428
      %514 = vmatprep.subr.bf16.mxu0 0
      %515 = vmatpush1.bf16.msra.mxu0 %v427
      %516 = vmatprep.subr.bf16.mxu0 0
      %517 = vmatpush1.bf16.msra.mxu0 %v426
      %518 = vmatprep.subr.bf16.mxu0 0
      %519 = vmatpush2.bf16.msra.mxu0 %v441
      %520 = vmatprep.subr.bf16.mxu0 0
      %521 = vmatpush2.bf16.msra.mxu0 %v440
      %522 = vmatprep.subr.bf16.mxu0 0
      %523 = vmatpush2.bf16.msra.mxu0 %v439
      %524 = vmatprep.subr.bf16.mxu0 0
      %525 = vmatpush2.bf16.msra.mxu0 %v438
      %526 = vmatprep.subr.bf16.mxu0 0
      %527 = vmatpush2.bf16.msra.mxu0 %v437
      %528 = vmatprep.subr.bf16.mxu0 0
      %529 = vmatpush2.bf16.msra.mxu0 %v436
      %530 = vmatprep.subr.bf16.mxu0 0
      %531 = vmatpush2.bf16.msra.mxu0 %v435
      %532 = vmatprep.subr.bf16.mxu0 0
      %533 = vmatpush2.bf16.msra.mxu0 %v434
      %534 = vmatprep.mubr.bf16.mxu0 %v274
      %535 = vmatmul.mubr.bf16.gmra.mxu0 %v273
      %v536 = vpop.f32.mrf.mxu0
      %v537 = vadd.f32 %v255, %v536
      %v538 = vpop.f32.mrf.mxu0
      %v539 = vpop.f32.mrf.mxu0
      %v540 = vadd.f32 %v255, %v539
      %v541 = vpop.f32.mrf.mxu0
      %542 = vdwg.mxu0
      %543 = vmatprep.subr.bf16.mxu0 0
      %544 = vmatpush1.bf16.msra.mxu0 %v449
      %545 = vmatprep.subr.bf16.mxu0 0
      %546 = vmatpush1.bf16.msra.mxu0 %v448
      %547 = vmatprep.subr.bf16.mxu0 0
      %548 = vmatpush1.bf16.msra.mxu0 %v447
      %549 = vmatprep.subr.bf16.mxu0 0
      %550 = vmatpush1.bf16.msra.mxu0 %v446
      %551 = vmatprep.subr.bf16.mxu0 0
      %552 = vmatpush1.bf16.msra.mxu0 %v445
      %553 = vmatprep.subr.bf16.mxu0 0
      %554 = vmatpush1.bf16.msra.mxu0 %v444
      %555 = vmatprep.subr.bf16.mxu0 0
      %556 = vmatpush1.bf16.msra.mxu0 %v443
      %557 = vmatprep.subr.bf16.mxu0 0
      %558 = vmatpush1.bf16.msra.mxu0 %v442
      %559 = vmatprep.subr.bf16.mxu0 0
      %560 = vmatpush2.bf16.msra.mxu0 %v457
      %561 = vmatprep.subr.bf16.mxu0 0
      %562 = vmatpush2.bf16.msra.mxu0 %v456
      %563 = vmatprep.subr.bf16.mxu0 0
      %564 = vmatpush2.bf16.msra.mxu0 %v455
      %565 = vmatprep.subr.bf16.mxu0 0
      %566 = vmatpush2.bf16.msra.mxu0 %v454
      %567 = vmatprep.subr.bf16.mxu0 0
      %568 = vmatpush2.bf16.msra.mxu0 %v453
      %569 = vmatprep.subr.bf16.mxu0 0
      %570 = vmatpush2.bf16.msra.mxu0 %v452
      %571 = vmatprep.subr.bf16.mxu0 0
      %572 = vmatpush2.bf16.msra.mxu0 %v451
      %573 = vmatprep.subr.bf16.mxu0 0
      %574 = vmatpush2.bf16.msra.mxu0 %v450
      %575 = vmatprep.mubr.bf16.mxu0 %v276
      %576 = vmatmul.mubr.bf16.gmra.mxu0 %v275
      %v577 = vpop.f32.mrf.mxu0
      %v578 = vadd.f32 %v537, %v577
      %v579 = vpop.f32.mrf.mxu0
      %v580 = vpop.f32.mrf.mxu0
      %v581 = vadd.f32 %v540, %v580
      %v582 = vpop.f32.mrf.mxu0
      %583 = vdwg.mxu0
      %584 = vmatprep.subr.bf16.mxu0 0
      %585 = vmatpush1.bf16.msra.mxu0 0
      %586 = vmatprep.subr.bf16.mxu0 0
      %587 = vmatpush1.bf16.msra.mxu0 0
      %588 = vmatprep.subr.bf16.mxu0 0
      %589 = vmatpush1.bf16.msra.mxu0 0
      %590 = vmatprep.subr.bf16.mxu0 0
      %591 = vmatpush1.bf16.msra.mxu0 0
      %592 = vmatprep.subr.bf16.mxu0 0
      %593 = vmatpush1.bf16.msra.mxu0 %v461
      %594 = vmatprep.subr.bf16.mxu0 0
      %595 = vmatpush1.bf16.msra.mxu0 %v460
      %596 = vmatprep.subr.bf16.mxu0 0
      %597 = vmatpush1.bf16.msra.mxu0 %v459
      %598 = vmatprep.subr.bf16.mxu0 0
      %599 = vmatpush1.bf16.msra.mxu0 %v458
      %600 = vmatprep.subr.bf16.mxu0 0
      %601 = vmatpush2.bf16.msra.mxu0 0
      %602 = vmatprep.subr.bf16.mxu0 0
      %603 = vmatpush2.bf16.msra.mxu0 0
      %604 = vmatprep.subr.bf16.mxu0 0
      %605 = vmatpush2.bf16.msra.mxu0 0
      %606 = vmatprep.subr.bf16.mxu0 0
      %607 = vmatpush2.bf16.msra.mxu0 0
      %608 = vmatprep.subr.bf16.mxu0 0
      %609 = vmatpush2.bf16.msra.mxu0 0
      %610 = vmatprep.subr.bf16.mxu0 0
      %611 = vmatpush2.bf16.msra.mxu0 0
      %612 = vmatprep.subr.bf16.mxu0 0
      %613 = vmatpush2.bf16.msra.mxu0 0
      %614 = vmatprep.subr.bf16.mxu0 0
      %615 = vmatpush2.bf16.msra.mxu0 0
      %616 = vmatprep.mubr.bf16.mxu0 0
      %617 = vmatmul.mubr.bf16.gmra.mxu0 %v500
      %v618 = vpop.f32.mrf.mxu0
      %v619 = vadd.f32 %v578, %v618
      %v620 = vpop.f32.mrf.mxu0
      %v621 = vpop.f32.mrf.mxu0
      %v622 = vadd.f32 %v581, %v621
      %v623 = vpop.f32.mrf.mxu0
      %624 = vdwg.mxu0
      %v625 = vadd.f32 %v619, %v622
      %v626 = vrot.slane %v625, 4
      %v627 = vadd.f32 %v625, %v626
      %v628 = vrot.slane %v627, 2
      %v629 = vadd.f32 %v627, %v628
      %v630 = vrot.slane %v629, 1
      %v631 = vadd.f32 %v629, %v630
      %v632 = vrcp.pop 16.0
      %v633 = vmul.f32 %v631, %v632
      %v634 = vmul.f32 %v619, %v619
      %v635 = vmul.f32 %v622, %v622
      %v636 = vadd.f32 %v634, %v635
      %v637 = vrot.slane %v636, 4
      %v638 = vadd.f32 %v636, %v637
      %v639 = vrot.slane %v638, 2
      %v640 = vadd.f32 %v638, %v639
      %v641 = vrot.slane %v640, 1
      %v642 = vadd.f32 %v640, %v641
      %v643 = vmul.f32 %v642, %v632
      %v644 = vmul.f32 %v633, %v633
      %v645 = vsub.f32 %v643, %v644
      %v646 = vmax.f32 %v645, 0.0
      %v647 = vsub.f32 %v619, %v633
      %v648 = vsub.f32 %v622, %v633
      %v649 = vadd.f32 %v646, 1e-05
      %v650 = vrsqrt.pop %v649
      %v651 = vmul.f32 %v647, %v650
      %v652 = vmul.f32 %v648, %v650
      %v653 = vmax.f32 %v651, 0.0
      %v654 = vmax.f32 %v652, 0.0
      %655 = vst [vmem:[%s170] sm:$0xff] %v653
      %656 = vst [vmem:[%s170 + $0x8] sm:$0xff] %v654
      %p657 = scmp.lt.s32.totalorder %s14, 1
      %s658 = scalar_select %p657, %s14, 1
      %s659 = smul.addr %s658, 2
      %s660 = smul.addr %s659, 8
      %s661 = scalar_lea.vmem %s3, %s660
      // Predicated region
      $region33: #{content_encoder_forward.10} parent=31 // pred_check
        %p662 = pneg %p100
      $region34: #{content_encoder_forward.10} parent=31 // pred_check_branch
        %664 = sbr.rel (%p662) target = $region36
      $region35: #{content_encoder_forward.10} parent=31 // pred_region
        _
      $region36: #{content_encoder_forward.10} parent=31 // pred_fallthru
        _
    $region32: #{content_encoder_forward.10} parent=5 // pred_fallthru
      _
    %p665 = scmp.le.s32.totalorder 2, %s9
    // Predicated region
    $region37: #{content_encoder_forward.10} parent=5 // pred_check
      %p666 = pneg %p665
    $region38: #{content_encoder_forward.10} parent=5 // pred_check_branch
      %668 = sbr.rel (%p666) target = $region40
    $region39: #{content_encoder_forward.10} parent=5 // pred_region
      %s669 = ssub.s32 %s9, 2
      // Predicated region
      $region41: #{content_encoder_forward.10} parent=39 // pred_check
        %p670 = pneg %p106
      $region42: #{content_encoder_forward.10} parent=39 // pred_check_branch
        %672 = sbr.rel (%p670) target = $region44
      $region43: #{content_encoder_forward.10} parent=39 // pred_region
        %p673 = scmp.lt.s32.totalorder %s15, 1
        %s674 = scalar_select %p673, %s15, 1
        %s675 = smul.addr %s674, 2
        %s676 = smul.addr %s675, 8
        %s677 = scalar_lea.vmem %s3, %s676
      $region44: #{content_encoder_forward.10} parent=39 // pred_fallthru
        _
    $region40: #{content_encoder_forward.10} parent=5 // pred_fallthru
      _
  $region6: #{content_encoder_forward.10} parent=0 // loop_footer
    %s13 = sadd.s32 1, %s9
  $region7: #{content_encoder_forward.10} parent=0 // loop_footer_branch
    %8 = sbr.rel target = $region3
  $region8: #{content_encoder_forward.10} parent=0 // loop_exit
    _

// kernel: content_encoder_forward.11
$region0: #{content_encoder_forward.11}
  #allocation0 [shape = 'u32[]', space=smem, size = 0x4, offset = 0x4, fixed_abs, tag = 'smem constant byte address 0x4 - core index']
  #allocation1 [shape = 'u32[144,128]{1,0:T(1,128)}', space=vmem, size = 0x12000, scoped, tag = 'internal scratch']
  %s0 = inlined_call_operand.vmem [shape: bf16[2,16,576], index: 0, kind: input, shape index: {}]
  %s1 = inlined_call_operand.vmem [shape: bf16[576,128], index: 1, kind: input, shape index: {}]
  %s2 = inlined_call_operand.vmem [shape: f32[1,128], index: 2, kind: input, shape index: {}]
  %s3 = inlined_call_operand.vmem [shape: f32[2,16,128], index: 3, kind: input, shape index: {}]
  %s4 = inlined_call_operand.vmem [shape: f32[2,16,128], index: 4, kind: output, shape index: {}]
  %s5 = sld [smem:[#allocation0]]
  $region49: #{content_encoder_forward.11} parent=0
    _
  %s7 = ssub.s32 1, %s5
  %s8 = scalar_select 0, %s7, %s5
  loop: start=0, step=1, limit=4
  $region2: #{content_encoder_forward.11} parent=0 // loop_pre_header
    _
  $region3: #{content_encoder_forward.11} parent=0 // loop_header
    %s10 = sphi 0, %s14
    %p11 = scmp.ge.s32.totalorder %s10, 4
    %s20 = sphi 0, %s22
    %s23 = sphi 0, %s20
    %s24 = sphi 0, %s23
    %s40 = sphi 0, %s24
    %s44 = sphi 0, %s44
    %s46 = sphi 0, %s44
    %s47 = sphi 0, %s46
    %s61 = sphi 0, %s47
    %s65 = sphi 0, %s65
    %s67 = sphi 0, %s65
    %s68 = sphi 0, %s67
    %s82 = sphi 0, %s68
    %s88 = sphi 0, %s90
    %s91 = sphi 0, %s88
    %s92 = sphi 0, %s91
    %s108 = sphi 0, %s92
    %s114 = sphi 0, %s116
    %s117 = sphi 0, %s114
    %s118 = sphi 0, %s117
    %s134 = sphi 0, %s118
  $region4: #{content_encoder_forward.11} parent=0 // loop_header_branch
    %13 = sbr.rel (%p11) target = $region8
  $region5: #{content_encoder_forward.11} parent=0 // loop_body
    %s15 = ssub.s32 %s10, 1
    %s16 = ssub.s32 %s10, 2
    %s17 = sadd.s32 %s10, 1
    %s18 = ssub.s32 %s10, %s17
    %p19 = scmp.eq.s32.totalorder %s18, 0
    %s21 = sadd.s32 %s20, 1
    %s22 = scalar_select %p19, %s20, %s21
    %p25 = pneg %p19
    %p26 = scmp.eq.s32.totalorder %s10, 1
    %p27 = por %p25, %p26
    %p28 = scmp.ne.s32.totalorder %s20, %s23
    %p29 = scmp.eq.s32.totalorder %s10, 0
    %p30 = por %p28, %p29
    %p31 = scmp.ne.s32.totalorder %s20, %s23
    %p32 = scmp.eq.s32.totalorder %s15, 1
    %p33 = por %p31, %p32
    %p34 = scmp.ne.s32.totalorder %s23, %s24
    %p35 = scmp.eq.s32.totalorder %s15, 0
    %p36 = por %p34, %p35
    %p37 = scmp.ne.s32.totalorder %s23, %s24
    %p38 = scmp.eq.s32.totalorder %s16, 1
    %p39 = por %p37, %p38
    %p41 = scmp.ne.s32.totalorder %s24, %s40
    %p42 = scmp.eq.s32.totalorder %s16, 0
    %p43 = por %p41, %p42
    %s45 = sadd.s32 %s44, 1
    %p48 = scmp.eq.s32.totalorder %s10, 1
    %p49 = scmp.ne.s32.totalorder %s44, %s46
    %p50 = scmp.eq.s32.totalorder %s10, 0
    %p51 = por %p49, %p50
    %p52 = scmp.ne.s32.totalorder %s44, %s46
    %p53 = scmp.eq.s32.totalorder %s15, 1
    %p54 = por %p52, %p53
    %p55 = scmp.ne.s32.totalorder %s46, %s47
    %p56 = scmp.eq.s32.totalorder %s15, 0
    %p57 = por %p55, %p56
    %p58 = scmp.ne.s32.totalorder %s46, %s47
    %p59 = scmp.eq.s32.totalorder %s16, 1
    %p60 = por %p58, %p59
    %p62 = scmp.ne.s32.totalorder %s47, %s61
    %p63 = scmp.eq.s32.totalorder %s16, 0
    %p64 = por %p62, %p63
    %s66 = sadd.s32 %s65, 1
    %p69 = scmp.eq.s32.totalorder %s10, 1
    %p70 = scmp.ne.s32.totalorder %s65, %s67
    %p71 = scmp.eq.s32.totalorder %s10, 0
    %p72 = por %p70, %p71
    %p73 = scmp.ne.s32.totalorder %s65, %s67
    %p74 = scmp.eq.s32.totalorder %s15, 1
    %p75 = por %p73, %p74
    %p76 = scmp.ne.s32.totalorder %s67, %s68
    %p77 = scmp.eq.s32.totalorder %s15, 0
    %p78 = por %p76, %p77
    %p79 = scmp.ne.s32.totalorder %s67, %s68
    %p80 = scmp.eq.s32.totalorder %s16, 1
    %p81 = por %p79, %p80
    %p83 = scmp.ne.s32.totalorder %s68, %s82
    %p84 = scmp.eq.s32.totalorder %s16, 0
    %p85 = por %p83, %p84
    %s86 = ssub.s32 %s10, %s17
    %p87 = scmp.eq.s32.totalorder %s86, 0
    %s89 = sadd.s32 %s88, 1
    %s90 = scalar_select %p87, %s88, %s89
    %p93 = pneg %p87
    %p94 = scmp.eq.s32.totalorder %s10, 1
    %p95 = por %p93, %p94
    %p96 = scmp.ne.s32.totalorder %s88, %s91
    %p97 = scmp.eq.s32.totalorder %s10, 0
    %p98 = por %p96, %p97
    %p99 = scmp.ne.s32.totalorder %s88, %s91
    %p100 = scmp.eq.s32.totalorder %s15, 1
    %p101 = por %p99, %p100
    %p102 = scmp.ne.s32.totalorder %s91, %s92
    %p103 = scmp.eq.s32.totalorder %s15, 0
    %p104 = por %p102, %p103
    %p105 = scmp.ne.s32.totalorder %s91, %s92
    %p106 = scmp.eq.s32.totalorder %s16, 1
    %p107 = por %p105, %p106
    %p109 = scmp.ne.s32.totalorder %s92, %s108
    %p110 = scmp.eq.s32.totalorder %s16, 0
    %p111 = por %p109, %p110
    %s112 = ssub.s32 %s10, %s17
    %p113 = scmp.eq.s32.totalorder %s112, 0
    %s115 = sadd.s32 %s114, 1
    %s116 = scalar_select %p113, %s114, %s115
    %p119 = pneg %p113
    %p120 = scmp.eq.s32.totalorder %s10, 1
    %p121 = por %p119, %p120
    %p122 = scmp.ne.s32.totalorder %s114, %s117
    %p123 = scmp.eq.s32.totalorder %s10, 0
    %p124 = por %p122, %p123
    %p125 = scmp.ne.s32.totalorder %s114, %s117
    %p126 = scmp.eq.s32.totalorder %s15, 1
    %p127 = por %p125, %p126
    %p128 = scmp.ne.s32.totalorder %s117, %s118
    %p129 = scmp.eq.s32.totalorder %s15, 0
    %p130 = por %p128, %p129
    %p131 = scmp.ne.s32.totalorder %s117, %s118
    %p132 = scmp.eq.s32.totalorder %s16, 1
    %p133 = por %p131, %p132
    %p135 = scmp.ne.s32.totalorder %s118, %s134
    %p136 = scmp.eq.s32.totalorder %s16, 0
    %p137 = por %p135, %p136
    %p138 = scmp.le.s32.totalorder 1, %s10
    %p139 = scmp.lt.s32.totalorder %s10, 3
    %p140 = pnand %p138, %p139
    %p141 = pneg %p140
    // Predicated region
    $region9: #{content_encoder_forward.11} parent=5 // pred_check
      _
    $region10: #{content_encoder_forward.11} parent=5 // pred_check_branch
      %143 = sbr.rel (%p140) target = $region12
    $region11: #{content_encoder_forward.11} parent=5 // pred_region
      %s144 = ssub.s32 %s10, 1
      // Predicated region
      $region13: #{content_encoder_forward.11} parent=11 // pred_check
        %p145 = pneg %p57
      $region14: #{content_encoder_forward.11} parent=11 // pred_check_branch
        %147 = sbr.rel (%p145) target = $region16
      $region15: #{content_encoder_forward.11} parent=11 // pred_region
        _
      $region16: #{content_encoder_forward.11} parent=11 // pred_fallthru
        _
      // Predicated region
      $region17: #{content_encoder_forward.11} parent=11 // pred_check
        %p148 = pneg %p78
      $region18: #{content_encoder_forward.11} parent=11 // pred_check_branch
        %150 = sbr.rel (%p148) target = $region20
      $region19: #{content_encoder_forward.11} parent=11 // pred_region
        _
      $region20: #{content_encoder_forward.11} parent=11 // pred_fallthru
        _
    $region12: #{content_encoder_forward.11} parent=5 // pred_fallthru
      _
    %p151 = scmp.lt.s32.totalorder %s10, 2
    // Predicated region
    $region21: #{content_encoder_forward.11} parent=5 // pred_check
      %p152 = pneg %p151
    $region22: #{content_encoder_forward.11} parent=5 // pred_check_branch
      %154 = sbr.rel (%p152) target = $region24
    $region23: #{content_encoder_forward.11} parent=5 // pred_region
      // Predicated region
      $region25: #{content_encoder_forward.11} parent=23 // pred_check
        %p155 = pneg %p30
      $region26: #{content_encoder_forward.11} parent=23 // pred_check_branch
        %157 = sbr.rel (%p155) target = $region28
      $region27: #{content_encoder_forward.11} parent=23 // pred_region
        %p158 = scmp.lt.s32.totalorder %s10, 1
        %s159 = scalar_select %p158, %s10, 1
        %s160 = smul.addr %s159, 10
        %s161 = smul.addr %s160, 4
        %s162 = scalar_lea.vmem %s0, %s161
      $region28: #{content_encoder_forward.11} parent=23 // pred_fallthru
        _
      // Predicated region
      $region29: #{content_encoder_forward.11} parent=23 // pred_check
        %p163 = pneg %p98
      $region30: #{content_encoder_forward.11} parent=23 // pred_check_branch
        %165 = sbr.rel (%p163) target = $region32
      $region31: #{content_encoder_forward.11} parent=23 // pred_region
        %p166 = scmp.lt.s32.totalorder %s10, 1
        %s167 = scalar_select %p166, %s10, 1
        %s168 = smul.addr %s167, 2
        %s169 = smul.addr %s168, 8
        %s170 = scalar_lea.vmem %s3, %s169
      $region32: #{content_encoder_forward.11} parent=23 // pred_fallthru
        _
    $region24: #{content_encoder_forward.11} parent=5 // pred_fallthru
      _
    %p171 = scmp.le.s32.totalorder 1, %s10
    %p172 = scmp.lt.s32.totalorder %s10, 3
    %p173 = pnand %p171, %p172
    %p174 = pneg %p173
    // Predicated region
    $region33: #{content_encoder_forward.11} parent=5 // pred_check
      _
    $region34: #{content_encoder_forward.11} parent=5 // pred_check_branch
      %176 = sbr.rel (%p173) target = $region36
    $region35: #{content_encoder_forward.11} parent=5 // pred_region
      %s177 = ssub.s32 %s10, 1
      %p178 = scmp.lt.s32.totalorder %s15, 1
      %s179 = scalar_select %p178, %s15, 1
      %s180 = smul.addr %s179, 10
      %s181 = smul.addr %s180, 4
      %s182 = scalar_lea.vmem %s0, %s181
      %p183 = pneg %p36
      %p184 = pneg %p33
      %p185 = pneg %p57
      %p186 = pneg %p54
      %p187 = pneg %p78
      %p188 = pneg %p75
      %p189 = scmp.lt.s32.totalorder %s15, 1
      %s190 = scalar_select %p189, %s15, 1
      %s191 = smul.addr %s190, 2
      %s192 = smul.addr %s191, 8
      %s193 = scalar_lea.vmem %s3, %s192
      %p194 = pneg %p104
      %p195 = pneg %p101
      %p196 = pneg %p130
      %p197 = pneg %p127
      %p198 = scmp.lt.s32.totalorder %s15, 1
      %s199 = scalar_select %p198, %s15, 1
      %s200 = smul.addr %s199, 2
      %s201 = smul.addr %s200, 8
      %s202 = scalar_lea.vmem %s4, %s201
      %p203 = scmp.lt.s32.totalorder %s15, 1
      %s204 = scalar_select %p203, %s15, 1
      %s205 = smul.addr %s204, 10
      %s206 = smul.addr %s205, 4
      %s207 = scalar_lea.vmem %s0, %s206
      %p208 = scmp.lt.s32.totalorder %s15, 1
      %s209 = scalar_select %p208, %s15, 1
      %s210 = smul.addr %s209, 2
      %s211 = smul.addr %s210, 8
      %s212 = scalar_lea.vmem %s3, %s211
      %p213 = scmp.lt.s32.totalorder %s15, 1
      %s214 = scalar_select %p213, %s15, 1
      %s215 = smul.addr %s214, 2
      %s216 = smul.addr %s215, 8
      %s217 = scalar_lea.vmem %s4, %s216
      %v219 = vld [vmem:[%s207] sm:$0xff]
      %v220 = vld [vmem:[%s207 + $0x8] sm:$0xff]
      %v221 = vld [vmem:[%s207 + $0x10] sm:$0xf]
      %v222 = vld [vmem:[%s207 + $0x14] sm:$0xff]
      %v223 = vld [vmem:[%s207 + $0x1c] sm:$0xff]
      %v224 = vld [vmem:[%s207 + $0x24] sm:$0xf]
      %v225 = vld [vmem:[%s1] sm:$0xf]
      %v226 = vld [vmem:[%s1 + $0x4] sm:$0xf]
      %v227 = vld [vmem:[%s1 + $0x8] sm:$0xf]
      %v228 = vld [vmem:[%s1 + $0xc] sm:$0xf]
      %v229 = vld [vmem:[%s1 + $0x10] sm:$0xf]
      %v230 = vld [vmem:[%s1 + $0x14] sm:$0xf]
      %v231 = vld [vmem:[%s1 + $0x18] sm:$0xf]
      %v232 = vld [vmem:[%s1 + $0x1c] sm:$0xf]
      %v233 = vld [vmem:[%s1 + $0x20] sm:$0xf]
      %v234 = vld [vmem:[%s1 + $0x24] sm:$0xf]
      %v235 = vld [vmem:[%s1 + $0x28] sm:$0xf]
      %v236 = vld [vmem:[%s1 + $0x2c] sm:$0xf]
      %v237 = vld [vmem:[%s1 + $0x30] sm:$0xf]
      %v238 = vld [vmem:[%s1 + $0x34] sm:$0xf]
      %v239 = vld [vmem:[%s1 + $0x38] sm:$0xf]
      %v240 = vld [vmem:[%s1 + $0x3c] sm:$0xf]
      %v241 = vld [vmem:[%s1 + $0x40] sm:$0xf]
      %v242 = vld [vmem:[%s1 + $0x44] sm:$0xf]
      %v243 = vld [vmem:[%s1 + $0x48] sm:$0xf]
      %v244 = vld [vmem:[%s1 + $0x4c] sm:$0xf]
      %v245 = vld [vmem:[%s1 + $0x50] sm:$0xf]
      %v246 = vld [vmem:[%s1 + $0x54] sm:$0xf]
      %v247 = vld [vmem:[%s1 + $0x58] sm:$0xf]
      %v248 = vld [vmem:[%s1 + $0x5c] sm:$0xf]
      %v249 = vld [vmem:[%s1 + $0x60] sm:$0xf]
      %v250 = vld [vmem:[%s1 + $0x64] sm:$0xf]
      %v251 = vld [vmem:[%s1 + $0x68] sm:$0xf]
      %v252 = vld [vmem:[%s1 + $0x6c] sm:$0xf]
      %v253 = vld [vmem:[%s1 + $0x70] sm:$0xf]
      %v254 = vld [vmem:[%s1 + $0x74] sm:$0xf]
      %v255 = vld [vmem:[%s1 + $0x78] sm:$0xf]
      %v256 = vld [vmem:[%s1 + $0x7c] sm:$0xf]
      %v257 = vld [vmem:[%s1 + $0x80] sm:$0xf]
      %v258 = vld [vmem:[%s1 + $0x84] sm:$0xf]
      %v259 = vld [vmem:[%s1 + $0x88] sm:$0xf]
      %v260 = vld [vmem:[%s1 + $0x8c] sm:$0xf]
      %v261 = vld [vmem:[%s1 + $0x90] sm:$0xf]
      %v262 = vld [vmem:[%s1 + $0x94] sm:$0xf]
      %v263 = vld [vmem:[%s1 + $0x98] sm:$0xf]
      %v264 = vld [vmem:[%s1 + $0x9c] sm:$0xf]
      %v265 = vld [vmem:[%s1 + $0xa0] sm:$0xf]
      %v266 = vld [vmem:[%s1 + $0xa4] sm:$0xf]
      %v267 = vld [vmem:[%s1 + $0xa8] sm:$0xf]
      %v268 = vld [vmem:[%s1 + $0xac] sm:$0xf]
      %v269 = vld [vmem:[%s1 + $0xb0] sm:$0xf]
      %v270 = vld [vmem:[%s1 + $0xb4] sm:$0xf]
      %v271 = vld [vmem:[%s1 + $0xb8] sm:$0xf]
      %v272 = vld [vmem:[%s1 + $0xbc] sm:$0xf]
      %v273 = vld [vmem:[%s1 + $0xc0] sm:$0xf]
      %v274 = vld [vmem:[%s1 + $0xc4] sm:$0xf]
      %v275 = vld [vmem:[%s1 + $0xc8] sm:$0xf]
      %v276 = vld [vmem:[%s1 + $0xcc] sm:$0xf]
      %v277 = vld [vmem:[%s1 + $0xd0] sm:$0xf]
      %v278 = vld [vmem:[%s1 + $0xd4] sm:$0xf]
      %v279 = vld [vmem:[%s1 + $0xd8] sm:$0xf]
      %v280 = vld [vmem:[%s1 + $0xdc] sm:$0xf]
      %v281 = vld [vmem:[%s1 + $0xe0] sm:$0xf]
      %v282 = vld [vmem:[%s1 + $0xe4] sm:$0xf]
      %v283 = vld [vmem:[%s1 + $0xe8] sm:$0xf]
      %v284 = vld [vmem:[%s1 + $0xec] sm:$0xf]
      %v285 = vld [vmem:[%s1 + $0xf0] sm:$0xf]
      %v286 = vld [vmem:[%s1 + $0xf4] sm:$0xf]
      %v287 = vld [vmem:[%s1 + $0xf8] sm:$0xf]
      %v288 = vld [vmem:[%s1 + $0xfc] sm:$0xf]
      %v289 = vld [vmem:[%s1 + $0x100] sm:$0xf]
      %v290 = vld [vmem:[%s1 + $0x104] sm:$0xf]
      %v291 = vld [vmem:[%s1 + $0x108] sm:$0xf]
      %v292 = vld [vmem:[%s1 + $0x10c] sm:$0xf]
      %v293 = vld [vmem:[%s1 + $0x110] sm:$0xf]
      %v294 = vld [vmem:[%s1 + $0x114] sm:$0xf]
      %v295 = vld [vmem:[%s1 + $0x118] sm:$0xf]
      %v296 = vld [vmem:[%s1 + $0x11c] sm:$0xf]
      %v297 = vld [vmem:[%s2] sm:$0x1]
      %v299 = vlaneseq
      %v300 = vshrl.u32 %v299, 7
      %v301 = vsub.s32 0, %v300
      %v302 = vrot.slane %v297, %v301
      %v310 = vunpack.c.l.b16 %v219
      %v311 = vunpack.c.h.b16 %v219
      %v312 = vunpack.c.l.b16 %v220
      %v313 = vunpack.c.h.b16 %v220
      %v314 = vunpack.c.l.b16 %v221
      %v315 = vunpack.c.l.b16 %v222
      %v316 = vunpack.c.h.b16 %v222
      %v317 = vunpack.c.l.b16 %v223
      %v318 = vunpack.c.h.b16 %v223
      %v319 = vunpack.c.l.b16 %v224
      %v320 = vpack.c.b16 %v315, %v310
      %v321 = vpack.c.b16 %v316, %v311
      %v322 = vpack.c.b16 %v317, %v312
      %v323 = vpack.c.b16 %v318, %v313
      %v324 = vpack.c.b16 %v319, %v314
      %v401 = vunpack.c.l.b16 %v225
      %v402 = vunpack.c.l.b16 %v226
      %v403 = vunpack.c.l.b16 %v227
      %v404 = vunpack.c.l.b16 %v228
      %v405 = vunpack.c.l.b16 %v229
      %v406 = vunpack.c.l.b16 %v230
      %v407 = vunpack.c.l.b16 %v231
      %v408 = vunpack.c.l.b16 %v232
      %v409 = vunpack.c.l.b16 %v233
      %v410 = vunpack.c.l.b16 %v234
      %v411 = vunpack.c.l.b16 %v235
      %v412 = vunpack.c.l.b16 %v236
      %v413 = vunpack.c.l.b16 %v237
      %v414 = vunpack.c.l.b16 %v238
      %v415 = vunpack.c.l.b16 %v239
      %v416 = vunpack.c.l.b16 %v240
      %v417 = vunpack.c.l.b16 %v241
      %v418 = vunpack.c.l.b16 %v242
      %v419 = vunpack.c.l.b16 %v243
      %v420 = vunpack.c.l.b16 %v244
      %v421 = vunpack.c.l.b16 %v245
      %v422 = vunpack.c.l.b16 %v246
      %v423 = vunpack.c.l.b16 %v247
      %v424 = vunpack.c.l.b16 %v248
      %v425 = vunpack.c.l.b16 %v249
      %v426 = vunpack.c.l.b16 %v250
      %v427 = vunpack.c.l.b16 %v251
      %v428 = vunpack.c.l.b16 %v252
      %v429 = vunpack.c.l.b16 %v253
      %v430 = vunpack.c.l.b16 %v254
      %v431 = vunpack.c.l.b16 %v255
      %v432 = vunpack.c.l.b16 %v256
      %v433 = vunpack.c.l.b16 %v257
      %v434 = vunpack.c.l.b16 %v258
      %v435 = vunpack.c.l.b16 %v259
      %v436 = vunpack.c.l.b16 %v260
      %v437 = vunpack.c.l.b16 %v261
      %v438 = vunpack.c.l.b16 %v262
      %v439 = vunpack.c.l.b16 %v263
      %v440 = vunpack.c.l.b16 %v264
      %v441 = vunpack.c.l.b16 %v265
      %v442 = vunpack.c.l.b16 %v266
      %v443 = vunpack.c.l.b16 %v267
      %v444 = vunpack.c.l.b16 %v268
      %v445 = vunpack.c.l.b16 %v269
      %v446 = vunpack.c.l.b16 %v270
      %v447 = vunpack.c.l.b16 %v271
      %v448 = vunpack.c.l.b16 %v272
      %v449 = vunpack.c.l.b16 %v273
      %v450 = vunpack.c.l.b16 %v274
      %v451 = vunpack.c.l.b16 %v275
      %v452 = vunpack.c.l.b16 %v276
      %v453 = vunpack.c.l.b16 %v277
      %v454 = vunpack.c.l.b16 %v278
      %v455 = vunpack.c.l.b16 %v279
      %v456 = vunpack.c.l.b16 %v280
      %v457 = vunpack.c.l.b16 %v281
      %v458 = vunpack.c.l.b16 %v282
      %v459 = vunpack.c.l.b16 %v283
      %v460 = vunpack.c.l.b16 %v284
      %v461 = vunpack.c.l.b16 %v285
      %v462 = vunpack.c.l.b16 %v286
      %v463 = vunpack.c.l.b16 %v287
      %v464 = vunpack.c.l.b16 %v288
      %v465 = vunpack.c.l.b16 %v289
      %v466 = vunpack.c.l.b16 %v290
      %v467 = vunpack.c.l.b16 %v291
      %v468 = vunpack.c.l.b16 %v292
      %v469 = vunpack.c.l.b16 %v293
      %v470 = vunpack.c.l.b16 %v294
      %v471 = vunpack.c.l.b16 %v295
      %v472 = vunpack.c.l.b16 %v296
      %v473 = vpack.c.b16 %v402, %v401
      %v474 = vpack.c.b16 %v404, %v403
      %v475 = vpack.c.b16 %v406, %v405
      %v476 = vpack.c.b16 %v408, %v407
      %v477 = vpack.c.b16 %v410, %v409
      %v478 = vpack.c.b16 %v412, %v411
      %v479 = vpack.c.b16 %v414, %v413
      %v480 = vpack.c.b16 %v416, %v415
      %v481 = vpack.c.b16 %v418, %v417
      %v482 = vpack.c.b16 %v420, %v419
      %v483 = vpack.c.b16 %v422, %v421
      %v484 = vpack.c.b16 %v424, %v423
      %v485 = vpack.c.b16 %v426, %v425
      %v486 = vpack.c.b16 %v428, %v427
      %v487 = vpack.c.b16 %v430, %v429
      %v488 = vpack.c.b16 %v432, %v431
      %v489 = vpack.c.b16 %v434, %v433
      %v490 = vpack.c.b16 %v436, %v435
      %v491 = vpack.c.b16 %v438, %v437
      %v492 = vpack.c.b16 %v440, %v439
      %v493 = vpack.c.b16 %v442, %v441
      %v494 = vpack.c.b16 %v444, %v443
      %v495 = vpack.c.b16 %v446, %v445
      %v496 = vpack.c.b16 %v448, %v447
      %v497 = vpack.c.b16 %v450, %v449
      %v498 = vpack.c.b16 %v452, %v451
      %v499 = vpack.c.b16 %v454, %v453
      %v500 = vpack.c.b16 %v456, %v455
      %v501 = vpack.c.b16 %v458, %v457
      %v502 = vpack.c.b16 %v460, %v459
      %v503 = vpack.c.b16 %v462, %v461
      %v504 = vpack.c.b16 %v464, %v463
      %v505 = vpack.c.b16 %v466, %v465
      %v506 = vpack.c.b16 %v468, %v467
      %v507 = vpack.c.b16 %v470, %v469
      %v508 = vpack.c.b16 %v472, %v471
      %vm545 = vcmask 523264
      %v547 = vsel %vm545, %v324, 0
      %549 = vmatprep.subr.bf16.mxu0 0
      %550 = vmatpush1.bf16.msra.mxu0 %v480
      %551 = vmatprep.subr.bf16.mxu0 0
      %552 = vmatpush1.bf16.msra.mxu0 %v479
      %553 = vmatprep.subr.bf16.mxu0 0
      %554 = vmatpush1.bf16.msra.mxu0 %v478
      %555 = vmatprep.subr.bf16.mxu0 0
      %556 = vmatpush1.bf16.msra.mxu0 %v477
      %557 = vmatprep.subr.bf16.mxu0 0
      %558 = vmatpush1.bf16.msra.mxu0 %v476
      %559 = vmatprep.subr.bf16.mxu0 0
      %560 = vmatpush1.bf16.msra.mxu0 %v475
      %561 = vmatprep.subr.bf16.mxu0 0
      %562 = vmatpush1.bf16.msra.mxu0 %v474
      %563 = vmatprep.subr.bf16.mxu0 0
      %564 = vmatpush1.bf16.msra.mxu0 %v473
      %565 = vmatprep.subr.bf16.mxu0 0
      %566 = vmatpush2.bf16.msra.mxu0 %v488
      %567 = vmatprep.subr.bf16.mxu0 0
      %568 = vmatpush2.bf16.msra.mxu0 %v487
      %569 = vmatprep.subr.bf16.mxu0 0
      %570 = vmatpush2.bf16.msra.mxu0 %v486
      %571 = vmatprep.subr.bf16.mxu0 0
      %572 = vmatpush2.bf16.msra.mxu0 %v485
      %573 = vmatprep.subr.bf16.mxu0 0
      %574 = vmatpush2.bf16.msra.mxu0 %v484
      %575 = vmatprep.subr.bf16.mxu0 0
      %576 = vmatpush2.bf16.msra.mxu0 %v483
      %577 = vmatprep.subr.bf16.mxu0 0
      %578 = vmatpush2.bf16.msra.mxu0 %v482
      %579 = vmatprep.subr.bf16.mxu0 0
      %580 = vmatpush2.bf16.msra.mxu0 %v481
      %581 = vmatprep.mubr.bf16.mxu0 %v321
      %582 = vmatmul.mubr.bf16.gmra.mxu0 %v320
      %v583 = vpop.f32.mrf.mxu0
      %v584 = vadd.f32 %v302, %v583
      %v585 = vpop.f32.mrf.mxu0
      %v586 = vpop.f32.mrf.mxu0
      %v587 = vadd.f32 %v302, %v586
      %v588 = vpop.f32.mrf.mxu0
      %589 = vdwg.mxu0
      %590 = vmatprep.subr.bf16.mxu0 0
      %591 = vmatpush1.bf16.msra.mxu0 %v496
      %592 = vmatprep.subr.bf16.mxu0 0
      %593 = vmatpush1.bf16.msra.mxu0 %v495
      %594 = vmatprep.subr.bf16.mxu0 0
      %595 = vmatpush1.bf16.msra.mxu0 %v494
      %596 = vmatprep.subr.bf16.mxu0 0
      %597 = vmatpush1.bf16.msra.mxu0 %v493
      %598 = vmatprep.subr.bf16.mxu0 0
      %599 = vmatpush1.bf16.msra.mxu0 %v492
      %600 = vmatprep.subr.bf16.mxu0 0
      %601 = vmatpush1.bf16.msra.mxu0 %v491
      %602 = vmatprep.subr.bf16.mxu0 0
      %603 = vmatpush1.bf16.msra.mxu0 %v490
      %604 = vmatprep.subr.bf16.mxu0 0
      %605 = vmatpush1.bf16.msra.mxu0 %v489
      %606 = vmatprep.subr.bf16.mxu0 0
      %607 = vmatpush2.bf16.msra.mxu0 %v504
      %608 = vmatprep.subr.bf16.mxu0 0
      %609 = vmatpush2.bf16.msra.mxu0 %v503
      %610 = vmatprep.subr.bf16.mxu0 0
      %611 = vmatpush2.bf16.msra.mxu0 %v502
      %612 = vmatprep.subr.bf16.mxu0 0
      %613 = vmatpush2.bf16.msra.mxu0 %v501
      %614 = vmatprep.subr.bf16.mxu0 0
      %615 = vmatpush2.bf16.msra.mxu0 %v500
      %616 = vmatprep.subr.bf16.mxu0 0
      %617 = vmatpush2.bf16.msra.mxu0 %v499
      %618 = vmatprep.subr.bf16.mxu0 0
      %619 = vmatpush2.bf16.msra.mxu0 %v498
      %620 = vmatprep.subr.bf16.mxu0 0
      %621 = vmatpush2.bf16.msra.mxu0 %v497
      %622 = vmatprep.mubr.bf16.mxu0 %v323
      %623 = vmatmul.mubr.bf16.gmra.mxu0 %v322
      %v624 = vpop.f32.mrf.mxu0
      %v625 = vadd.f32 %v584, %v624
      %v626 = vpop.f32.mrf.mxu0
      %v627 = vpop.f32.mrf.mxu0
      %v628 = vadd.f32 %v587, %v627
      %v629 = vpop.f32.mrf.mxu0
      %630 = vdwg.mxu0
      %631 = vmatprep.subr.bf16.mxu0 0
      %632 = vmatpush1.bf16.msra.mxu0 0
      %633 = vmatprep.subr.bf16.mxu0 0
      %634 = vmatpush1.bf16.msra.mxu0 0
      %635 = vmatprep.subr.bf16.mxu0 0
      %636 = vmatpush1.bf16.msra.mxu0 0
      %637 = vmatprep.subr.bf16.mxu0 0
      %638 = vmatpush1.bf16.msra.mxu0 0
      %639 = vmatprep.subr.bf16.mxu0 0
      %640 = vmatpush1.bf16.msra.mxu0 %v508
      %641 = vmatprep.subr.bf16.mxu0 0
      %642 = vmatpush1.bf16.msra.mxu0 %v507
      %643 = vmatprep.subr.bf16.mxu0 0
      %644 = vmatpush1.bf16.msra.mxu0 %v506
      %645 = vmatprep.subr.bf16.mxu0 0
      %646 = vmatpush1.bf16.msra.mxu0 %v505
      %647 = vmatprep.subr.bf16.mxu0 0
      %648 = vmatpush2.bf16.msra.mxu0 0
      %649 = vmatprep.subr.bf16.mxu0 0
      %650 = vmatpush2.bf16.msra.mxu0 0
      %651 = vmatprep.subr.bf16.mxu0 0
      %652 = vmatpush2.bf16.msra.mxu0 0
      %653 = vmatprep.subr.bf16.mxu0 0
      %654 = vmatpush2.bf16.msra.mxu0 0
      %655 = vmatprep.subr.bf16.mxu0 0
      %656 = vmatpush2.bf16.msra.mxu0 0
      %657 = vmatprep.subr.bf16.mxu0 0
      %658 = vmatpush2.bf16.msra.mxu0 0
      %659 = vmatprep.subr.bf16.mxu0 0
      %660 = vmatpush2.bf16.msra.mxu0 0
      %661 = vmatprep.subr.bf16.mxu0 0
      %662 = vmatpush2.bf16.msra.mxu0 0
      %663 = vmatprep.mubr.bf16.mxu0 0
      %664 = vmatmul.mubr.bf16.gmra.mxu0 %v547
      %v665 = vpop.f32.mrf.mxu0
      %v666 = vadd.f32 %v625, %v665
      %v667 = vpop.f32.mrf.mxu0
      %v668 = vpop.f32.mrf.mxu0
      %v669 = vadd.f32 %v628, %v668
      %v670 = vpop.f32.mrf.mxu0
      %671 = vdwg.mxu0
      %v672 = vadd.f32 %v666, %v669
      %v673 = vrot.slane %v672, 4
      %v674 = vadd.f32 %v672, %v673
      %v675 = vrot.slane %v674, 2
      %v676 = vadd.f32 %v674, %v675
      %v677 = vrot.slane %v676, 1
      %v678 = vadd.f32 %v676, %v677
      %v679 = vrcp.pop 16.0
      %v680 = vmul.f32 %v678, %v679
      %v681 = vmul.f32 %v666, %v666
      %v682 = vmul.f32 %v669, %v669
      %v683 = vadd.f32 %v681, %v682
      %v684 = vrot.slane %v683, 4
      %v685 = vadd.f32 %v683, %v684
      %v686 = vrot.slane %v685, 2
      %v687 = vadd.f32 %v685, %v686
      %v688 = vrot.slane %v687, 1
      %v689 = vadd.f32 %v687, %v688
      %v690 = vmul.f32 %v689, %v679
      %v691 = vmul.f32 %v680, %v680
      %v692 = vsub.f32 %v690, %v691
      %v693 = vmax.f32 %v692, 0.0
      %v694 = vsub.f32 %v666, %v680
      %v695 = vsub.f32 %v669, %v680
      %v696 = vadd.f32 %v693, 1e-05
      %v697 = vrsqrt.pop %v696
      %v698 = vmul.f32 %v694, %v697
      %v699 = vmul.f32 %v695, %v697
      %v700 = vld [vmem:[%s212] sm:$0xff]
      %v701 = vld [vmem:[%s212 + $0x8] sm:$0xff]
      %v702 = vadd.f32 %v698, %v700
      %v703 = vadd.f32 %v699, %v701
      %704 = vst [vmem:[%s217] sm:$0xff] %v702
      %705 = vst [vmem:[%s217 + $0x8] sm:$0xff] %v703
      %p706 = scmp.lt.s32.totalorder %s15, 1
      %s707 = scalar_select %p706, %s15, 1
      %s708 = smul.addr %s707, 2
      %s709 = smul.addr %s708, 8
      %s710 = scalar_lea.vmem %s4, %s709
      // Predicated region
      $region37: #{content_encoder_forward.11} parent=35 // pred_check
        %p711 = pneg %p127
      $region38: #{content_encoder_forward.11} parent=35 // pred_check_branch
        %713 = sbr.rel (%p711) target = $region40
      $region39: #{content_encoder_forward.11} parent=35 // pred_region
        _
      $region40: #{content_encoder_forward.11} parent=35 // pred_fallthru
        _
    $region36: #{content_encoder_forward.11} parent=5 // pred_fallthru
      _
    %p714 = scmp.le.s32.totalorder 2, %s10
    // Predicated region
    $region41: #{content_encoder_forward.11} parent=5 // pred_check
      %p715 = pneg %p714
    $region42: #{content_encoder_forward.11} parent=5 // pred_check_branch
      %717 = sbr.rel (%p715) target = $region44
    $region43: #{content_encoder_forward.11} parent=5 // pred_region
      %s718 = ssub.s32 %s10, 2
      // Predicated region
      $region45: #{content_encoder_forward.11} parent=43 // pred_check
        %p719 = pneg %p133
      $region46: #{content_encoder_forward.11} parent=43 // pred_check_branch
        %721 = sbr.rel (%p719) target = $region48
      $region47: #{content_encoder_forward.11} parent=43 // pred_region
        %p722 = scmp.lt.s32.totalorder %s16, 1
        %s723 = scalar_select %p722, %s16, 1
        %s724 = smul.addr %s723, 2
        %s725 = smul.addr %s724, 8
        %s726 = scalar_lea.vmem %s4, %s725
      $region48: #{content_encoder_forward.11} parent=43 // pred_fallthru
        _
    $region44: #{content_encoder_forward.11} parent=5 // pred_fallthru
      _
  $region6: #{content_encoder_forward.11} parent=0 // loop_footer
    %s14 = sadd.s32 1, %s10
  $region7: #{content_encoder_forward.11} parent=0 // loop_footer_branch
    %9 = sbr.rel target = $region3
  $region8: #{content_encoder_forward.11} parent=0 // loop_exit
    _

</llo_original>
